<compile_context>
chip_gen: v7x
topology: tpu7x:2x2x1
jax: 0.10.0
libtpu: 0.0.40
codegen_flags: <defaults>
</compile_context>

<pallas_src>
import functools

import jax
import jax.numpy as jnp
from jax.experimental import pallas as pl
from jax.experimental.pallas import tpu as pltpu

_EPS = 1e-5          # nn.BatchNorm2d default eps
_NEG_SLOPE = 0.01    # nn.LeakyReLU default negative_slope

_LANE = 128
_SUBLANE = 8


def _round_up(v, m):
    return (v + m - 1) // m * m


def _vmem_capacity_bytes():
    try:
        return int(pltpu.get_tpu_info().vmem_capacity_bytes)
    except Exception:
        return 64 * 1024 * 1024          # v7x-safe fallback


_VMEM_CAP = _vmem_capacity_bytes()
_VMEM_BUDGET = int(_VMEM_CAP * 0.40)     # sizing decisions (pipelining headroom)
_VMEM_LIMIT = int(min(_VMEM_CAP * 0.85, 110 * 1024 * 1024))


def _pad2d(a, rows, cols, dtype):
    """Cast + zero-pad a 2-D array; no-op (no copy) when already conforming."""
    a = a.astype(dtype)
    pr, pc = rows - a.shape[0], cols - a.shape[1]
    if pr or pc:
        a = jnp.pad(a, ((0, pr), (0, pc)))
    return a


def _tile_c_for(Cp):
    return Cp if Cp <= 128 else (256 if Cp % 256 == 0 else 128)


# ---------------------------------------------------------------------------
# Pallas kernels
# ---------------------------------------------------------------------------

def _matmul_bn_act_kernel(p_ref, w_ref, g_ref, b_ref, *refs,
                          inv_m, neg_slope, has_residual):
    """Single-shot fused conv(matmul) + BN(train) + LeakyReLU [+ residual].

    Grid axis = C_out blocks ("parallel"); BN stats are per-channel so each
    channel block is independent.  Zero-padded rows contribute 0 to the sums,
    dividing by the true M (inv_m) keeps the statistics exact.
    """
    if has_residual:
        r_ref, o_ref = refs
    else:
        (o_ref,) = refs
        r_ref = None
    y = jnp.dot(p_ref[...], w_ref[...], preferred_element_type=jnp.float32)
    mean = jnp.sum(y, axis=0, keepdims=True) * inv_m
    var = jnp.maximum(jnp.sum(y * y, axis=0, keepdims=True) * inv_m - mean * mean, 0.0)
    scale = g_ref[...] * jax.lax.rsqrt(var + _EPS)
    shift = b_ref[...] - mean * scale
    z = y * scale + shift
    z = jnp.where(z >= 0.0, z, neg_slope * z)
    if r_ref is not None:
        z = z + r_ref[...].astype(jnp.float32)
    o_ref[...] = z.astype(o_ref.dtype)


def _conv_s1_bn_act_kernel(x_ref, w_ref, g_ref, b_ref, m_ref, *refs,
                           n_imgs, img_stride, tap_offsets, owp,
                           inv_m, neg_slope, has_residual):
    """Stride-1 KxK conv from a VMEM-resident flattened padded input.

    x_ref  : (R, Cin_p)              flattened zero-padded NHWC activation
    w_ref  : (kh*kw, Cin_p, tile_c)  per-tap weight slabs
    m_ref  : (n_imgs*owp, 1)         1.0 on valid output rows, 0.0 on garbage
    o_ref  : (n_imgs*owp, tile_c)    span-layout output (garbage rows are
                                     dropped by the XLA wrapper)
    acc_ref: (n_imgs*owp, tile_c)    f32 scratch holding the conv accumulator
    """
    if has_residual:
        r_ref, o_ref, acc_ref = refs
    else:
        o_ref, acc_ref = refs
        r_ref = None
    tc = o_ref.shape[-1]
    for n in range(n_imgs):
        base = n * img_stride
        y = jnp.zeros((owp, tc), jnp.float32)
        for t, off in enumerate(tap_offsets):
            y = y + jnp.dot(x_ref[pl.ds(base + off, owp), :], w_ref[t],
                            preferred_element_type=jnp.float32)
        acc_ref[pl.ds(n * owp, owp), :] = y
    y_all = acc_ref[...]
    msk = m_ref[...]
    ym = y_all * msk
    mean = jnp.sum(ym, axis=0, keepdims=True) * inv_m
    var = jnp.maximum(jnp.sum(ym * y_all, axis=0, keepdims=True) * inv_m
                      - mean * mean, 0.0)
    scale = g_ref[...] * jax.lax.rsqrt(var + _EPS)
    shift = b_ref[...] - mean * scale
    z = y_all * scale + shift
    z = jnp.where(z >= 0.0, z, neg_slope * z)
    if r_ref is not None:
        z = z + r_ref[...].astype(jnp.float32)
    o_ref[...] = z.astype(o_ref.dtype)


def _matmul_stats_kernel(p_ref, w_ref, g_ref, b_ref,
                         y_ref, scale_ref, shift_ref,
                         sum_acc, sq_acc, *, inv_m):
    """Tiled fallback, pass 1: matmul, stream y, accumulate channel stats."""
    i = pl.program_id(0)

    @pl.when(i == 0)
    def _init():
        sum_acc[...] = jnp.zeros_like(sum_acc)
        sq_acc[...] = jnp.zeros_like(sq_acc)

    y = jnp.dot(p_ref[...], w_ref[...], preferred_element_type=jnp.float32)
    y_ref[...] = y.astype(y_ref.dtype)
    sum_acc[...] += jnp.sum(y, axis=0, keepdims=True)
    sq_acc[...] += jnp.sum(y * y, axis=0, keepdims=True)

    @pl.when(i == pl.num_programs(0) - 1)
    def _finalize():
        mean = sum_acc[...] * inv_m
        var = jnp.maximum(sq_acc[...] * inv_m - mean * mean, 0.0)
        scale = g_ref[...] * jax.lax.rsqrt(var + _EPS)
        scale_ref[...] = scale
        shift_ref[...] = b_ref[...] - mean * scale


def _bn_act_kernel(y_ref, scale_ref, shift_ref, *refs, neg_slope, has_residual):
    """Tiled fallback, pass 2: per-element FMA + LeakyReLU [+ residual]."""
    if has_residual:
        r_ref, o_ref = refs
    else:
        (o_ref,) = refs
        r_ref = None
    z = y_ref[...].astype(jnp.float32) * scale_ref[...] + shift_ref[...]
    z = jnp.where(z >= 0.0, z, neg_slope * z)
    if r_ref is not None:
        z = z + r_ref[...].astype(jnp.float32)
    o_ref[...] = z.astype(o_ref.dtype)


def _linear_kernel(x_ref, w_ref, b_ref, o_ref):
    o_ref[...] = (jnp.dot(x_ref[...], w_ref[...],
                          preferred_element_type=jnp.float32) + b_ref[...])


# ---------------------------------------------------------------------------
# Fused matmul + BN(train) + LeakyReLU wrapper (1x1 convs, stride-2 im2col, fc)
# ---------------------------------------------------------------------------

def _fused_matmul_bn_act(patches, w_mat, gamma, beta, *, neg_slope,
                         residual=None, matmul_dtype=jnp.bfloat16,
                         out_dtype=jnp.float32):
    """(M, K) @ (K, C) -> BatchNorm (train, stats over M) -> LeakyReLU [+res]."""
    M, K = patches.shape
    Kw, C = w_mat.shape
    assert Kw == K
    in_b = jnp.dtype(matmul_dtype).itemsize
    out_b = jnp.dtype(out_dtype).itemsize
    Kp = _round_up(K, _LANE)
    Cp = _round_up(C, _LANE)
    Mp = _round_up(M, _SUBLANE)
    tile_c = _tile_c_for(Cp)
    inv_m = 1.0 / float(M)

    w_pad = _pad2d(w_mat, Kp, Cp, matmul_dtype)
    g_pad = _pad2d(gamma.reshape(1, C), 1, Cp, jnp.float32)
    b_pad = _pad2d(beta.reshape(1, C), 1, Cp, jnp.float32)
    res_b = residual.dtype.itemsize if residual is not None else 0

    # ---- single-shot path: whole M visible -> one-pass BN, grid over Cout --
    single_need = (2 * Mp * Kp * in_b + 2 * Kp * tile_c * in_b
                   + 2 * Mp * tile_c * (out_b + res_b) + 16 * Cp * 4)
    if single_need <= _VMEM_BUDGET:
        p_pad = _pad2d(patches, Mp, Kp, matmul_dtype)
        r_pad = None if residual is None else _pad2d(residual, Mp, Cp, residual.dtype)
        kernel = functools.partial(_matmul_bn_act_kernel, inv_m=inv_m,
                                   neg_slope=float(neg_slope),
                                   has_residual=r_pad is not None)
        ins = [p_pad, w_pad, g_pad, b_pad]
        in_specs = [pl.BlockSpec((Mp, Kp), lambda j: (0, 0)),
                    pl.BlockSpec((Kp, tile_c), lambda j: (0, j)),
                    pl.BlockSpec((1, tile_c), lambda j: (0, j)),
                    pl.BlockSpec((1, tile_c), lambda j: (0, j))]
        if r_pad is not None:
            ins.append(r_pad)
            in_specs.append(pl.BlockSpec((Mp, tile_c), lambda j: (0, j)))
        out = pl.pallas_call(
            kernel,
            grid=(Cp // tile_c,),
            in_specs=in_specs,
            out_specs=pl.BlockSpec((Mp, tile_c), lambda j: (0, j)),
            out_shape=jax.ShapeDtypeStruct((Mp, Cp), out_dtype),
            compiler_params=pltpu.CompilerParams(
                dimension_semantics=("parallel",),
                vmem_limit_bytes=_VMEM_LIMIT),
            cost_estimate=pl.CostEstimate(
                flops=int(2 * Mp * Kp * Cp + 8 * Mp * Cp),
                transcendentals=int(Cp),
                bytes_accessed=int((Mp * Kp + Kp * Cp) * in_b + Mp * Cp * out_b)),
        )(*ins)
        return out[:M, :C]

    # ---- tiled fallback: pass 1 (matmul + global stats), pass 2 (normalize)
    y_dtype = matmul_dtype if in_b <= 2 else jnp.float32
    y_b = jnp.dtype(y_dtype).itemsize
    tile_m = min(512, _round_up(M, _SUBLANE))
    # TODO(synk): single-buffer the grid-invariant weight block via
    # pipeline_mode=pl.Buffered(1) to free VMEM for a bigger tile_m.
    w_bytes = 2 * Kp * Cp * in_b
    per_row = 2 * (Kp * in_b + Cp * y_b)
    while tile_m > 128 and w_bytes + tile_m * per_row > _VMEM_BUDGET:
        tile_m //= 2
    Mp = _round_up(M, tile_m)
    grid_m = Mp // tile_m
    p_pad = _pad2d(patches, Mp, Kp, matmul_dtype)
    r_pad = None if residual is None else _pad2d(residual, Mp, Cp, residual.dtype)

    y, scale, shift = pl.pallas_call(
        functools.partial(_matmul_stats_kernel, inv_m=inv_m),
        grid=(grid_m,),
        in_specs=[pl.BlockSpec((tile_m, Kp), lambda i: (i, 0)),
                  pl.BlockSpec((Kp, Cp), lambda i: (0, 0)),
                  pl.BlockSpec((1, Cp), lambda i: (0, 0)),
                  pl.BlockSpec((1, Cp), lambda i: (0, 0))],
        out_specs=[pl.BlockSpec((tile_m, Cp), lambda i: (i, 0)),
                   pl.BlockSpec((1, Cp), lambda i: (0, 0)),
                   pl.BlockSpec((1, Cp), lambda i: (0, 0))],
        out_shape=[jax.ShapeDtypeStruct((Mp, Cp), y_dtype),
                   jax.ShapeDtypeStruct((1, Cp), jnp.float32),
                   jax.ShapeDtypeStruct((1, Cp), jnp.float32)],
        scratch_shapes=[pltpu.VMEM((1, Cp), jnp.float32),
                        pltpu.VMEM((1, Cp), jnp.float32)],
        compiler_params=pltpu.CompilerParams(
            dimension_semantics=("arbitrary",),     # running stats accumulator
            vmem_limit_bytes=_VMEM_LIMIT),
        cost_estimate=pl.CostEstimate(
            flops=int(2 * Mp * Kp * Cp + 4 * Mp * Cp),
            transcendentals=int(Cp),
            bytes_accessed=int((Mp * Kp + Kp * Cp) * in_b + Mp * Cp * y_b)),
    )(p_pad, w_pad, g_pad, b_pad)
    # TODO(synk): emit per-tile partial sums so the pass-1 axis can be
    # "parallel" and use both v7x TensorCores.

    # Pass 2 is pure HBM-bound elementwise work: use a larger row tile.
    tile2 = tile_m
    for mult in (8, 4, 2):
        if (grid_m % mult == 0 and
                2 * tile_m * mult * Cp * (y_b + out_b + res_b) <= _VMEM_BUDGET):
            tile2 = tile_m * mult
            break
    kernel2 = functools.partial(_bn_act_kernel, neg_slope=float(neg_slope),
                                has_residual=r_pad is not None)
    ins = [y, scale, shift]
    in_specs = [pl.BlockSpec((tile2, Cp), lambda i: (i, 0)),
                pl.BlockSpec((1, Cp), lambda i: (0, 0)),
                pl.BlockSpec((1, Cp), lambda i: (0, 0))]
    if r_pad is not None:
        ins.append(r_pad)
        in_specs.append(pl.BlockSpec((tile2, Cp), lambda i: (i, 0)))
    out = pl.pallas_call(
        kernel2,
        grid=(Mp // tile2,),
        in_specs=in_specs,
        out_specs=pl.BlockSpec((tile2, Cp), lambda i: (i, 0)),
        out_shape=jax.ShapeDtypeStruct((Mp, Cp), out_dtype),
        compiler_params=pltpu.CompilerParams(
            dimension_semantics=("parallel",),
            vmem_limit_bytes=_VMEM_LIMIT),
        cost_estimate=pl.CostEstimate(
            flops=int(4 * Mp * Cp), transcendentals=0,
            bytes_accessed=int(Mp * Cp * (y_b + out_b + res_b) + 2 * Cp * 4)),
    )(*ins)
    return out[:M, :C]


# ---------------------------------------------------------------------------
# Direct (no-im2col) stride-1 KxK conv
# ---------------------------------------------------------------------------

def _conv_s1_direct(x_nhwc, w_oihw, gamma, beta, *, padding, neg_slope,
                    residual_nhwc, matmul_dtype, out_dtype):
    """Fused stride-1 KxK conv + BN + LeakyReLU without an im2col patch matrix.

    Returns None when the single-shot working set would exceed the VMEM
    budget (the caller then falls back to the im2col path, which tiles)."""
    N, H, W, Cin = x_nhwc.shape
    Cout, Cin2, kh, kw = w_oihw.shape
    assert Cin2 == Cin
    Hp, Wp = H + 2 * padding, W + 2 * padding
    Ho, Wo = Hp - kh + 1, Wp - kw + 1
    Cinp = _round_up(Cin, _LANE)
    Cp = _round_up(Cout, _LANE)
    tile_c = _tile_c_for(Cp)
    owp = _round_up(Ho * Wp, _SUBLANE)
    rows = N * owp
    tap_offsets = tuple(dy * Wp + dx for dy in range(kh) for dx in range(kw))
    # Extra zero rows at the bottom of each image so the last tap's span stays
    # inside that image's flat slab.
    overhang = max(0, tap_offsets[-1] + owp - Hp * Wp)
    extra_h = -(-overhang // Wp)
    img_stride = (Hp + extra_h) * Wp
    R = N * img_stride

    in_b = jnp.dtype(matmul_dtype).itemsize
    out_b = jnp.dtype(out_dtype).itemsize
    res_b = residual_nhwc.dtype.itemsize if residual_nhwc is not None else 0
    need = (2 * R * Cinp * in_b + 2 * kh * kw * Cinp * tile_c * in_b
            + 2 * rows * tile_c * (out_b + res_b) + rows * tile_c * 4
            + 2 * rows * 4 + 16 * Cp * 4)
    if need > _VMEM_BUDGET:
        # TODO(synk): tile over rows of the padded input (overlapping
        # receptive fields via manual make_async_copy) instead of bailing out.
        return None

    xp = jnp.pad(x_nhwc.astype(matmul_dtype),
                 ((0, 0), (padding, padding + extra_h), (padding, padding),
                  (0, Cinp - Cin)))
    x_flat = xp.reshape(R, Cinp)

    w_taps = jnp.transpose(w_oihw, (2, 3, 1, 0)).reshape(kh * kw, Cin, Cout)
    w_taps = jnp.pad(w_taps.astype(matmul_dtype),
                     ((0, 0), (0, Cinp - Cin), (0, Cp - Cout)))
    g_pad = _pad2d(gamma.reshape(1, Cout), 1, Cp, jnp.float32)
    b_pad = _pad2d(beta.reshape(1, Cout), 1, Cp, jnp.float32)

    r_idx = jnp.arange(rows, dtype=jnp.int32) % owp
    mask = ((r_idx < Ho * Wp) & ((r_idx % Wp) < Wo)).astype(jnp.float32)
    mask = mask.reshape(rows, 1)

    r_span = None
    if residual_nhwc is not None:
        rr = jnp.pad(residual_nhwc,
                     ((0, 0), (0, 0), (0, Wp - Wo), (0, Cp - Cout)))
        rr = rr.reshape(N, Ho * Wp, Cp)
        if owp != Ho * Wp:
            rr = jnp.pad(rr, ((0, 0), (0, owp - Ho * Wp), (0, 0)))
        r_span = rr.reshape(rows, Cp)

    kernel = functools.partial(
        _conv_s1_bn_act_kernel, n_imgs=N, img_stride=img_stride,
        tap_offsets=tap_offsets, owp=owp,
        inv_m=1.0 / float(N * Ho * Wo), neg_slope=float(neg_slope),
        has_residual=r_span is not None)

    ins = [x_flat, w_taps, g_pad, b_pad, mask]
    in_specs = [pl.BlockSpec((R, Cinp), lambda j: (0, 0)),
                pl.BlockSpec((kh * kw, Cinp, tile_c), lambda j: (0, 0, j)),
                pl.BlockSpec((1, tile_c), lambda j: (0, j)),
                pl.BlockSpec((1, tile_c), lambda j: (0, j)),
                pl.BlockSpec((rows, 1), lambda j: (0, 0))]
    if r_span is not None:
        ins.append(r_span)
        in_specs.append(pl.BlockSpec((rows, tile_c), lambda j: (0, j)))

    out = pl.pallas_call(
        kernel,
        grid=(Cp // tile_c,),
        in_specs=in_specs,
        out_specs=pl.BlockSpec((rows, tile_c), lambda j: (0, j)),
        out_shape=jax.ShapeDtypeStruct((rows, Cp), out_dtype),
        scratch_shapes=[pltpu.VMEM((rows, tile_c), jnp.float32)],
        compiler_params=pltpu.CompilerParams(
            dimension_semantics=("parallel",),
            vmem_limit_bytes=_VMEM_LIMIT),
        cost_estimate=pl.CostEstimate(
            flops=int(2 * rows * kh * kw * Cinp * Cp + 10 * rows * Cp),
            transcendentals=int(Cp),
            bytes_accessed=int(R * Cinp * in_b + kh * kw * Cinp * Cp * in_b
                               + rows * Cp * out_b)),
    )(*ins)

    # Drop the width-padding ("garbage") rows and the channel padding.
    out = out.reshape(N, owp, Cp)[:, :Ho * Wp, :]
    out = out.reshape(N, Ho, Wp, Cp)[:, :, :Wo, :Cout]
    # TODO(synk): let the next layer consume the span layout directly to
    # avoid this extraction copy.
    return out


# ---------------------------------------------------------------------------
# Module building blocks
# ---------------------------------------------------------------------------

def conv_bn_act(x_nhwc, w_oihw, gamma, beta, *, stride, padding,
                neg_slope=_NEG_SLOPE, residual_nhwc=None,
                matmul_dtype=jnp.bfloat16, out_dtype=None):
    """ConvBNReLu: Conv2d(bias=False) -> BatchNorm2d(train) -> LeakyReLU.

    `residual_nhwc` (same shape as the output) is added after the activation,
    fused into the Pallas epilogue (used by ResnetBlock)."""
    if out_dtype is None:
        out_dtype = (matmul_dtype if jnp.dtype(matmul_dtype).itemsize <= 2
                     else jnp.float32)
    N, H, W, Cin = x_nhwc.shape
    Cout, Cin2, kh, kw = w_oihw.shape
    assert Cin2 == Cin
    Ho = (H + 2 * padding - kh) // stride + 1
    Wo = (W + 2 * padding - kw) // stride + 1
    M = N * Ho * Wo

    # Direct (no im2col) path for stride-1 spatial convs.
    if stride == 1 and not (kh == 1 and kw == 1 and padding == 0):
        out = _conv_s1_direct(x_nhwc, w_oihw, gamma, beta, padding=padding,
                              neg_slope=neg_slope, residual_nhwc=residual_nhwc,
                              matmul_dtype=matmul_dtype, out_dtype=out_dtype)
        if out is not None:
            return out

    # im2col glue (pointwise convs are a pure reshape; only the 5 stride-2
    # downsampling convs actually materialize a patch matrix).
    if kh == 1 and kw == 1 and padding == 0:
        xs = x_nhwc if stride == 1 else x_nhwc[:, ::stride, ::stride, :]
        patches = xs.reshape(M, Cin)
    else:
        xp = jnp.pad(x_nhwc,
                     ((0, 0), (padding, padding), (padding, padding), (0, 0)))
        taps = []
        for dy in range(kh):
            for dx in range(kw):
                taps.append(xp[:, dy:dy + stride * Ho:stride,
                                  dx:dx + stride * Wo:stride, :])
        patches = jnp.concatenate(taps, axis=-1).reshape(M, kh * kw * Cin)

    w_mat = jnp.transpose(w_oihw, (2, 3, 1, 0)).reshape(kh * kw * Cin, Cout)
    res_mat = None
    if residual_nhwc is not None:
        res_mat = residual_nhwc.reshape(M, Cout)

    out = _fused_matmul_bn_act(patches, w_mat, gamma, beta,
                               neg_slope=neg_slope, residual=res_mat,
                               matmul_dtype=matmul_dtype, out_dtype=out_dtype)
    return out.reshape(N, Ho, Wo, Cout)


def _linear(x, w_torch, bias, matmul_dtype=jnp.bfloat16):
    """x @ w_torch.T + bias via a single lane-dense Pallas matmul."""
    N, K = x.shape
    C, K2 = w_torch.shape
    assert K2 == K
    Np = _round_up(max(N, _SUBLANE), _SUBLANE)
    Kp = _round_up(K, _LANE)
    Cp = _round_up(C, _LANE)
    xp = _pad2d(x, Np, Kp, matmul_dtype)
    wp = _pad2d(w_torch.T, Kp, Cp, matmul_dtype)
    bp = _pad2d(bias.reshape(1, C), 1, Cp, jnp.float32)
    out = pl.pallas_call(
        _linear_kernel,
        grid=(1,),
        in_specs=[pl.BlockSpec((Np, Kp), lambda i: (0, 0)),
                  pl.BlockSpec((Kp, Cp), lambda i: (0, 0)),
                  pl.BlockSpec((1, Cp), lambda i: (0, 0))],
        out_specs=pl.BlockSpec((Np, Cp), lambda i: (0, 0)),
        out_shape=jax.ShapeDtypeStruct((Np, Cp), jnp.float32),
        compiler_params=pltpu.CompilerParams(
            dimension_semantics=("arbitrary",),
            vmem_limit_bytes=_VMEM_LIMIT),
    )(xp, wp, bp)
    return out[:N, :C]


# ---------------------------------------------------------------------------
# Darknet53 architecture
# ---------------------------------------------------------------------------

# Each stage: (stem conv cfgs [(cin, cout, k, stride, pad)], n_res_blocks, ch)
_STAGES = [
    ([(3, 32, 3, 1, 1), (32, 64, 3, 2, 1)], 1, 64),
    ([(64, 128, 3, 2, 1)], 2, 128),
    ([(128, 256, 3, 2, 1)], 8, 256),
    ([(256, 512, 3, 2, 1)], 8, 512),
    ([(512, 1024, 3, 2, 1)], 4, 1024),
]


def init_params(key, num_class=10):
    def conv_param(k, cin, cout, ksize):
        k_w, k_g, k_b = jax.random.split(k, 3)
        fan_in = cin * ksize * ksize
        w = jax.random.normal(k_w, (cout, cin, ksize, ksize), jnp.float32) \
            * (2.0 / fan_in) ** 0.5
        g = 1.0 + 0.1 * jax.random.normal(k_g, (cout,), jnp.float32)
        b = 0.1 * jax.random.normal(k_b, (cout,), jnp.float32)
        return w, g, b

    keys = iter(jax.random.split(key, 64))
    stages = []
    for stem_cfgs, n_blocks, ch in _STAGES:
        stem = [conv_param(next(keys), cin, cout, k)
                for (cin, cout, k, _, _) in stem_cfgs]
        blocks = []
        for _ in range(n_blocks):
            blocks.append((conv_param(next(keys), ch, ch // 2, 1),
                           conv_param(next(keys), ch // 2, ch, 3)))
        stages.append({"stem": stem, "blocks": blocks})
    k_fw, k_fb = jax.random.split(next(keys), 2)
    fc_w = jax.random.normal(k_fw, (num_class, 1024), jnp.float32) * (1.0 / 1024) ** 0.5
    fc_b = 0.1 * jax.random.normal(k_fb, (num_class,), jnp.float32)
    return {"stages": stages, "fc_w": fc_w, "fc_b": fc_b}


def darknet53_forward(params, x_nchw, matmul_dtype=jnp.bfloat16):
    """Full Darknet53 forward; all conv/BN/act/residual/fc math runs in Pallas."""
    x = jnp.transpose(x_nchw, (0, 2, 3, 1))          # NCHW -> NHWC once
    for (stem_cfgs, _, _), stage_p in zip(_STAGES, params["stages"]):
        for (_, _, _, s, p), (w, g, b) in zip(stem_cfgs, stage_p["stem"]):
            x = conv_bn_act(x, w, g, b, stride=s, padding=p,
                            matmul_dtype=matmul_dtype)
        for (pb1, pb2) in stage_p["blocks"]:
            h = conv_bn_act(x, pb1[0], pb1[1], pb1[2], stride=1, padding=0,
                            matmul_dtype=matmul_dtype)
            x = conv_bn_act(h, pb2[0], pb2[1], pb2[2], stride=1, padding=1,
                            residual_nhwc=x, matmul_dtype=matmul_dtype)
    # TODO(synk): AdaptiveAvgPool2d(1) is a tiny XLA reduce; could be folded
    # into the fc Pallas kernel.
    pooled = jnp.mean(x.astype(jnp.float32), axis=(1, 2))
    return _linear(pooled, params["fc_w"], params["fc_b"], matmul_dtype)


# ---------------------------------------------------------------------------
# Pure-JAX reference for a single ConvBNReLu (training-mode BN), NCHW
# ---------------------------------------------------------------------------

def _ref_conv_bn_act(x_nchw, w, g, b, stride, padding, neg_slope):
    y = jax.lax.conv_general_dilated(
        x_nchw, w, window_strides=(stride, stride),
        padding=[(padding, padding), (padding, padding)],
        dimension_numbers=("NCHW", "OIHW", "NCHW"),
        preferred_element_type=jnp.float32,
        precision=jax.lax.Precision.HIGHEST)
    mean = jnp.mean(y, axis=(0, 2, 3), keepdims=True)
    var = jnp.mean(jnp.square(y - mean), axis=(0, 2, 3), keepdims=True)
    z = (y - mean) * jax.lax.rsqrt(var + _EPS)
    z = z * g.reshape(1, -1, 1, 1) + b.reshape(1, -1, 1, 1)
    return jnp.where(z >= 0.0, z, neg_slope * z)


# ---------------------------------------------------------------------------
# Demo / correctness check
# ---------------------------------------------------------------------------

if __name__ == "__main__":
    root = jax.random.PRNGKey(0)
    k_x, k_p, k_c = jax.random.split(root, 3)

    # --- per-path correctness checks (f32 MXU feeds, tight tolerances) -----
    def _check_conv(key, cin, cout, k, s, p, hw, with_residual):
        ks = jax.random.split(key, 4)
        x = jax.random.normal(ks[0], (2, cin, hw, hw), jnp.float32)
        w = jax.random.normal(ks[1], (cout, cin, k, k), jnp.float32) \
            * (2.0 / (cin * k * k)) ** 0.5
        g = 1.0 + 0.1 * jax.random.normal(ks[2], (cout,), jnp.float32)
        b = 0.1 * jax.random.normal(ks[3], (cout,), jnp.float32)
        x_nhwc = jnp.transpose(x, (0, 2, 3, 1))
        res = x_nhwc if with_residual else None
        fn = jax.jit(functools.partial(conv_bn_act, stride=s, padding=p,
                                       matmul_dtype=jnp.float32,
                                       out_dtype=jnp.float32))
        out = jax.block_until_ready(fn(x_nhwc, w, g, b, residual_nhwc=res))
        ref = jnp.transpose(_ref_conv_bn_act(x, w, g, b, s, p, _NEG_SLOPE),
                            (0, 2, 3, 1))
        if with_residual:
            ref = ref + x_nhwc
        err = float(jnp.max(jnp.abs(out - ref)))
        assert jnp.allclose(out, ref, atol=3e-3, rtol=3e-3), \
            "conv check (k=%d, s=%d) failed: max abs diff %e" % (k, s, err)

    kc = jax.random.split(k_c, 3)
    _check_conv(kc[0], 16, 16, 3, 1, 1, 12, True)    # stride-1 direct path (+res)
    _check_conv(kc[1], 16, 32, 3, 2, 1, 12, False)   # stride-2 im2col path
    _check_conv(kc[2], 32, 16, 1, 1, 0, 12, False)   # pointwise path

    # --- full Darknet53 forward, bf16 MXU feeds + bf16 inter-layer traffic --
    N, H, W, NUM_CLASS = 2, 32, 32, 10
    x = jax.random.normal(k_x, (N, 3, H, W), dtype=jnp.float32)
    params = init_params(k_p, num_class=NUM_CLASS)
    fwd = jax.jit(functools.partial(darknet53_forward,
                                    matmul_dtype=jnp.bfloat16))
    out = jax.block_until_ready(fwd(params, x))
    assert out.shape == (N, NUM_CLASS)
    assert bool(jnp.all(jnp.isfinite(out)))

    print("KERNEL_OK")
</pallas_src>

<mosaic_0001>
module attributes {stable_mosaic.version = 11 : i64} {
  func.func @_conv_s1_bn_act_kernel(%arg0: i32, %arg1: memref<420x128xf32, #tpu.memory_space<vmem>>, %arg2: memref<9x128x128xf32, #tpu.memory_space<vmem>>, %arg3: memref<1x128xf32, #tpu.memory_space<vmem>>, %arg4: memref<1x128xf32, #tpu.memory_space<vmem>>, %arg5: memref<336x1xf32, #tpu.memory_space<vmem>>, %arg6: memref<336x128xf32, #tpu.memory_space<vmem>>, %arg7: memref<336x128xf32, #tpu.memory_space<vmem>>, %arg8: memref<336x128xf32, #tpu.memory_space<vmem>>) attributes {dimension_semantics = [#tpu.dimension_semantics<parallel>], iteration_bounds = array<i64: 1>, scalar_prefetch = 0 : i64, scratch_operands = 1 : i64, tpu.core_type = #tpu.core_type<tc>, window_params = [{pipeline_mode = #tpu.pipeline_mode<synchronous>, transform_indices = @transform_0, window_bounds = array<i64: 420, 128>}, {transform_indices = @transform_1, window_bounds = array<i64: 9, 128, 128>}, {transform_indices = @transform_2, window_bounds = array<i64: 1, 128>}, {transform_indices = @transform_3, window_bounds = array<i64: 1, 128>}, {pipeline_mode = #tpu.pipeline_mode<synchronous>, transform_indices = @transform_4, window_bounds = array<i64: 336, 1>}, {transform_indices = @transform_5, window_bounds = array<i64: 336, 128>}, {transform_indices = @transform_6, window_bounds = array<i64: 336, 128>}]} {
    %cst = arith.constant 0.000000e+00 : f32
    %0 = vector.broadcast %cst : f32 to vector<168x128xf32>
    %c0 = arith.constant 0 : index
    %c0_0 = arith.constant 0 : index
    %1 = vector.load %arg1[%c0, %c0_0] : memref<420x128xf32, #tpu.memory_space<vmem>>, vector<168x128xf32>
    %c0_1 = arith.constant 0 : index
    %c0_2 = arith.constant 0 : index
    %c0_3 = arith.constant 0 : index
    %2 = vector.load %arg2[%c0_1, %c0_2, %c0_3] : memref<9x128x128xf32, #tpu.memory_space<vmem>>, vector<1x128x128xf32>
    %3 = vector.shape_cast %2 : vector<1x128x128xf32> to vector<128x128xf32>
    %cst_4 = arith.constant dense<0.000000e+00> : vector<168x128xf32>
    %4 = tpu.matmul %1, %3, %cst_4 {dimension_numbers = #tpu.dot_dimension_numbers<[1], [0], [0], [1], [0, 0, 1, 1], [], []>} : vector<168x128xf32>, vector<128x128xf32>, vector<168x128xf32> -> vector<168x128xf32>
    %5 = arith.addf %0, %4 : vector<168x128xf32>
    %c1 = arith.constant 1 : index
    %c0_5 = arith.constant 0 : index
    %6 = vector.load %arg1[%c1, %c0_5] : memref<420x128xf32, #tpu.memory_space<vmem>>, vector<168x128xf32>
    %c1_6 = arith.constant 1 : index
    %c0_7 = arith.constant 0 : index
    %c0_8 = arith.constant 0 : index
    %7 = vector.load %arg2[%c1_6, %c0_7, %c0_8] : memref<9x128x128xf32, #tpu.memory_space<vmem>>, vector<1x128x128xf32>
    %8 = vector.shape_cast %7 : vector<1x128x128xf32> to vector<128x128xf32>
    %cst_9 = arith.constant dense<0.000000e+00> : vector<168x128xf32>
    %9 = tpu.matmul %6, %8, %cst_9 {dimension_numbers = #tpu.dot_dimension_numbers<[1], [0], [0], [1], [0, 0, 1, 1], [], []>} : vector<168x128xf32>, vector<128x128xf32>, vector<168x128xf32> -> vector<168x128xf32>
    %10 = arith.addf %5, %9 : vector<168x128xf32>
    %c2 = arith.constant 2 : index
    %c0_10 = arith.constant 0 : index
    %11 = vector.load %arg1[%c2, %c0_10] : memref<420x128xf32, #tpu.memory_space<vmem>>, vector<168x128xf32>
    %c2_11 = arith.constant 2 : index
    %c0_12 = arith.constant 0 : index
    %c0_13 = arith.constant 0 : index
    %12 = vector.load %arg2[%c2_11, %c0_12, %c0_13] : memref<9x128x128xf32, #tpu.memory_space<vmem>>, vector<1x128x128xf32>
    %13 = vector.shape_cast %12 : vector<1x128x128xf32> to vector<128x128xf32>
    %cst_14 = arith.constant dense<0.000000e+00> : vector<168x128xf32>
    %14 = tpu.matmul %11, %13, %cst_14 {dimension_numbers = #tpu.dot_dimension_numbers<[1], [0], [0], [1], [0, 0, 1, 1], [], []>} : vector<168x128xf32>, vector<128x128xf32>, vector<168x128xf32> -> vector<168x128xf32>
    %15 = arith.addf %10, %14 : vector<168x128xf32>
    %c14 = arith.constant 14 : index
    %c0_15 = arith.constant 0 : index
    %16 = vector.load %arg1[%c14, %c0_15] : memref<420x128xf32, #tpu.memory_space<vmem>>, vector<168x128xf32>
    %c3 = arith.constant 3 : index
    %c0_16 = arith.constant 0 : index
    %c0_17 = arith.constant 0 : index
    %17 = vector.load %arg2[%c3, %c0_16, %c0_17] : memref<9x128x128xf32, #tpu.memory_space<vmem>>, vector<1x128x128xf32>
    %18 = vector.shape_cast %17 : vector<1x128x128xf32> to vector<128x128xf32>
    %cst_18 = arith.constant dense<0.000000e+00> : vector<168x128xf32>
    %19 = tpu.matmul %16, %18, %cst_18 {dimension_numbers = #tpu.dot_dimension_numbers<[1], [0], [0], [1], [0, 0, 1, 1], [], []>} : vector<168x128xf32>, vector<128x128xf32>, vector<168x128xf32> -> vector<168x128xf32>
    %20 = arith.addf %15, %19 : vector<168x128xf32>
    %c15 = arith.constant 15 : index
    %c0_19 = arith.constant 0 : index
    %21 = vector.load %arg1[%c15, %c0_19] : memref<420x128xf32, #tpu.memory_space<vmem>>, vector<168x128xf32>
    %c4 = arith.constant 4 : index
    %c0_20 = arith.constant 0 : index
    %c0_21 = arith.constant 0 : index
    %22 = vector.load %arg2[%c4, %c0_20, %c0_21] : memref<9x128x128xf32, #tpu.memory_space<vmem>>, vector<1x128x128xf32>
    %23 = vector.shape_cast %22 : vector<1x128x128xf32> to vector<128x128xf32>
    %cst_22 = arith.constant dense<0.000000e+00> : vector<168x128xf32>
    %24 = tpu.matmul %21, %23, %cst_22 {dimension_numbers = #tpu.dot_dimension_numbers<[1], [0], [0], [1], [0, 0, 1, 1], [], []>} : vector<168x128xf32>, vector<128x128xf32>, vector<168x128xf32> -> vector<168x128xf32>
    %25 = arith.addf %20, %24 : vector<168x128xf32>
    %c16 = arith.constant 16 : index
    %c0_23 = arith.constant 0 : index
    %26 = vector.load %arg1[%c16, %c0_23] : memref<420x128xf32, #tpu.memory_space<vmem>>, vector<168x128xf32>
    %c5 = arith.constant 5 : index
    %c0_24 = arith.constant 0 : index
    %c0_25 = arith.constant 0 : index
    %27 = vector.load %arg2[%c5, %c0_24, %c0_25] : memref<9x128x128xf32, #tpu.memory_space<vmem>>, vector<1x128x128xf32>
    %28 = vector.shape_cast %27 : vector<1x128x128xf32> to vector<128x128xf32>
    %cst_26 = arith.constant dense<0.000000e+00> : vector<168x128xf32>
    %29 = tpu.matmul %26, %28, %cst_26 {dimension_numbers = #tpu.dot_dimension_numbers<[1], [0], [0], [1], [0, 0, 1, 1], [], []>} : vector<168x128xf32>, vector<128x128xf32>, vector<168x128xf32> -> vector<168x128xf32>
    %30 = arith.addf %25, %29 : vector<168x128xf32>
    %c28 = arith.constant 28 : index
    %c0_27 = arith.constant 0 : index
    %31 = vector.load %arg1[%c28, %c0_27] : memref<420x128xf32, #tpu.memory_space<vmem>>, vector<168x128xf32>
    %c6 = arith.constant 6 : index
    %c0_28 = arith.constant 0 : index
    %c0_29 = arith.constant 0 : index
    %32 = vector.load %arg2[%c6, %c0_28, %c0_29] : memref<9x128x128xf32, #tpu.memory_space<vmem>>, vector<1x128x128xf32>
    %33 = vector.shape_cast %32 : vector<1x128x128xf32> to vector<128x128xf32>
    %cst_30 = arith.constant dense<0.000000e+00> : vector<168x128xf32>
    %34 = tpu.matmul %31, %33, %cst_30 {dimension_numbers = #tpu.dot_dimension_numbers<[1], [0], [0], [1], [0, 0, 1, 1], [], []>} : vector<168x128xf32>, vector<128x128xf32>, vector<168x128xf32> -> vector<168x128xf32>
    %35 = arith.addf %30, %34 : vector<168x128xf32>
    %c29 = arith.constant 29 : index
    %c0_31 = arith.constant 0 : index
    %36 = vector.load %arg1[%c29, %c0_31] : memref<420x128xf32, #tpu.memory_space<vmem>>, vector<168x128xf32>
    %c7 = arith.constant 7 : index
    %c0_32 = arith.constant 0 : index
    %c0_33 = arith.constant 0 : index
    %37 = vector.load %arg2[%c7, %c0_32, %c0_33] : memref<9x128x128xf32, #tpu.memory_space<vmem>>, vector<1x128x128xf32>
    %38 = vector.shape_cast %37 : vector<1x128x128xf32> to vector<128x128xf32>
    %cst_34 = arith.constant dense<0.000000e+00> : vector<168x128xf32>
    %39 = tpu.matmul %36, %38, %cst_34 {dimension_numbers = #tpu.dot_dimension_numbers<[1], [0], [0], [1], [0, 0, 1, 1], [], []>} : vector<168x128xf32>, vector<128x128xf32>, vector<168x128xf32> -> vector<168x128xf32>
    %40 = arith.addf %35, %39 : vector<168x128xf32>
    %c30 = arith.constant 30 : index
    %c0_35 = arith.constant 0 : index
    %41 = vector.load %arg1[%c30, %c0_35] : memref<420x128xf32, #tpu.memory_space<vmem>>, vector<168x128xf32>
    %c8 = arith.constant 8 : index
    %c0_36 = arith.constant 0 : index
    %c0_37 = arith.constant 0 : index
    %42 = vector.load %arg2[%c8, %c0_36, %c0_37] : memref<9x128x128xf32, #tpu.memory_space<vmem>>, vector<1x128x128xf32>
    %43 = vector.shape_cast %42 : vector<1x128x128xf32> to vector<128x128xf32>
    %cst_38 = arith.constant dense<0.000000e+00> : vector<168x128xf32>
    %44 = tpu.matmul %41, %43, %cst_38 {dimension_numbers = #tpu.dot_dimension_numbers<[1], [0], [0], [1], [0, 0, 1, 1], [], []>} : vector<168x128xf32>, vector<128x128xf32>, vector<168x128xf32> -> vector<168x128xf32>
    %45 = arith.addf %40, %44 : vector<168x128xf32>
    %c0_39 = arith.constant 0 : index
    %c0_40 = arith.constant 0 : index
    %46 = vector.load %arg8[%c0_39, %c0_40] : memref<336x128xf32, #tpu.memory_space<vmem>>, vector<168x128xf32>
    tpu.vector_store %arg8[%c0_39, %c0_40], %45 {strides = array<i32>} : memref<336x128xf32, #tpu.memory_space<vmem>>, vector<168x128xf32>,
    %cst_41 = arith.constant 0.000000e+00 : f32
    %47 = vector.broadcast %cst_41 : f32 to vector<168x128xf32>
    %c210 = arith.constant 210 : index
    %c0_42 = arith.constant 0 : index
    %48 = vector.load %arg1[%c210, %c0_42] : memref<420x128xf32, #tpu.memory_space<vmem>>, vector<168x128xf32>
    %c0_43 = arith.constant 0 : index
    %c0_44 = arith.constant 0 : index
    %c0_45 = arith.constant 0 : index
    %49 = vector.load %arg2[%c0_43, %c0_44, %c0_45] : memref<9x128x128xf32, #tpu.memory_space<vmem>>, vector<1x128x128xf32>
    %50 = vector.shape_cast %49 : vector<1x128x128xf32> to vector<128x128xf32>
    %cst_46 = arith.constant dense<0.000000e+00> : vector<168x128xf32>
    %51 = tpu.matmul %48, %50, %cst_46 {dimension_numbers = #tpu.dot_dimension_numbers<[1], [0], [0], [1], [0, 0, 1, 1], [], []>} : vector<168x128xf32>, vector<128x128xf32>, vector<168x128xf32> -> vector<168x128xf32>
    %52 = arith.addf %47, %51 : vector<168x128xf32>
    %c211 = arith.constant 211 : index
    %c0_47 = arith.constant 0 : index
    %53 = vector.load %arg1[%c211, %c0_47] : memref<420x128xf32, #tpu.memory_space<vmem>>, vector<168x128xf32>
    %c1_48 = arith.constant 1 : index
    %c0_49 = arith.constant 0 : index
    %c0_50 = arith.constant 0 : index
    %54 = vector.load %arg2[%c1_48, %c0_49, %c0_50] : memref<9x128x128xf32, #tpu.memory_space<vmem>>, vector<1x128x128xf32>
    %55 = vector.shape_cast %54 : vector<1x128x128xf32> to vector<128x128xf32>
    %cst_51 = arith.constant dense<0.000000e+00> : vector<168x128xf32>
    %56 = tpu.matmul %53, %55, %cst_51 {dimension_numbers = #tpu.dot_dimension_numbers<[1], [0], [0], [1], [0, 0, 1, 1], [], []>} : vector<168x128xf32>, vector<128x128xf32>, vector<168x128xf32> -> vector<168x128xf32>
    %57 = arith.addf %52, %56 : vector<168x128xf32>
    %c212 = arith.constant 212 : index
    %c0_52 = arith.constant 0 : index
    %58 = vector.load %arg1[%c212, %c0_52] : memref<420x128xf32, #tpu.memory_space<vmem>>, vector<168x128xf32>
    %c2_53 = arith.constant 2 : index
    %c0_54 = arith.constant 0 : index
    %c0_55 = arith.constant 0 : index
    %59 = vector.load %arg2[%c2_53, %c0_54, %c0_55] : memref<9x128x128xf32, #tpu.memory_space<vmem>>, vector<1x128x128xf32>
    %60 = vector.shape_cast %59 : vector<1x128x128xf32> to vector<128x128xf32>
    %cst_56 = arith.constant dense<0.000000e+00> : vector<168x128xf32>
    %61 = tpu.matmul %58, %60, %cst_56 {dimension_numbers = #tpu.dot_dimension_numbers<[1], [0], [0], [1], [0, 0, 1, 1], [], []>} : vector<168x128xf32>, vector<128x128xf32>, vector<168x128xf32> -> vector<168x128xf32>
    %62 = arith.addf %57, %61 : vector<168x128xf32>
    %c224 = arith.constant 224 : index
    %c0_57 = arith.constant 0 : index
    %63 = vector.load %arg1[%c224, %c0_57] : memref<420x128xf32, #tpu.memory_space<vmem>>, vector<168x128xf32>
    %c3_58 = arith.constant 3 : index
    %c0_59 = arith.constant 0 : index
    %c0_60 = arith.constant 0 : index
    %64 = vector.load %arg2[%c3_58, %c0_59, %c0_60] : memref<9x128x128xf32, #tpu.memory_space<vmem>>, vector<1x128x128xf32>
    %65 = vector.shape_cast %64 : vector<1x128x128xf32> to vector<128x128xf32>
    %cst_61 = arith.constant dense<0.000000e+00> : vector<168x128xf32>
    %66 = tpu.matmul %63, %65, %cst_61 {dimension_numbers = #tpu.dot_dimension_numbers<[1], [0], [0], [1], [0, 0, 1, 1], [], []>} : vector<168x128xf32>, vector<128x128xf32>, vector<168x128xf32> -> vector<168x128xf32>
    %67 = arith.addf %62, %66 : vector<168x128xf32>
    %c225 = arith.constant 225 : index
    %c0_62 = arith.constant 0 : index
    %68 = vector.load %arg1[%c225, %c0_62] : memref<420x128xf32, #tpu.memory_space<vmem>>, vector<168x128xf32>
    %c4_63 = arith.constant 4 : index
    %c0_64 = arith.constant 0 : index
    %c0_65 = arith.constant 0 : index
    %69 = vector.load %arg2[%c4_63, %c0_64, %c0_65] : memref<9x128x128xf32, #tpu.memory_space<vmem>>, vector<1x128x128xf32>
    %70 = vector.shape_cast %69 : vector<1x128x128xf32> to vector<128x128xf32>
    %cst_66 = arith.constant dense<0.000000e+00> : vector<168x128xf32>
    %71 = tpu.matmul %68, %70, %cst_66 {dimension_numbers = #tpu.dot_dimension_numbers<[1], [0], [0], [1], [0, 0, 1, 1], [], []>} : vector<168x128xf32>, vector<128x128xf32>, vector<168x128xf32> -> vector<168x128xf32>
    %72 = arith.addf %67, %71 : vector<168x128xf32>
    %c226 = arith.constant 226 : index
    %c0_67 = arith.constant 0 : index
    %73 = vector.load %arg1[%c226, %c0_67] : memref<420x128xf32, #tpu.memory_space<vmem>>, vector<168x128xf32>
    %c5_68 = arith.constant 5 : index
    %c0_69 = arith.constant 0 : index
    %c0_70 = arith.constant 0 : index
    %74 = vector.load %arg2[%c5_68, %c0_69, %c0_70] : memref<9x128x128xf32, #tpu.memory_space<vmem>>, vector<1x128x128xf32>
    %75 = vector.shape_cast %74 : vector<1x128x128xf32> to vector<128x128xf32>
    %cst_71 = arith.constant dense<0.000000e+00> : vector<168x128xf32>
    %76 = tpu.matmul %73, %75, %cst_71 {dimension_numbers = #tpu.dot_dimension_numbers<[1], [0], [0], [1], [0, 0, 1, 1], [], []>} : vector<168x128xf32>, vector<128x128xf32>, vector<168x128xf32> -> vector<168x128xf32>
    %77 = arith.addf %72, %76 : vector<168x128xf32>
    %c238 = arith.constant 238 : index
    %c0_72 = arith.constant 0 : index
    %78 = vector.load %arg1[%c238, %c0_72] : memref<420x128xf32, #tpu.memory_space<vmem>>, vector<168x128xf32>
    %c6_73 = arith.constant 6 : index
    %c0_74 = arith.constant 0 : index
    %c0_75 = arith.constant 0 : index
    %79 = vector.load %arg2[%c6_73, %c0_74, %c0_75] : memref<9x128x128xf32, #tpu.memory_space<vmem>>, vector<1x128x128xf32>
    %80 = vector.shape_cast %79 : vector<1x128x128xf32> to vector<128x128xf32>
    %cst_76 = arith.constant dense<0.000000e+00> : vector<168x128xf32>
    %81 = tpu.matmul %78, %80, %cst_76 {dimension_numbers = #tpu.dot_dimension_numbers<[1], [0], [0], [1], [0, 0, 1, 1], [], []>} : vector<168x128xf32>, vector<128x128xf32>, vector<168x128xf32> -> vector<168x128xf32>
    %82 = arith.addf %77, %81 : vector<168x128xf32>
    %c239 = arith.constant 239 : index
    %c0_77 = arith.constant 0 : index
    %83 = vector.load %arg1[%c239, %c0_77] : memref<420x128xf32, #tpu.memory_space<vmem>>, vector<168x128xf32>
    %c7_78 = arith.constant 7 : index
    %c0_79 = arith.constant 0 : index
    %c0_80 = arith.constant 0 : index
    %84 = vector.load %arg2[%c7_78, %c0_79, %c0_80] : memref<9x128x128xf32, #tpu.memory_space<vmem>>, vector<1x128x128xf32>
    %85 = vector.shape_cast %84 : vector<1x128x128xf32> to vector<128x128xf32>
    %cst_81 = arith.constant dense<0.000000e+00> : vector<168x128xf32>
    %86 = tpu.matmul %83, %85, %cst_81 {dimension_numbers = #tpu.dot_dimension_numbers<[1], [0], [0], [1], [0, 0, 1, 1], [], []>} : vector<168x128xf32>, vector<128x128xf32>, vector<168x128xf32> -> vector<168x128xf32>
    %87 = arith.addf %82, %86 : vector<168x128xf32>
    %c240 = arith.constant 240 : index
    %c0_82 = arith.constant 0 : index
    %88 = vector.load %arg1[%c240, %c0_82] : memref<420x128xf32, #tpu.memory_space<vmem>>, vector<168x128xf32>
    %c8_83 = arith.constant 8 : index
    %c0_84 = arith.constant 0 : index
    %c0_85 = arith.constant 0 : index
    %89 = vector.load %arg2[%c8_83, %c0_84, %c0_85] : memref<9x128x128xf32, #tpu.memory_space<vmem>>, vector<1x128x128xf32>
    %90 = vector.shape_cast %89 : vector<1x128x128xf32> to vector<128x128xf32>
    %cst_86 = arith.constant dense<0.000000e+00> : vector<168x128xf32>
    %91 = tpu.matmul %88, %90, %cst_86 {dimension_numbers = #tpu.dot_dimension_numbers<[1], [0], [0], [1], [0, 0, 1, 1], [], []>} : vector<168x128xf32>, vector<128x128xf32>, vector<168x128xf32> -> vector<168x128xf32>
    %92 = arith.addf %87, %91 : vector<168x128xf32>
    %c168 = arith.constant 168 : index
    %c0_87 = arith.constant 0 : index
    %93 = vector.load %arg8[%c168, %c0_87] : memref<336x128xf32, #tpu.memory_space<vmem>>, vector<168x128xf32>
    tpu.vector_store %arg8[%c168, %c0_87], %92 {strides = array<i32>} : memref<336x128xf32, #tpu.memory_space<vmem>>, vector<168x128xf32>,
    %c0_88 = arith.constant 0 : index
    %c0_89 = arith.constant 0 : index
    %94 = vector.load %arg8[%c0_88, %c0_89] : memref<336x128xf32, #tpu.memory_space<vmem>>, vector<336x128xf32>
    %c0_90 = arith.constant 0 : index
    %c0_91 = arith.constant 0 : index
    %95 = vector.load %arg5[%c0_90, %c0_91] : memref<336x1xf32, #tpu.memory_space<vmem>>, vector<336x1xf32>
    %96 = vector.broadcast %95 : vector<336x1xf32> to vector<336x128xf32>
    %97 = arith.mulf %94, %96 : vector<336x128xf32>
    %cst_92 = arith.constant dense<0.000000e+00> : vector<128xf32>
    %98 = vector.multi_reduction <add>, %97, %cst_92 [0] : vector<336x128xf32> to vector<128xf32>
    %99 = vector.shape_cast %98 : vector<128xf32> to vector<1x128xf32>
    %cst_93 = arith.constant 0.00347222225 : f32
    %100 = vector.broadcast %cst_93 : f32 to vector<1x128xf32>
    %101 = arith.mulf %99, %100 : vector<1x128xf32>
    %102 = arith.mulf %97, %94 : vector<336x128xf32>
    %cst_94 = arith.constant dense<0.000000e+00> : vector<128xf32>
    %103 = vector.multi_reduction <add>, %102, %cst_94 [0] : vector<336x128xf32> to vector<128xf32>
    %104 = vector.shape_cast %103 : vector<128xf32> to vector<1x128xf32>
    %cst_95 = arith.constant 0.00347222225 : f32
    %105 = vector.broadcast %cst_95 : f32 to vector<1x128xf32>
    %106 = arith.mulf %104, %105 : vector<1x128xf32>
    %107 = arith.mulf %101, %101 : vector<1x128xf32>
    %108 = arith.subf %106, %107 : vector<1x128xf32>
    %cst_96 = arith.constant 0.000000e+00 : f32
    %109 = vector.broadcast %cst_96 : f32 to vector<1x128xf32>
    %110 = arith.maximumf %108, %109 : vector<1x128xf32>
    %c0_97 = arith.constant 0 : index
    %c0_98 = arith.constant 0 : index
    %111 = vector.load %arg3[%c0_97, %c0_98] : memref<1x128xf32, #tpu.memory_space<vmem>>, vector<1x128xf32>
    %cst_99 = arith.constant 9.99999974E-6 : f32
    %112 = vector.broadcast %cst_99 : f32 to vector<1x128xf32>
    %113 = arith.addf %110, %112 : vector<1x128xf32>
    %114 = math.rsqrt %113 : vector<1x128xf32>
    %115 = arith.mulf %111, %114 : vector<1x128xf32>
    %c0_100 = arith.constant 0 : index
    %c0_101 = arith.constant 0 : index
    %116 = vector.load %arg4[%c0_100, %c0_101] : memref<1x128xf32, #tpu.memory_space<vmem>>, vector<1x128xf32>
    %117 = arith.mulf %101, %115 : vector<1x128xf32>
    %118 = arith.subf %116, %117 : vector<1x128xf32>
    %119 = vector.broadcast %115 : vector<1x128xf32> to vector<336x128xf32>
    %120 = arith.mulf %94, %119 : vector<336x128xf32>
    %121 = vector.broadcast %118 : vector<1x128xf32> to vector<336x128xf32>
    %122 = arith.addf %120, %121 : vector<336x128xf32>
    %cst_102 = arith.constant 0.000000e+00 : f32
    %123 = vector.broadcast %cst_102 : f32 to vector<336x128xf32>
    %124 = arith.cmpf oge, %122, %123 : vector<336x128xf32>
    %cst_103 = arith.constant 0.00999999977 : f32
    %125 = vector.broadcast %cst_103 : f32 to vector<336x128xf32>
    %126 = arith.mulf %125, %122 : vector<336x128xf32>
    %127 = arith.select %124, %122, %126 : vector<336x128xi1>, vector<336x128xf32>
    %c0_104 = arith.constant 0 : index
    %c0_105 = arith.constant 0 : index
    %128 = vector.load %arg6[%c0_104, %c0_105] : memref<336x128xf32, #tpu.memory_space<vmem>>, vector<336x128xf32>
    %129 = arith.addf %127, %128 : vector<336x128xf32>
    %c0_106 = arith.constant 0 : index
    %c0_107 = arith.constant 0 : index
    %130 = vector.load %arg7[%c0_106, %c0_107] : memref<336x128xf32, #tpu.memory_space<vmem>>, vector<336x128xf32>
    tpu.vector_store %arg7[%c0_106, %c0_107], %129 {strides = array<i32>} : memref<336x128xf32, #tpu.memory_space<vmem>>, vector<336x128xf32>,
    return
  }
  func.func @transform_0(%arg0: i32) -> (i32, i32) {
    %c0_i32 = arith.constant 0 : i32
    %c0_i32_0 = arith.constant 0 : i32
    %c0_i32_1 = arith.constant 0 : i32
    return %c0_i32, %c0_i32_0 : i32, i32
  }
  func.func @transform_1(%arg0: i32) -> (i32, i32, i32) {
    %c0_i32 = arith.constant 0 : i32
    %c0_i32_0 = arith.constant 0 : i32
    %c0_i32_1 = arith.constant 0 : i32
    return %c0_i32, %c0_i32_0, %arg0 : i32, i32, i32
  }
  func.func @transform_2(%arg0: i32) -> (i32, i32) {
    %c0_i32 = arith.constant 0 : i32
    %c0_i32_0 = arith.constant 0 : i32
    return %c0_i32, %arg0 : i32, i32
  }
  func.func @transform_3(%arg0: i32) -> (i32, i32) {
    %c0_i32 = arith.constant 0 : i32
    %c0_i32_0 = arith.constant 0 : i32
    return %c0_i32, %arg0 : i32, i32
  }
  func.func @transform_4(%arg0: i32) -> (i32, i32) {
    %c0_i32 = arith.constant 0 : i32
    %c0_i32_0 = arith.constant 0 : i32
    %c0_i32_1 = arith.constant 0 : i32
    return %c0_i32, %c0_i32_0 : i32, i32
  }
  func.func @transform_5(%arg0: i32) -> (i32, i32) {
    %c0_i32 = arith.constant 0 : i32
    %c0_i32_0 = arith.constant 0 : i32
    return %c0_i32, %arg0 : i32, i32
  }
  func.func @transform_6(%arg0: i32) -> (i32, i32) {
    %c0_i32 = arith.constant 0 : i32
    %c0_i32_0 = arith.constant 0 : i32
    return %c0_i32, %arg0 : i32, i32
  }
}

</mosaic_0001>

<llo_original>
// kernel: conv_bn_act.1
$region0: #{conv_bn_act.1}
  #allocation0 [shape = 'u32[]', space=smem, size = 0x4, offset = 0x4, fixed_abs, tag = 'smem constant byte address 0x4 - core index']
  #allocation1 [shape = 'u32[144,128]{1,0:T(1,128)}', space=vmem, size = 0x12000, scoped, tag = 'internal scratch']
  #allocation2 [shape = 'f32[336,128]{1,0:T(8,128)}', space=vmem, size = 0x2a000, scoped, tag = 'scratch operand']
  %s0 = inlined_call_operand.vmem [shape: f32[420,128], index: 0, kind: input, shape index: {}]
  %s1 = inlined_call_operand.vmem [shape: f32[9,128,128], index: 1, kind: input, shape index: {}]
  %s2 = inlined_call_operand.vmem [shape: f32[1,128], index: 2, kind: input, shape index: {}]
  %s3 = inlined_call_operand.vmem [shape: f32[1,128], index: 3, kind: input, shape index: {}]
  %s4 = inlined_call_operand.vmem [shape: f32[336,1], index: 4, kind: input, shape index: {}]
  %s5 = inlined_call_operand.vmem [shape: f32[336,128], index: 5, kind: input, shape index: {}]
  %s6 = inlined_call_operand.vmem [shape: f32[336,128], index: 6, kind: output, shape index: {}]
  %s7 = sld [smem:[#allocation0]]
  $region34: #{conv_bn_act.1} parent=0
    _
  %s9 = ssub.s32 1, %s7
  %s10 = scalar_select 0, %s9, %s7
  // Predicated region
  $region2: #{conv_bn_act.1} parent=0 // pred_check
    _
  $region3: #{conv_bn_act.1} parent=0 // pred_check_branch
    %12 = sbr.rel (0) target = $region5
  $region4: #{conv_bn_act.1} parent=0 // pred_region
    _
  $region5: #{conv_bn_act.1} parent=0 // pred_fallthru
    _
  // Predicated region
  $region6: #{conv_bn_act.1} parent=0 // pred_check
    _
  $region7: #{conv_bn_act.1} parent=0 // pred_check_branch
    %14 = sbr.rel (0) target = $region9
  $region8: #{conv_bn_act.1} parent=0 // pred_region
    _
  $region9: #{conv_bn_act.1} parent=0 // pred_fallthru
    _
  // Predicated region
  $region10: #{conv_bn_act.1} parent=0 // pred_check
    _
  $region11: #{conv_bn_act.1} parent=0 // pred_check_branch
    %16 = sbr.rel (0) target = $region13
  $region12: #{conv_bn_act.1} parent=0 // pred_region
    _
  $region13: #{conv_bn_act.1} parent=0 // pred_fallthru
    _
  // Predicated region
  $region14: #{conv_bn_act.1} parent=0 // pred_check
    _
  $region15: #{conv_bn_act.1} parent=0 // pred_check_branch
    %18 = sbr.rel (0) target = $region17
  $region16: #{conv_bn_act.1} parent=0 // pred_region
    _
  $region17: #{conv_bn_act.1} parent=0 // pred_fallthru
    _
  // Predicated region
  $region18: #{conv_bn_act.1} parent=0 // pred_check
    _
  $region19: #{conv_bn_act.1} parent=0 // pred_check_branch
    %20 = sbr.rel (0) target = $region21
  $region20: #{conv_bn_act.1} parent=0 // pred_region
    _
  $region21: #{conv_bn_act.1} parent=0 // pred_fallthru
    _
  // Predicated region
  $region22: #{conv_bn_act.1} parent=0 // pred_check
    _
  $region23: #{conv_bn_act.1} parent=0 // pred_check_branch
    %22 = sbr.rel (0) target = $region25
  $region24: #{conv_bn_act.1} parent=0 // pred_region
    _
  $region25: #{conv_bn_act.1} parent=0 // pred_fallthru
    _
  %v23 = vld [vmem:[%s0] sm:$0xff]
  %v24 = vld [vmem:[%s0 + $0x8] sm:$0xff]
  %v25 = vld [vmem:[%s0 + $0x10] sm:$0xff]
  %v26 = vld [vmem:[%s0 + $0x18] sm:$0xff]
  %v27 = vld [vmem:[%s0 + $0x20] sm:$0xff]
  %v28 = vld [vmem:[%s0 + $0x28] sm:$0xff]
  %v29 = vld [vmem:[%s0 + $0x30] sm:$0xff]
  %v30 = vld [vmem:[%s0 + $0x38] sm:$0xff]
  %v31 = vld [vmem:[%s0 + $0x40] sm:$0xff]
  %v32 = vld [vmem:[%s0 + $0x48] sm:$0xff]
  %v33 = vld [vmem:[%s0 + $0x50] sm:$0xff]
  %v34 = vld [vmem:[%s0 + $0x58] sm:$0xff]
  %v35 = vld [vmem:[%s0 + $0x60] sm:$0xff]
  %v36 = vld [vmem:[%s0 + $0x68] sm:$0xff]
  %v37 = vld [vmem:[%s0 + $0x70] sm:$0xff]
  %v38 = vld [vmem:[%s0 + $0x78] sm:$0xff]
  %v39 = vld [vmem:[%s0 + $0x80] sm:$0xff]
  %v40 = vld [vmem:[%s0 + $0x88] sm:$0xff]
  %v41 = vld [vmem:[%s0 + $0x90] sm:$0xff]
  %v42 = vld [vmem:[%s0 + $0x98] sm:$0xff]
  %v43 = vld [vmem:[%s0 + $0xa0] sm:$0xff]
  %v44 = vld [vmem:[%s1] sm:$0xff]
  %v45 = vld [vmem:[%s1 + $0x8] sm:$0xff]
  %v46 = vld [vmem:[%s1 + $0x10] sm:$0xff]
  %v47 = vld [vmem:[%s1 + $0x18] sm:$0xff]
  %v48 = vld [vmem:[%s1 + $0x20] sm:$0xff]
  %v49 = vld [vmem:[%s1 + $0x28] sm:$0xff]
  %v50 = vld [vmem:[%s1 + $0x30] sm:$0xff]
  %v51 = vld [vmem:[%s1 + $0x38] sm:$0xff]
  %v52 = vld [vmem:[%s1 + $0x40] sm:$0xff]
  %v53 = vld [vmem:[%s1 + $0x48] sm:$0xff]
  %v54 = vld [vmem:[%s1 + $0x50] sm:$0xff]
  %v55 = vld [vmem:[%s1 + $0x58] sm:$0xff]
  %v56 = vld [vmem:[%s1 + $0x60] sm:$0xff]
  %v57 = vld [vmem:[%s1 + $0x68] sm:$0xff]
  %v58 = vld [vmem:[%s1 + $0x70] sm:$0xff]
  %v59 = vld [vmem:[%s1 + $0x78] sm:$0xff]
  %v60 = vld [vmem:[%s0 + $0x1] sm:$0xff]
  %v61 = vld [vmem:[%s0 + $0x9] sm:$0xff]
  %v62 = vld [vmem:[%s0 + $0x11] sm:$0xff]
  %v63 = vld [vmem:[%s0 + $0x19] sm:$0xff]
  %v64 = vld [vmem:[%s0 + $0x21] sm:$0xff]
  %v65 = vld [vmem:[%s0 + $0x29] sm:$0xff]
  %v66 = vld [vmem:[%s0 + $0x31] sm:$0xff]
  %v67 = vld [vmem:[%s0 + $0x39] sm:$0xff]
  %v68 = vld [vmem:[%s0 + $0x41] sm:$0xff]
  %v69 = vld [vmem:[%s0 + $0x49] sm:$0xff]
  %v70 = vld [vmem:[%s0 + $0x51] sm:$0xff]
  %v71 = vld [vmem:[%s0 + $0x59] sm:$0xff]
  %v72 = vld [vmem:[%s0 + $0x61] sm:$0xff]
  %v73 = vld [vmem:[%s0 + $0x69] sm:$0xff]
  %v74 = vld [vmem:[%s0 + $0x71] sm:$0xff]
  %v75 = vld [vmem:[%s0 + $0x79] sm:$0xff]
  %v76 = vld [vmem:[%s0 + $0x81] sm:$0xff]
  %v77 = vld [vmem:[%s0 + $0x89] sm:$0xff]
  %v78 = vld [vmem:[%s0 + $0x91] sm:$0xff]
  %v79 = vld [vmem:[%s0 + $0x99] sm:$0xff]
  %v80 = vld [vmem:[%s0 + $0xa1] sm:$0xff]
  %s81 = scalar_lea.vmem %s1, 128
  %v82 = vld [vmem:[%s81] sm:$0xff]
  %v83 = vld [vmem:[%s81 + $0x8] sm:$0xff]
  %v84 = vld [vmem:[%s81 + $0x10] sm:$0xff]
  %v85 = vld [vmem:[%s81 + $0x18] sm:$0xff]
  %v86 = vld [vmem:[%s81 + $0x20] sm:$0xff]
  %v87 = vld [vmem:[%s81 + $0x28] sm:$0xff]
  %v88 = vld [vmem:[%s81 + $0x30] sm:$0xff]
  %v89 = vld [vmem:[%s81 + $0x38] sm:$0xff]
  %v90 = vld [vmem:[%s81 + $0x40] sm:$0xff]
  %v91 = vld [vmem:[%s81 + $0x48] sm:$0xff]
  %v92 = vld [vmem:[%s81 + $0x50] sm:$0xff]
  %v93 = vld [vmem:[%s81 + $0x58] sm:$0xff]
  %v94 = vld [vmem:[%s81 + $0x60] sm:$0xff]
  %v95 = vld [vmem:[%s81 + $0x68] sm:$0xff]
  %v96 = vld [vmem:[%s81 + $0x70] sm:$0xff]
  %v97 = vld [vmem:[%s81 + $0x78] sm:$0xff]
  %98 = vmatprep.subr.mxu0 0.0
  %99 = vmatpush1.msra.mxu0 %v82
  %100 = vmatprep.subr.mxu0 0.0
  %101 = vmatpush1.msra.mxu0 %v83
  %102 = vmatprep.subr.mxu0 0.0
  %103 = vmatpush1.msra.mxu0 %v84
  %104 = vmatprep.subr.mxu0 0.0
  %105 = vmatpush1.msra.mxu0 %v85
  %106 = vmatprep.subr.mxu0 0.0
  %107 = vmatpush1.msra.mxu0 %v86
  %108 = vmatprep.subr.mxu0 0.0
  %109 = vmatpush1.msra.mxu0 %v87
  %110 = vmatprep.subr.mxu0 0.0
  %111 = vmatpush1.msra.mxu0 %v88
  %112 = vmatprep.subr.mxu0 0.0
  %113 = vmatpush1.msra.mxu0 %v89
  %114 = vmatprep.subr.mxu0 0.0
  %115 = vmatpush1.msra.mxu0 %v90
  %116 = vmatprep.subr.mxu0 0.0
  %117 = vmatpush1.msra.mxu0 %v91
  %118 = vmatprep.subr.mxu0 0.0
  %119 = vmatpush1.msra.mxu0 %v92
  %120 = vmatprep.subr.mxu0 0.0
  %121 = vmatpush1.msra.mxu0 %v93
  %122 = vmatprep.subr.mxu0 0.0
  %123 = vmatpush1.msra.mxu0 %v94
  %124 = vmatprep.subr.mxu0 0.0
  %125 = vmatpush1.msra.mxu0 %v95
  %126 = vmatprep.subr.mxu0 0.0
  %127 = vmatpush1.msra.mxu0 %v96
  %128 = vmatprep.subr.mxu0 0.0
  %129 = vmatpush1.msra.mxu0 %v97
  %130 = vmatprep.subr.mxu0 0.0
  %131 = vmatpush1.msra.mxu0 0.0
  %132 = vmatprep.subr.mxu0 0.0
  %133 = vmatpush1.msra.mxu0 0.0
  %134 = vmatprep.subr.mxu0 0.0
  %135 = vmatpush1.msra.mxu0 0.0
  %136 = vmatprep.subr.mxu0 0.0
  %137 = vmatpush1.msra.mxu0 0.0
  %138 = vmatprep.subr.mxu0 0.0
  %139 = vmatpush1.msra.mxu0 0.0
  %140 = vmatprep.subr.mxu0 0.0
  %141 = vmatpush1.msra.mxu0 0.0
  %142 = vmatprep.subr.mxu0 0.0
  %143 = vmatpush1.msra.mxu0 0.0
  %144 = vmatprep.subr.mxu0 0.0
  %145 = vmatpush1.msra.mxu0 0.0
  %146 = vmatprep.subr.mxu0 0.0
  %147 = vmatpush1.msra.mxu0 0.0
  %148 = vmatprep.subr.mxu0 0.0
  %149 = vmatpush1.msra.mxu0 0.0
  %150 = vmatprep.subr.mxu0 0.0
  %151 = vmatpush1.msra.mxu0 0.0
  %152 = vmatprep.subr.mxu0 0.0
  %153 = vmatpush1.msra.mxu0 0.0
  %154 = vmatprep.subr.mxu0 0.0
  %155 = vmatpush1.msra.mxu0 0.0
  %156 = vmatprep.subr.mxu0 0.0
  %157 = vmatpush1.msra.mxu0 0.0
  %158 = vmatprep.subr.mxu0 0.0
  %159 = vmatpush1.msra.mxu0 0.0
  %160 = vmatprep.subr.mxu0 0.0
  %161 = vmatpush1.msra.mxu0 0.0
  %162 = vmatprep.mubr.f32.mxu0 0.0
  %163 = vmatmul.mubr.f32.gmra.mrb[0].mxu0 %v60
  %v164 = vpop.f32.mrb[0].mxu0
  %v165 = vadd.f32 0.0, %v164
  %v166 = vpop.f32.mrb[0].mxu0
  %167 = vmatprep.mubr.f32.mxu0 0.0
  %168 = vmatmul.mubr.f32.gmra.mrb[0].mxu0 %v61
  %v169 = vpop.f32.mrb[0].mxu0
  %v170 = vadd.f32 0.0, %v169
  %v171 = vpop.f32.mrb[0].mxu0
  %172 = vmatprep.mubr.f32.mxu0 0.0
  %173 = vmatmul.mubr.f32.gmra.mrb[0].mxu0 %v62
  %v174 = vpop.f32.mrb[0].mxu0
  %v175 = vadd.f32 0.0, %v174
  %v176 = vpop.f32.mrb[0].mxu0
  %177 = vmatprep.mubr.f32.mxu0 0.0
  %178 = vmatmul.mubr.f32.gmra.mrb[0].mxu0 %v63
  %v179 = vpop.f32.mrb[0].mxu0
  %v180 = vadd.f32 0.0, %v179
  %v181 = vpop.f32.mrb[0].mxu0
  %182 = vmatprep.mubr.f32.mxu0 0.0
  %183 = vmatmul.mubr.f32.gmra.mrb[0].mxu0 %v64
  %v184 = vpop.f32.mrb[0].mxu0
  %v185 = vadd.f32 0.0, %v184
  %v186 = vpop.f32.mrb[0].mxu0
  %187 = vmatprep.mubr.f32.mxu0 0.0
  %188 = vmatmul.mubr.f32.gmra.mrb[0].mxu0 %v65
  %v189 = vpop.f32.mrb[0].mxu0
  %v190 = vadd.f32 0.0, %v189
  %v191 = vpop.f32.mrb[0].mxu0
  %192 = vmatprep.mubr.f32.mxu0 0.0
  %193 = vmatmul.mubr.f32.gmra.mrb[0].mxu0 %v66
  %v194 = vpop.f32.mrb[0].mxu0
  %v195 = vadd.f32 0.0, %v194
  %v196 = vpop.f32.mrb[0].mxu0
  %197 = vmatprep.mubr.f32.mxu0 0.0
  %198 = vmatmul.mubr.f32.gmra.mrb[0].mxu0 %v67
  %v199 = vpop.f32.mrb[0].mxu0
  %v200 = vadd.f32 0.0, %v199
  %v201 = vpop.f32.mrb[0].mxu0
  %202 = vmatprep.mubr.f32.mxu0 0.0
  %203 = vmatmul.mubr.f32.gmra.mrb[0].mxu0 %v68
  %v204 = vpop.f32.mrb[0].mxu0
  %v205 = vadd.f32 0.0, %v204
  %v206 = vpop.f32.mrb[0].mxu0
  %207 = vmatprep.mubr.f32.mxu0 0.0
  %208 = vmatmul.mubr.f32.gmra.mrb[0].mxu0 %v69
  %v209 = vpop.f32.mrb[0].mxu0
  %v210 = vadd.f32 0.0, %v209
  %v211 = vpop.f32.mrb[0].mxu0
  %212 = vmatprep.mubr.f32.mxu0 0.0
  %213 = vmatmul.mubr.f32.gmra.mrb[0].mxu0 %v70
  %v214 = vpop.f32.mrb[0].mxu0
  %v215 = vadd.f32 0.0, %v214
  %v216 = vpop.f32.mrb[0].mxu0
  %217 = vmatprep.mubr.f32.mxu0 0.0
  %218 = vmatmul.mubr.f32.gmra.mrb[0].mxu0 %v71
  %v219 = vpop.f32.mrb[0].mxu0
  %v220 = vadd.f32 0.0, %v219
  %v221 = vpop.f32.mrb[0].mxu0
  %222 = vmatprep.mubr.f32.mxu0 0.0
  %223 = vmatmul.mubr.f32.gmra.mrb[0].mxu0 %v72
  %v224 = vpop.f32.mrb[0].mxu0
  %v225 = vadd.f32 0.0, %v224
  %v226 = vpop.f32.mrb[0].mxu0
  %227 = vmatprep.mubr.f32.mxu0 0.0
  %228 = vmatmul.mubr.f32.gmra.mrb[0].mxu0 %v73
  %v229 = vpop.f32.mrb[0].mxu0
  %v230 = vadd.f32 0.0, %v229
  %v231 = vpop.f32.mrb[0].mxu0
  %232 = vmatprep.mubr.f32.mxu0 0.0
  %233 = vmatmul.mubr.f32.gmra.mrb[0].mxu0 %v74
  %v234 = vpop.f32.mrb[0].mxu0
  %v235 = vadd.f32 0.0, %v234
  %v236 = vpop.f32.mrb[0].mxu0
  %237 = vmatprep.mubr.f32.mxu0 0.0
  %238 = vmatmul.mubr.f32.gmra.mrb[0].mxu0 %v75
  %v239 = vpop.f32.mrb[0].mxu0
  %v240 = vadd.f32 0.0, %v239
  %v241 = vpop.f32.mrb[0].mxu0
  %242 = vmatprep.mubr.f32.mxu0 0.0
  %243 = vmatmul.mubr.f32.gmra.mrb[0].mxu0 %v76
  %v244 = vpop.f32.mrb[0].mxu0
  %v245 = vadd.f32 0.0, %v244
  %v246 = vpop.f32.mrb[0].mxu0
  %247 = vmatprep.mubr.f32.mxu0 0.0
  %248 = vmatmul.mubr.f32.gmra.mrb[0].mxu0 %v77
  %v249 = vpop.f32.mrb[0].mxu0
  %v250 = vadd.f32 0.0, %v249
  %v251 = vpop.f32.mrb[0].mxu0
  %252 = vmatprep.mubr.f32.mxu0 0.0
  %253 = vmatmul.mubr.f32.gmra.mrb[0].mxu0 %v78
  %v254 = vpop.f32.mrb[0].mxu0
  %v255 = vadd.f32 0.0, %v254
  %v256 = vpop.f32.mrb[0].mxu0
  %257 = vmatprep.mubr.f32.mxu0 0.0
  %258 = vmatmul.mubr.f32.gmra.mrb[0].mxu0 %v79
  %v259 = vpop.f32.mrb[0].mxu0
  %v260 = vadd.f32 0.0, %v259
  %v261 = vpop.f32.mrb[0].mxu0
  %262 = vmatprep.mubr.f32.mxu0 0.0
  %263 = vmatmul.mubr.f32.gmra.mrb[0].mxu0 %v80
  %v264 = vpop.f32.mrb[0].mxu0
  %v265 = vadd.f32 0.0, %v264
  %v266 = vpop.f32.mrb[0].mxu0
  %267 = vdwg.mxu0
  %268 = vmatprep.subr.mxu0 0.0
  %269 = vmatpush1.msra.mxu0 %v44
  %270 = vmatprep.subr.mxu0 0.0
  %271 = vmatpush1.msra.mxu0 %v45
  %272 = vmatprep.subr.mxu0 0.0
  %273 = vmatpush1.msra.mxu0 %v46
  %274 = vmatprep.subr.mxu0 0.0
  %275 = vmatpush1.msra.mxu0 %v47
  %276 = vmatprep.subr.mxu0 0.0
  %277 = vmatpush1.msra.mxu0 %v48
  %278 = vmatprep.subr.mxu0 0.0
  %279 = vmatpush1.msra.mxu0 %v49
  %280 = vmatprep.subr.mxu0 0.0
  %281 = vmatpush1.msra.mxu0 %v50
  %282 = vmatprep.subr.mxu0 0.0
  %283 = vmatpush1.msra.mxu0 %v51
  %284 = vmatprep.subr.mxu0 0.0
  %285 = vmatpush1.msra.mxu0 %v52
  %286 = vmatprep.subr.mxu0 0.0
  %287 = vmatpush1.msra.mxu0 %v53
  %288 = vmatprep.subr.mxu0 0.0
  %289 = vmatpush1.msra.mxu0 %v54
  %290 = vmatprep.subr.mxu0 0.0
  %291 = vmatpush1.msra.mxu0 %v55
  %292 = vmatprep.subr.mxu0 0.0
  %293 = vmatpush1.msra.mxu0 %v56
  %294 = vmatprep.subr.mxu0 0.0
  %295 = vmatpush1.msra.mxu0 %v57
  %296 = vmatprep.subr.mxu0 0.0
  %297 = vmatpush1.msra.mxu0 %v58
  %298 = vmatprep.subr.mxu0 0.0
  %299 = vmatpush1.msra.mxu0 %v59
  %300 = vmatprep.subr.mxu0 0.0
  %301 = vmatpush1.msra.mxu0 0.0
  %302 = vmatprep.subr.mxu0 0.0
  %303 = vmatpush1.msra.mxu0 0.0
  %304 = vmatprep.subr.mxu0 0.0
  %305 = vmatpush1.msra.mxu0 0.0
  %306 = vmatprep.subr.mxu0 0.0
  %307 = vmatpush1.msra.mxu0 0.0
  %308 = vmatprep.subr.mxu0 0.0
  %309 = vmatpush1.msra.mxu0 0.0
  %310 = vmatprep.subr.mxu0 0.0
  %311 = vmatpush1.msra.mxu0 0.0
  %312 = vmatprep.subr.mxu0 0.0
  %313 = vmatpush1.msra.mxu0 0.0
  %314 = vmatprep.subr.mxu0 0.0
  %315 = vmatpush1.msra.mxu0 0.0
  %316 = vmatprep.subr.mxu0 0.0
  %317 = vmatpush1.msra.mxu0 0.0
  %318 = vmatprep.subr.mxu0 0.0
  %319 = vmatpush1.msra.mxu0 0.0
  %320 = vmatprep.subr.mxu0 0.0
  %321 = vmatpush1.msra.mxu0 0.0
  %322 = vmatprep.subr.mxu0 0.0
  %323 = vmatpush1.msra.mxu0 0.0
  %324 = vmatprep.subr.mxu0 0.0
  %325 = vmatpush1.msra.mxu0 0.0
  %326 = vmatprep.subr.mxu0 0.0
  %327 = vmatpush1.msra.mxu0 0.0
  %328 = vmatprep.subr.mxu0 0.0
  %329 = vmatpush1.msra.mxu0 0.0
  %330 = vmatprep.subr.mxu0 0.0
  %331 = vmatpush1.msra.mxu0 0.0
  %332 = vmatprep.mubr.f32.mxu0 0.0
  %333 = vmatmul.mubr.f32.gmra.mrb[0].mxu0 %v23
  %v334 = vpop.f32.mrb[0].mxu0
  %v335 = vadd.f32 %v165, %v334
  %v336 = vpop.f32.mrb[0].mxu0
  %337 = vmatprep.mubr.f32.mxu0 0.0
  %338 = vmatmul.mubr.f32.gmra.mrb[0].mxu0 %v24
  %v339 = vpop.f32.mrb[0].mxu0
  %v340 = vadd.f32 %v170, %v339
  %v341 = vpop.f32.mrb[0].mxu0
  %342 = vmatprep.mubr.f32.mxu0 0.0
  %343 = vmatmul.mubr.f32.gmra.mrb[0].mxu0 %v25
  %v344 = vpop.f32.mrb[0].mxu0
  %v345 = vadd.f32 %v175, %v344
  %v346 = vpop.f32.mrb[0].mxu0
  %347 = vmatprep.mubr.f32.mxu0 0.0
  %348 = vmatmul.mubr.f32.gmra.mrb[0].mxu0 %v26
  %v349 = vpop.f32.mrb[0].mxu0
  %v350 = vadd.f32 %v180, %v349
  %v351 = vpop.f32.mrb[0].mxu0
  %352 = vmatprep.mubr.f32.mxu0 0.0
  %353 = vmatmul.mubr.f32.gmra.mrb[0].mxu0 %v27
  %v354 = vpop.f32.mrb[0].mxu0
  %v355 = vadd.f32 %v185, %v354
  %v356 = vpop.f32.mrb[0].mxu0
  %357 = vmatprep.mubr.f32.mxu0 0.0
  %358 = vmatmul.mubr.f32.gmra.mrb[0].mxu0 %v28
  %v359 = vpop.f32.mrb[0].mxu0
  %v360 = vadd.f32 %v190, %v359
  %v361 = vpop.f32.mrb[0].mxu0
  %362 = vmatprep.mubr.f32.mxu0 0.0
  %363 = vmatmul.mubr.f32.gmra.mrb[0].mxu0 %v29
  %v364 = vpop.f32.mrb[0].mxu0
  %v365 = vadd.f32 %v195, %v364
  %v366 = vpop.f32.mrb[0].mxu0
  %367 = vmatprep.mubr.f32.mxu0 0.0
  %368 = vmatmul.mubr.f32.gmra.mrb[0].mxu0 %v30
  %v369 = vpop.f32.mrb[0].mxu0
  %v370 = vadd.f32 %v200, %v369
  %v371 = vpop.f32.mrb[0].mxu0
  %372 = vmatprep.mubr.f32.mxu0 0.0
  %373 = vmatmul.mubr.f32.gmra.mrb[0].mxu0 %v31
  %v374 = vpop.f32.mrb[0].mxu0
  %v375 = vadd.f32 %v205, %v374
  %v376 = vpop.f32.mrb[0].mxu0
  %377 = vmatprep.mubr.f32.mxu0 0.0
  %378 = vmatmul.mubr.f32.gmra.mrb[0].mxu0 %v32
  %v379 = vpop.f32.mrb[0].mxu0
  %v380 = vadd.f32 %v210, %v379
  %v381 = vpop.f32.mrb[0].mxu0
  %382 = vmatprep.mubr.f32.mxu0 0.0
  %383 = vmatmul.mubr.f32.gmra.mrb[0].mxu0 %v33
  %v384 = vpop.f32.mrb[0].mxu0
  %v385 = vadd.f32 %v215, %v384
  %v386 = vpop.f32.mrb[0].mxu0
  %387 = vmatprep.mubr.f32.mxu0 0.0
  %388 = vmatmul.mubr.f32.gmra.mrb[0].mxu0 %v34
  %v389 = vpop.f32.mrb[0].mxu0
  %v390 = vadd.f32 %v220, %v389
  %v391 = vpop.f32.mrb[0].mxu0
  %392 = vmatprep.mubr.f32.mxu0 0.0
  %393 = vmatmul.mubr.f32.gmra.mrb[0].mxu0 %v35
  %v394 = vpop.f32.mrb[0].mxu0
  %v395 = vadd.f32 %v225, %v394
  %v396 = vpop.f32.mrb[0].mxu0
  %397 = vmatprep.mubr.f32.mxu0 0.0
  %398 = vmatmul.mubr.f32.gmra.mrb[0].mxu0 %v36
  %v399 = vpop.f32.mrb[0].mxu0
  %v400 = vadd.f32 %v230, %v399
  %v401 = vpop.f32.mrb[0].mxu0
  %402 = vmatprep.mubr.f32.mxu0 0.0
  %403 = vmatmul.mubr.f32.gmra.mrb[0].mxu0 %v37
  %v404 = vpop.f32.mrb[0].mxu0
  %v405 = vadd.f32 %v235, %v404
  %v406 = vpop.f32.mrb[0].mxu0
  %407 = vmatprep.mubr.f32.mxu0 0.0
  %408 = vmatmul.mubr.f32.gmra.mrb[0].mxu0 %v38
  %v409 = vpop.f32.mrb[0].mxu0
  %v410 = vadd.f32 %v240, %v409
  %v411 = vpop.f32.mrb[0].mxu0
  %412 = vmatprep.mubr.f32.mxu0 0.0
  %413 = vmatmul.mubr.f32.gmra.mrb[0].mxu0 %v39
  %v414 = vpop.f32.mrb[0].mxu0
  %v415 = vadd.f32 %v245, %v414
  %v416 = vpop.f32.mrb[0].mxu0
  %417 = vmatprep.mubr.f32.mxu0 0.0
  %418 = vmatmul.mubr.f32.gmra.mrb[0].mxu0 %v40
  %v419 = vpop.f32.mrb[0].mxu0
  %v420 = vadd.f32 %v250, %v419
  %v421 = vpop.f32.mrb[0].mxu0
  %422 = vmatprep.mubr.f32.mxu0 0.0
  %423 = vmatmul.mubr.f32.gmra.mrb[0].mxu0 %v41
  %v424 = vpop.f32.mrb[0].mxu0
  %v425 = vadd.f32 %v255, %v424
  %v426 = vpop.f32.mrb[0].mxu0
  %427 = vmatprep.mubr.f32.mxu0 0.0
  %428 = vmatmul.mubr.f32.gmra.mrb[0].mxu0 %v42
  %v429 = vpop.f32.mrb[0].mxu0
  %v430 = vadd.f32 %v260, %v429
  %v431 = vpop.f32.mrb[0].mxu0
  %432 = vmatprep.mubr.f32.mxu0 0.0
  %433 = vmatmul.mubr.f32.gmra.mrb[0].mxu0 %v43
  %v434 = vpop.f32.mrb[0].mxu0
  %v435 = vadd.f32 %v265, %v434
  %v436 = vpop.f32.mrb[0].mxu0
  %437 = vdwg.mxu0
  %v438 = vld [vmem:[%s0 + $0x2] sm:$0xff]
  %v439 = vld [vmem:[%s0 + $0xa] sm:$0xff]
  %v440 = vld [vmem:[%s0 + $0x12] sm:$0xff]
  %v441 = vld [vmem:[%s0 + $0x1a] sm:$0xff]
  %v442 = vld [vmem:[%s0 + $0x22] sm:$0xff]
  %v443 = vld [vmem:[%s0 + $0x2a] sm:$0xff]
  %v444 = vld [vmem:[%s0 + $0x32] sm:$0xff]
  %v445 = vld [vmem:[%s0 + $0x3a] sm:$0xff]
  %v446 = vld [vmem:[%s0 + $0x42] sm:$0xff]
  %v447 = vld [vmem:[%s0 + $0x4a] sm:$0xff]
  %v448 = vld [vmem:[%s0 + $0x52] sm:$0xff]
  %v449 = vld [vmem:[%s0 + $0x5a] sm:$0xff]
  %v450 = vld [vmem:[%s0 + $0x62] sm:$0xff]
  %v451 = vld [vmem:[%s0 + $0x6a] sm:$0xff]
  %v452 = vld [vmem:[%s0 + $0x72] sm:$0xff]
  %v453 = vld [vmem:[%s0 + $0x7a] sm:$0xff]
  %v454 = vld [vmem:[%s0 + $0x82] sm:$0xff]
  %v455 = vld [vmem:[%s0 + $0x8a] sm:$0xff]
  %v456 = vld [vmem:[%s0 + $0x92] sm:$0xff]
  %v457 = vld [vmem:[%s0 + $0x9a] sm:$0xff]
  %v458 = vld [vmem:[%s0 + $0xa2] sm:$0xff]
  %s459 = scalar_lea.vmem %s1, 256
  %v460 = vld [vmem:[%s459] sm:$0xff]
  %v461 = vld [vmem:[%s459 + $0x8] sm:$0xff]
  %v462 = vld [vmem:[%s459 + $0x10] sm:$0xff]
  %v463 = vld [vmem:[%s459 + $0x18] sm:$0xff]
  %v464 = vld [vmem:[%s459 + $0x20] sm:$0xff]
  %v465 = vld [vmem:[%s459 + $0x28] sm:$0xff]
  %v466 = vld [vmem:[%s459 + $0x30] sm:$0xff]
  %v467 = vld [vmem:[%s459 + $0x38] sm:$0xff]
  %v468 = vld [vmem:[%s459 + $0x40] sm:$0xff]
  %v469 = vld [vmem:[%s459 + $0x48] sm:$0xff]
  %v470 = vld [vmem:[%s459 + $0x50] sm:$0xff]
  %v471 = vld [vmem:[%s459 + $0x58] sm:$0xff]
  %v472 = vld [vmem:[%s459 + $0x60] sm:$0xff]
  %v473 = vld [vmem:[%s459 + $0x68] sm:$0xff]
  %v474 = vld [vmem:[%s459 + $0x70] sm:$0xff]
  %v475 = vld [vmem:[%s459 + $0x78] sm:$0xff]
  %476 = vmatprep.subr.mxu0 0.0
  %477 = vmatpush1.msra.mxu0 %v460
  %478 = vmatprep.subr.mxu0 0.0
  %479 = vmatpush1.msra.mxu0 %v461
  %480 = vmatprep.subr.mxu0 0.0
  %481 = vmatpush1.msra.mxu0 %v462
  %482 = vmatprep.subr.mxu0 0.0
  %483 = vmatpush1.msra.mxu0 %v463
  %484 = vmatprep.subr.mxu0 0.0
  %485 = vmatpush1.msra.mxu0 %v464
  %486 = vmatprep.subr.mxu0 0.0
  %487 = vmatpush1.msra.mxu0 %v465
  %488 = vmatprep.subr.mxu0 0.0
  %489 = vmatpush1.msra.mxu0 %v466
  %490 = vmatprep.subr.mxu0 0.0
  %491 = vmatpush1.msra.mxu0 %v467
  %492 = vmatprep.subr.mxu0 0.0
  %493 = vmatpush1.msra.mxu0 %v468
  %494 = vmatprep.subr.mxu0 0.0
  %495 = vmatpush1.msra.mxu0 %v469
  %496 = vmatprep.subr.mxu0 0.0
  %497 = vmatpush1.msra.mxu0 %v470
  %498 = vmatprep.subr.mxu0 0.0
  %499 = vmatpush1.msra.mxu0 %v471
  %500 = vmatprep.subr.mxu0 0.0
  %501 = vmatpush1.msra.mxu0 %v472
  %502 = vmatprep.subr.mxu0 0.0
  %503 = vmatpush1.msra.mxu0 %v473
  %504 = vmatprep.subr.mxu0 0.0
  %505 = vmatpush1.msra.mxu0 %v474
  %506 = vmatprep.subr.mxu0 0.0
  %507 = vmatpush1.msra.mxu0 %v475
  %508 = vmatprep.subr.mxu0 0.0
  %509 = vmatpush1.msra.mxu0 0.0
  %510 = vmatprep.subr.mxu0 0.0
  %511 = vmatpush1.msra.mxu0 0.0
  %512 = vmatprep.subr.mxu0 0.0
  %513 = vmatpush1.msra.mxu0 0.0
  %514 = vmatprep.subr.mxu0 0.0
  %515 = vmatpush1.msra.mxu0 0.0
  %516 = vmatprep.subr.mxu0 0.0
  %517 = vmatpush1.msra.mxu0 0.0
  %518 = vmatprep.subr.mxu0 0.0
  %519 = vmatpush1.msra.mxu0 0.0
  %520 = vmatprep.subr.mxu0 0.0
  %521 = vmatpush1.msra.mxu0 0.0
  %522 = vmatprep.subr.mxu0 0.0
  %523 = vmatpush1.msra.mxu0 0.0
  %524 = vmatprep.subr.mxu0 0.0
  %525 = vmatpush1.msra.mxu0 0.0
  %526 = vmatprep.subr.mxu0 0.0
  %527 = vmatpush1.msra.mxu0 0.0
  %528 = vmatprep.subr.mxu0 0.0
  %529 = vmatpush1.msra.mxu0 0.0
  %530 = vmatprep.subr.mxu0 0.0
  %531 = vmatpush1.msra.mxu0 0.0
  %532 = vmatprep.subr.mxu0 0.0
  %533 = vmatpush1.msra.mxu0 0.0
  %534 = vmatprep.subr.mxu0 0.0
  %535 = vmatpush1.msra.mxu0 0.0
  %536 = vmatprep.subr.mxu0 0.0
  %537 = vmatpush1.msra.mxu0 0.0
  %538 = vmatprep.subr.mxu0 0.0
  %539 = vmatpush1.msra.mxu0 0.0
  %540 = vmatprep.mubr.f32.mxu0 0.0
  %541 = vmatmul.mubr.f32.gmra.mrb[0].mxu0 %v438
  %v542 = vpop.f32.mrb[0].mxu0
  %v543 = vadd.f32 0.0, %v542
  %v544 = vpop.f32.mrb[0].mxu0
  %545 = vmatprep.mubr.f32.mxu0 0.0
  %546 = vmatmul.mubr.f32.gmra.mrb[0].mxu0 %v439
  %v547 = vpop.f32.mrb[0].mxu0
  %v548 = vadd.f32 0.0, %v547
  %v549 = vpop.f32.mrb[0].mxu0
  %550 = vmatprep.mubr.f32.mxu0 0.0
  %551 = vmatmul.mubr.f32.gmra.mrb[0].mxu0 %v440
  %v552 = vpop.f32.mrb[0].mxu0
  %v553 = vadd.f32 0.0, %v552
  %v554 = vpop.f32.mrb[0].mxu0
  %555 = vmatprep.mubr.f32.mxu0 0.0
  %556 = vmatmul.mubr.f32.gmra.mrb[0].mxu0 %v441
  %v557 = vpop.f32.mrb[0].mxu0
  %v558 = vadd.f32 0.0, %v557
  %v559 = vpop.f32.mrb[0].mxu0
  %560 = vmatprep.mubr.f32.mxu0 0.0
  %561 = vmatmul.mubr.f32.gmra.mrb[0].mxu0 %v442
  %v562 = vpop.f32.mrb[0].mxu0
  %v563 = vadd.f32 0.0, %v562
  %v564 = vpop.f32.mrb[0].mxu0
  %565 = vmatprep.mubr.f32.mxu0 0.0
  %566 = vmatmul.mubr.f32.gmra.mrb[0].mxu0 %v443
  %v567 = vpop.f32.mrb[0].mxu0
  %v568 = vadd.f32 0.0, %v567
  %v569 = vpop.f32.mrb[0].mxu0
  %570 = vmatprep.mubr.f32.mxu0 0.0
  %571 = vmatmul.mubr.f32.gmra.mrb[0].mxu0 %v444
  %v572 = vpop.f32.mrb[0].mxu0
  %v573 = vadd.f32 0.0, %v572
  %v574 = vpop.f32.mrb[0].mxu0
  %575 = vmatprep.mubr.f32.mxu0 0.0
  %576 = vmatmul.mubr.f32.gmra.mrb[0].mxu0 %v445
  %v577 = vpop.f32.mrb[0].mxu0
  %v578 = vadd.f32 0.0, %v577
  %v579 = vpop.f32.mrb[0].mxu0
  %580 = vmatprep.mubr.f32.mxu0 0.0
  %581 = vmatmul.mubr.f32.gmra.mrb[0].mxu0 %v446
  %v582 = vpop.f32.mrb[0].mxu0
  %v583 = vadd.f32 0.0, %v582
  %v584 = vpop.f32.mrb[0].mxu0
  %585 = vmatprep.mubr.f32.mxu0 0.0
  %586 = vmatmul.mubr.f32.gmra.mrb[0].mxu0 %v447
  %v587 = vpop.f32.mrb[0].mxu0
  %v588 = vadd.f32 0.0, %v587
  %v589 = vpop.f32.mrb[0].mxu0
  %590 = vmatprep.mubr.f32.mxu0 0.0
  %591 = vmatmul.mubr.f32.gmra.mrb[0].mxu0 %v448
  %v592 = vpop.f32.mrb[0].mxu0
  %v593 = vadd.f32 0.0, %v592
  %v594 = vpop.f32.mrb[0].mxu0
  %595 = vmatprep.mubr.f32.mxu0 0.0
  %596 = vmatmul.mubr.f32.gmra.mrb[0].mxu0 %v449
  %v597 = vpop.f32.mrb[0].mxu0
  %v598 = vadd.f32 0.0, %v597
  %v599 = vpop.f32.mrb[0].mxu0
  %600 = vmatprep.mubr.f32.mxu0 0.0
  %601 = vmatmul.mubr.f32.gmra.mrb[0].mxu0 %v450
  %v602 = vpop.f32.mrb[0].mxu0
  %v603 = vadd.f32 0.0, %v602
  %v604 = vpop.f32.mrb[0].mxu0
  %605 = vmatprep.mubr.f32.mxu0 0.0
  %606 = vmatmul.mubr.f32.gmra.mrb[0].mxu0 %v451
  %v607 = vpop.f32.mrb[0].mxu0
  %v608 = vadd.f32 0.0, %v607
  %v609 = vpop.f32.mrb[0].mxu0
  %610 = vmatprep.mubr.f32.mxu0 0.0
  %611 = vmatmul.mubr.f32.gmra.mrb[0].mxu0 %v452
  %v612 = vpop.f32.mrb[0].mxu0
  %v613 = vadd.f32 0.0, %v612
  %v614 = vpop.f32.mrb[0].mxu0
  %615 = vmatprep.mubr.f32.mxu0 0.0
  %616 = vmatmul.mubr.f32.gmra.mrb[0].mxu0 %v453
  %v617 = vpop.f32.mrb[0].mxu0
  %v618 = vadd.f32 0.0, %v617
  %v619 = vpop.f32.mrb[0].mxu0
  %620 = vmatprep.mubr.f32.mxu0 0.0
  %621 = vmatmul.mubr.f32.gmra.mrb[0].mxu0 %v454
  %v622 = vpop.f32.mrb[0].mxu0
  %v623 = vadd.f32 0.0, %v622
  %v624 = vpop.f32.mrb[0].mxu0
  %625 = vmatprep.mubr.f32.mxu0 0.0
  %626 = vmatmul.mubr.f32.gmra.mrb[0].mxu0 %v455
  %v627 = vpop.f32.mrb[0].mxu0
  %v628 = vadd.f32 0.0, %v627
  %v629 = vpop.f32.mrb[0].mxu0
  %630 = vmatprep.mubr.f32.mxu0 0.0
  %631 = vmatmul.mubr.f32.gmra.mrb[0].mxu0 %v456
  %v632 = vpop.f32.mrb[0].mxu0
  %v633 = vadd.f32 0.0, %v632
  %v634 = vpop.f32.mrb[0].mxu0
  %635 = vmatprep.mubr.f32.mxu0 0.0
  %636 = vmatmul.mubr.f32.gmra.mrb[0].mxu0 %v457
  %v637 = vpop.f32.mrb[0].mxu0
  %v638 = vadd.f32 0.0, %v637
  %v639 = vpop.f32.mrb[0].mxu0
  %640 = vmatprep.mubr.f32.mxu0 0.0
  %641 = vmatmul.mubr.f32.gmra.mrb[0].mxu0 %v458
  %v642 = vpop.f32.mrb[0].mxu0
  %v643 = vadd.f32 0.0, %v642
  %v644 = vpop.f32.mrb[0].mxu0
  %645 = vdwg.mxu0
  %v646 = vadd.f32 %v335, %v543
  %v647 = vadd.f32 %v340, %v548
  %v648 = vadd.f32 %v345, %v553
  %v649 = vadd.f32 %v350, %v558
  %v650 = vadd.f32 %v355, %v563
  %v651 = vadd.f32 %v360, %v568
  %v652 = vadd.f32 %v365, %v573
  %v653 = vadd.f32 %v370, %v578
  %v654 = vadd.f32 %v375, %v583
  %v655 = vadd.f32 %v380, %v588
  %v656 = vadd.f32 %v385, %v593
  %v657 = vadd.f32 %v390, %v598
  %v658 = vadd.f32 %v395, %v603
  %v659 = vadd.f32 %v400, %v608
  %v660 = vadd.f32 %v405, %v613
  %v661 = vadd.f32 %v410, %v618
  %v662 = vadd.f32 %v415, %v623
  %v663 = vadd.f32 %v420, %v628
  %v664 = vadd.f32 %v425, %v633
  %v665 = vadd.f32 %v430, %v638
  %v666 = vadd.f32 %v435, %v643
  %v667 = vld [vmem:[%s0 + $0xe] sm:$0xff]
  %v668 = vld [vmem:[%s0 + $0x16] sm:$0xff]
  %v669 = vld [vmem:[%s0 + $0x1e] sm:$0xff]
  %v670 = vld [vmem:[%s0 + $0x26] sm:$0xff]
  %v671 = vld [vmem:[%s0 + $0x2e] sm:$0xff]
  %v672 = vld [vmem:[%s0 + $0x36] sm:$0xff]
  %v673 = vld [vmem:[%s0 + $0x3e] sm:$0xff]
  %v674 = vld [vmem:[%s0 + $0x46] sm:$0xff]
  %v675 = vld [vmem:[%s0 + $0x4e] sm:$0xff]
  %v676 = vld [vmem:[%s0 + $0x56] sm:$0xff]
  %v677 = vld [vmem:[%s0 + $0x5e] sm:$0xff]
  %v678 = vld [vmem:[%s0 + $0x66] sm:$0xff]
  %v679 = vld [vmem:[%s0 + $0x6e] sm:$0xff]
  %v680 = vld [vmem:[%s0 + $0x76] sm:$0xff]
  %v681 = vld [vmem:[%s0 + $0x7e] sm:$0xff]
  %v682 = vld [vmem:[%s0 + $0x86] sm:$0xff]
  %v683 = vld [vmem:[%s0 + $0x8e] sm:$0xff]
  %v684 = vld [vmem:[%s0 + $0x96] sm:$0xff]
  %v685 = vld [vmem:[%s0 + $0x9e] sm:$0xff]
  %v686 = vld [vmem:[%s0 + $0xa6] sm:$0xff]
  %v687 = vld [vmem:[%s0 + $0xae] sm:$0xff]
  %s688 = scalar_lea.vmem %s1, 384
  %v689 = vld [vmem:[%s688] sm:$0xff]
  %v690 = vld [vmem:[%s688 + $0x8] sm:$0xff]
  %v691 = vld [vmem:[%s688 + $0x10] sm:$0xff]
  %v692 = vld [vmem:[%s688 + $0x18] sm:$0xff]
  %v693 = vld [vmem:[%s688 + $0x20] sm:$0xff]
  %v694 = vld [vmem:[%s688 + $0x28] sm:$0xff]
  %v695 = vld [vmem:[%s688 + $0x30] sm:$0xff]
  %v696 = vld [vmem:[%s688 + $0x38] sm:$0xff]
  %v697 = vld [vmem:[%s688 + $0x40] sm:$0xff]
  %v698 = vld [vmem:[%s688 + $0x48] sm:$0xff]
  %v699 = vld [vmem:[%s688 + $0x50] sm:$0xff]
  %v700 = vld [vmem:[%s688 + $0x58] sm:$0xff]
  %v701 = vld [vmem:[%s688 + $0x60] sm:$0xff]
  %v702 = vld [vmem:[%s688 + $0x68] sm:$0xff]
  %v703 = vld [vmem:[%s688 + $0x70] sm:$0xff]
  %v704 = vld [vmem:[%s688 + $0x78] sm:$0xff]
  %705 = vmatprep.subr.mxu0 0.0
  %706 = vmatpush1.msra.mxu0 %v689
  %707 = vmatprep.subr.mxu0 0.0
  %708 = vmatpush1.msra.mxu0 %v690
  %709 = vmatprep.subr.mxu0 0.0
  %710 = vmatpush1.msra.mxu0 %v691
  %711 = vmatprep.subr.mxu0 0.0
  %712 = vmatpush1.msra.mxu0 %v692
  %713 = vmatprep.subr.mxu0 0.0
  %714 = vmatpush1.msra.mxu0 %v693
  %715 = vmatprep.subr.mxu0 0.0
  %716 = vmatpush1.msra.mxu0 %v694
  %717 = vmatprep.subr.mxu0 0.0
  %718 = vmatpush1.msra.mxu0 %v695
  %719 = vmatprep.subr.mxu0 0.0
  %720 = vmatpush1.msra.mxu0 %v696
  %721 = vmatprep.subr.mxu0 0.0
  %722 = vmatpush1.msra.mxu0 %v697
  %723 = vmatprep.subr.mxu0 0.0
  %724 = vmatpush1.msra.mxu0 %v698
  %725 = vmatprep.subr.mxu0 0.0
  %726 = vmatpush1.msra.mxu0 %v699
  %727 = vmatprep.subr.mxu0 0.0
  %728 = vmatpush1.msra.mxu0 %v700
  %729 = vmatprep.subr.mxu0 0.0
  %730 = vmatpush1.msra.mxu0 %v701
  %731 = vmatprep.subr.mxu0 0.0
  %732 = vmatpush1.msra.mxu0 %v702
  %733 = vmatprep.subr.mxu0 0.0
  %734 = vmatpush1.msra.mxu0 %v703
  %735 = vmatprep.subr.mxu0 0.0
  %736 = vmatpush1.msra.mxu0 %v704
  %737 = vmatprep.subr.mxu0 0.0
  %738 = vmatpush1.msra.mxu0 0.0
  %739 = vmatprep.subr.mxu0 0.0
  %740 = vmatpush1.msra.mxu0 0.0
  %741 = vmatprep.subr.mxu0 0.0
  %742 = vmatpush1.msra.mxu0 0.0
  %743 = vmatprep.subr.mxu0 0.0
  %744 = vmatpush1.msra.mxu0 0.0
  %745 = vmatprep.subr.mxu0 0.0
  %746 = vmatpush1.msra.mxu0 0.0
  %747 = vmatprep.subr.mxu0 0.0
  %748 = vmatpush1.msra.mxu0 0.0
  %749 = vmatprep.subr.mxu0 0.0
  %750 = vmatpush1.msra.mxu0 0.0
  %751 = vmatprep.subr.mxu0 0.0
  %752 = vmatpush1.msra.mxu0 0.0
  %753 = vmatprep.subr.mxu0 0.0
  %754 = vmatpush1.msra.mxu0 0.0
  %755 = vmatprep.subr.mxu0 0.0
  %756 = vmatpush1.msra.mxu0 0.0
  %757 = vmatprep.subr.mxu0 0.0
  %758 = vmatpush1.msra.mxu0 0.0
  %759 = vmatprep.subr.mxu0 0.0
  %760 = vmatpush1.msra.mxu0 0.0
  %761 = vmatprep.subr.mxu0 0.0
  %762 = vmatpush1.msra.mxu0 0.0
  %763 = vmatprep.subr.mxu0 0.0
  %764 = vmatpush1.msra.mxu0 0.0
  %765 = vmatprep.subr.mxu0 0.0
  %766 = vmatpush1.msra.mxu0 0.0
  %767 = vmatprep.subr.mxu0 0.0
  %768 = vmatpush1.msra.mxu0 0.0
  %769 = vmatprep.mubr.f32.mxu0 0.0
  %770 = vmatmul.mubr.f32.gmra.mrb[0].mxu0 %v667
  %v771 = vpop.f32.mrb[0].mxu0
  %v772 = vadd.f32 0.0, %v771
  %v773 = vpop.f32.mrb[0].mxu0
  %774 = vmatprep.mubr.f32.mxu0 0.0
  %775 = vmatmul.mubr.f32.gmra.mrb[0].mxu0 %v668
  %v776 = vpop.f32.mrb[0].mxu0
  %v777 = vadd.f32 0.0, %v776
  %v778 = vpop.f32.mrb[0].mxu0
  %779 = vmatprep.mubr.f32.mxu0 0.0
  %780 = vmatmul.mubr.f32.gmra.mrb[0].mxu0 %v669
  %v781 = vpop.f32.mrb[0].mxu0
  %v782 = vadd.f32 0.0, %v781
  %v783 = vpop.f32.mrb[0].mxu0
  %784 = vmatprep.mubr.f32.mxu0 0.0
  %785 = vmatmul.mubr.f32.gmra.mrb[0].mxu0 %v670
  %v786 = vpop.f32.mrb[0].mxu0
  %v787 = vadd.f32 0.0, %v786
  %v788 = vpop.f32.mrb[0].mxu0
  %789 = vmatprep.mubr.f32.mxu0 0.0
  %790 = vmatmul.mubr.f32.gmra.mrb[0].mxu0 %v671
  %v791 = vpop.f32.mrb[0].mxu0
  %v792 = vadd.f32 0.0, %v791
  %v793 = vpop.f32.mrb[0].mxu0
  %794 = vmatprep.mubr.f32.mxu0 0.0
  %795 = vmatmul.mubr.f32.gmra.mrb[0].mxu0 %v672
  %v796 = vpop.f32.mrb[0].mxu0
  %v797 = vadd.f32 0.0, %v796
  %v798 = vpop.f32.mrb[0].mxu0
  %799 = vmatprep.mubr.f32.mxu0 0.0
  %800 = vmatmul.mubr.f32.gmra.mrb[0].mxu0 %v673
  %v801 = vpop.f32.mrb[0].mxu0
  %v802 = vadd.f32 0.0, %v801
  %v803 = vpop.f32.mrb[0].mxu0
  %804 = vmatprep.mubr.f32.mxu0 0.0
  %805 = vmatmul.mubr.f32.gmra.mrb[0].mxu0 %v674
  %v806 = vpop.f32.mrb[0].mxu0
  %v807 = vadd.f32 0.0, %v806
  %v808 = vpop.f32.mrb[0].mxu0
  %809 = vmatprep.mubr.f32.mxu0 0.0
  %810 = vmatmul.mubr.f32.gmra.mrb[0].mxu0 %v675
  %v811 = vpop.f32.mrb[0].mxu0
  %v812 = vadd.f32 0.0, %v811
  %v813 = vpop.f32.mrb[0].mxu0
  %814 = vmatprep.mubr.f32.mxu0 0.0
  %815 = vmatmul.mubr.f32.gmra.mrb[0].mxu0 %v676
  %v816 = vpop.f32.mrb[0].mxu0
  %v817 = vadd.f32 0.0, %v816
  %v818 = vpop.f32.mrb[0].mxu0
  %819 = vmatprep.mubr.f32.mxu0 0.0
  %820 = vmatmul.mubr.f32.gmra.mrb[0].mxu0 %v677
  %v821 = vpop.f32.mrb[0].mxu0
  %v822 = vadd.f32 0.0, %v821
  %v823 = vpop.f32.mrb[0].mxu0
  %824 = vmatprep.mubr.f32.mxu0 0.0
  %825 = vmatmul.mubr.f32.gmra.mrb[0].mxu0 %v678
  %v826 = vpop.f32.mrb[0].mxu0
  %v827 = vadd.f32 0.0, %v826
  %v828 = vpop.f32.mrb[0].mxu0
  %829 = vmatprep.mubr.f32.mxu0 0.0
  %830 = vmatmul.mubr.f32.gmra.mrb[0].mxu0 %v679
  %v831 = vpop.f32.mrb[0].mxu0
  %v832 = vadd.f32 0.0, %v831
  %v833 = vpop.f32.mrb[0].mxu0
  %834 = vmatprep.mubr.f32.mxu0 0.0
  %835 = vmatmul.mubr.f32.gmra.mrb[0].mxu0 %v680
  %v836 = vpop.f32.mrb[0].mxu0
  %v837 = vadd.f32 0.0, %v836
  %v838 = vpop.f32.mrb[0].mxu0
  %839 = vmatprep.mubr.f32.mxu0 0.0
  %840 = vmatmul.mubr.f32.gmra.mrb[0].mxu0 %v681
  %v841 = vpop.f32.mrb[0].mxu0
  %v842 = vadd.f32 0.0, %v841
  %v843 = vpop.f32.mrb[0].mxu0
  %844 = vmatprep.mubr.f32.mxu0 0.0
  %845 = vmatmul.mubr.f32.gmra.mrb[0].mxu0 %v682
  %v846 = vpop.f32.mrb[0].mxu0
  %v847 = vadd.f32 0.0, %v846
  %v848 = vpop.f32.mrb[0].mxu0
  %849 = vmatprep.mubr.f32.mxu0 0.0
  %850 = vmatmul.mubr.f32.gmra.mrb[0].mxu0 %v683
  %v851 = vpop.f32.mrb[0].mxu0
  %v852 = vadd.f32 0.0, %v851
  %v853 = vpop.f32.mrb[0].mxu0
  %854 = vmatprep.mubr.f32.mxu0 0.0
  %855 = vmatmul.mubr.f32.gmra.mrb[0].mxu0 %v684
  %v856 = vpop.f32.mrb[0].mxu0
  %v857 = vadd.f32 0.0, %v856
  %v858 = vpop.f32.mrb[0].mxu0
  %859 = vmatprep.mubr.f32.mxu0 0.0
  %860 = vmatmul.mubr.f32.gmra.mrb[0].mxu0 %v685
  %v861 = vpop.f32.mrb[0].mxu0
  %v862 = vadd.f32 0.0, %v861
  %v863 = vpop.f32.mrb[0].mxu0
  %864 = vmatprep.mubr.f32.mxu0 0.0
  %865 = vmatmul.mubr.f32.gmra.mrb[0].mxu0 %v686
  %v866 = vpop.f32.mrb[0].mxu0
  %v867 = vadd.f32 0.0, %v866
  %v868 = vpop.f32.mrb[0].mxu0
  %869 = vmatprep.mubr.f32.mxu0 0.0
  %870 = vmatmul.mubr.f32.gmra.mrb[0].mxu0 %v687
  %v871 = vpop.f32.mrb[0].mxu0
  %v872 = vadd.f32 0.0, %v871
  %v873 = vpop.f32.mrb[0].mxu0
  %874 = vdwg.mxu0
  %v875 = vadd.f32 %v646, %v772
  %v876 = vadd.f32 %v647, %v777
  %v877 = vadd.f32 %v648, %v782
  %v878 = vadd.f32 %v649, %v787
  %v879 = vadd.f32 %v650, %v792
  %v880 = vadd.f32 %v651, %v797
  %v881 = vadd.f32 %v652, %v802
  %v882 = vadd.f32 %v653, %v807
  %v883 = vadd.f32 %v654, %v812
  %v884 = vadd.f32 %v655, %v817
  %v885 = vadd.f32 %v656, %v822
  %v886 = vadd.f32 %v657, %v827
  %v887 = vadd.f32 %v658, %v832
  %v888 = vadd.f32 %v659, %v837
  %v889 = vadd.f32 %v660, %v842
  %v890 = vadd.f32 %v661, %v847
  %v891 = vadd.f32 %v662, %v852
  %v892 = vadd.f32 %v663, %v857
  %v893 = vadd.f32 %v664, %v862
  %v894 = vadd.f32 %v665, %v867
  %v895 = vadd.f32 %v666, %v872
  %v896 = vld [vmem:[%s0 + $0xf] sm:$0xff]
  %v897 = vld [vmem:[%s0 + $0x17] sm:$0xff]
  %v898 = vld [vmem:[%s0 + $0x1f] sm:$0xff]
  %v899 = vld [vmem:[%s0 + $0x27] sm:$0xff]
  %v900 = vld [vmem:[%s0 + $0x2f] sm:$0xff]
  %v901 = vld [vmem:[%s0 + $0x37] sm:$0xff]
  %v902 = vld [vmem:[%s0 + $0x3f] sm:$0xff]
  %v903 = vld [vmem:[%s0 + $0x47] sm:$0xff]
  %v904 = vld [vmem:[%s0 + $0x4f] sm:$0xff]
  %v905 = vld [vmem:[%s0 + $0x57] sm:$0xff]
  %v906 = vld [vmem:[%s0 + $0x5f] sm:$0xff]
  %v907 = vld [vmem:[%s0 + $0x67] sm:$0xff]
  %v908 = vld [vmem:[%s0 + $0x6f] sm:$0xff]
  %v909 = vld [vmem:[%s0 + $0x77] sm:$0xff]
  %v910 = vld [vmem:[%s0 + $0x7f] sm:$0xff]
  %v911 = vld [vmem:[%s0 + $0x87] sm:$0xff]
  %v912 = vld [vmem:[%s0 + $0x8f] sm:$0xff]
  %v913 = vld [vmem:[%s0 + $0x97] sm:$0xff]
  %v914 = vld [vmem:[%s0 + $0x9f] sm:$0xff]
  %v915 = vld [vmem:[%s0 + $0xa7] sm:$0xff]
  %v916 = vld [vmem:[%s0 + $0xaf] sm:$0xff]
  %s917 = scalar_lea.vmem %s1, 512
  %v918 = vld [vmem:[%s917] sm:$0xff]
  %v919 = vld [vmem:[%s917 + $0x8] sm:$0xff]
  %v920 = vld [vmem:[%s917 + $0x10] sm:$0xff]
  %v921 = vld [vmem:[%s917 + $0x18] sm:$0xff]
  %v922 = vld [vmem:[%s917 + $0x20] sm:$0xff]
  %v923 = vld [vmem:[%s917 + $0x28] sm:$0xff]
  %v924 = vld [vmem:[%s917 + $0x30] sm:$0xff]
  %v925 = vld [vmem:[%s917 + $0x38] sm:$0xff]
  %v926 = vld [vmem:[%s917 + $0x40] sm:$0xff]
  %v927 = vld [vmem:[%s917 + $0x48] sm:$0xff]
  %v928 = vld [vmem:[%s917 + $0x50] sm:$0xff]
  %v929 = vld [vmem:[%s917 + $0x58] sm:$0xff]
  %v930 = vld [vmem:[%s917 + $0x60] sm:$0xff]
  %v931 = vld [vmem:[%s917 + $0x68] sm:$0xff]
  %v932 = vld [vmem:[%s917 + $0x70] sm:$0xff]
  %v933 = vld [vmem:[%s917 + $0x78] sm:$0xff]
  %934 = vmatprep.subr.mxu0 0.0
  %935 = vmatpush1.msra.mxu0 %v918
  %936 = vmatprep.subr.mxu0 0.0
  %937 = vmatpush1.msra.mxu0 %v919
  %938 = vmatprep.subr.mxu0 0.0
  %939 = vmatpush1.msra.mxu0 %v920
  %940 = vmatprep.subr.mxu0 0.0
  %941 = vmatpush1.msra.mxu0 %v921
  %942 = vmatprep.subr.mxu0 0.0
  %943 = vmatpush1.msra.mxu0 %v922
  %944 = vmatprep.subr.mxu0 0.0
  %945 = vmatpush1.msra.mxu0 %v923
  %946 = vmatprep.subr.mxu0 0.0
  %947 = vmatpush1.msra.mxu0 %v924
  %948 = vmatprep.subr.mxu0 0.0
  %949 = vmatpush1.msra.mxu0 %v925
  %950 = vmatprep.subr.mxu0 0.0
  %951 = vmatpush1.msra.mxu0 %v926
  %952 = vmatprep.subr.mxu0 0.0
  %953 = vmatpush1.msra.mxu0 %v927
  %954 = vmatprep.subr.mxu0 0.0
  %955 = vmatpush1.msra.mxu0 %v928
  %956 = vmatprep.subr.mxu0 0.0
  %957 = vmatpush1.msra.mxu0 %v929
  %958 = vmatprep.subr.mxu0 0.0
  %959 = vmatpush1.msra.mxu0 %v930
  %960 = vmatprep.subr.mxu0 0.0
  %961 = vmatpush1.msra.mxu0 %v931
  %962 = vmatprep.subr.mxu0 0.0
  %963 = vmatpush1.msra.mxu0 %v932
  %964 = vmatprep.subr.mxu0 0.0
  %965 = vmatpush1.msra.mxu0 %v933
  %966 = vmatprep.subr.mxu0 0.0
  %967 = vmatpush1.msra.mxu0 0.0
  %968 = vmatprep.subr.mxu0 0.0
  %969 = vmatpush1.msra.mxu0 0.0
  %970 = vmatprep.subr.mxu0 0.0
  %971 = vmatpush1.msra.mxu0 0.0
  %972 = vmatprep.subr.mxu0 0.0
  %973 = vmatpush1.msra.mxu0 0.0
  %974 = vmatprep.subr.mxu0 0.0
  %975 = vmatpush1.msra.mxu0 0.0
  %976 = vmatprep.subr.mxu0 0.0
  %977 = vmatpush1.msra.mxu0 0.0
  %978 = vmatprep.subr.mxu0 0.0
  %979 = vmatpush1.msra.mxu0 0.0
  %980 = vmatprep.subr.mxu0 0.0
  %981 = vmatpush1.msra.mxu0 0.0
  %982 = vmatprep.subr.mxu0 0.0
  %983 = vmatpush1.msra.mxu0 0.0
  %984 = vmatprep.subr.mxu0 0.0
  %985 = vmatpush1.msra.mxu0 0.0
  %986 = vmatprep.subr.mxu0 0.0
  %987 = vmatpush1.msra.mxu0 0.0
  %988 = vmatprep.subr.mxu0 0.0
  %989 = vmatpush1.msra.mxu0 0.0
  %990 = vmatprep.subr.mxu0 0.0
  %991 = vmatpush1.msra.mxu0 0.0
  %992 = vmatprep.subr.mxu0 0.0
  %993 = vmatpush1.msra.mxu0 0.0
  %994 = vmatprep.subr.mxu0 0.0
  %995 = vmatpush1.msra.mxu0 0.0
  %996 = vmatprep.subr.mxu0 0.0
  %997 = vmatpush1.msra.mxu0 0.0
  %998 = vmatprep.mubr.f32.mxu0 0.0
  %999 = vmatmul.mubr.f32.gmra.mrb[0].mxu0 %v896
  %v1000 = vpop.f32.mrb[0].mxu0
  %v1001 = vadd.f32 0.0, %v1000
  %v1002 = vpop.f32.mrb[0].mxu0
  %1003 = vmatprep.mubr.f32.mxu0 0.0
  %1004 = vmatmul.mubr.f32.gmra.mrb[0].mxu0 %v897
  %v1005 = vpop.f32.mrb[0].mxu0
  %v1006 = vadd.f32 0.0, %v1005
  %v1007 = vpop.f32.mrb[0].mxu0
  %1008 = vmatprep.mubr.f32.mxu0 0.0
  %1009 = vmatmul.mubr.f32.gmra.mrb[0].mxu0 %v898
  %v1010 = vpop.f32.mrb[0].mxu0
  %v1011 = vadd.f32 0.0, %v1010
  %v1012 = vpop.f32.mrb[0].mxu0
  %1013 = vmatprep.mubr.f32.mxu0 0.0
  %1014 = vmatmul.mubr.f32.gmra.mrb[0].mxu0 %v899
  %v1015 = vpop.f32.mrb[0].mxu0
  %v1016 = vadd.f32 0.0, %v1015
  %v1017 = vpop.f32.mrb[0].mxu0
  %1018 = vmatprep.mubr.f32.mxu0 0.0
  %1019 = vmatmul.mubr.f32.gmra.mrb[0].mxu0 %v900
  %v1020 = vpop.f32.mrb[0].mxu0
  %v1021 = vadd.f32 0.0, %v1020
  %v1022 = vpop.f32.mrb[0].mxu0
  %1023 = vmatprep.mubr.f32.mxu0 0.0
  %1024 = vmatmul.mubr.f32.gmra.mrb[0].mxu0 %v901
  %v1025 = vpop.f32.mrb[0].mxu0
  %v1026 = vadd.f32 0.0, %v1025
  %v1027 = vpop.f32.mrb[0].mxu0
  %1028 = vmatprep.mubr.f32.mxu0 0.0
  %1029 = vmatmul.mubr.f32.gmra.mrb[0].mxu0 %v902
  %v1030 = vpop.f32.mrb[0].mxu0
  %v1031 = vadd.f32 0.0, %v1030
  %v1032 = vpop.f32.mrb[0].mxu0
  %1033 = vmatprep.mubr.f32.mxu0 0.0
  %1034 = vmatmul.mubr.f32.gmra.mrb[0].mxu0 %v903
  %v1035 = vpop.f32.mrb[0].mxu0
  %v1036 = vadd.f32 0.0, %v1035
  %v1037 = vpop.f32.mrb[0].mxu0
  %1038 = vmatprep.mubr.f32.mxu0 0.0
  %1039 = vmatmul.mubr.f32.gmra.mrb[0].mxu0 %v904
  %v1040 = vpop.f32.mrb[0].mxu0
  %v1041 = vadd.f32 0.0, %v1040
  %v1042 = vpop.f32.mrb[0].mxu0
  %1043 = vmatprep.mubr.f32.mxu0 0.0
  %1044 = vmatmul.mubr.f32.gmra.mrb[0].mxu0 %v905
  %v1045 = vpop.f32.mrb[0].mxu0
  %v1046 = vadd.f32 0.0, %v1045
  %v1047 = vpop.f32.mrb[0].mxu0
  %1048 = vmatprep.mubr.f32.mxu0 0.0
  %1049 = vmatmul.mubr.f32.gmra.mrb[0].mxu0 %v906
  %v1050 = vpop.f32.mrb[0].mxu0
  %v1051 = vadd.f32 0.0, %v1050
  %v1052 = vpop.f32.mrb[0].mxu0
  %1053 = vmatprep.mubr.f32.mxu0 0.0
  %1054 = vmatmul.mubr.f32.gmra.mrb[0].mxu0 %v907
  %v1055 = vpop.f32.mrb[0].mxu0
  %v1056 = vadd.f32 0.0, %v1055
  %v1057 = vpop.f32.mrb[0].mxu0
  %1058 = vmatprep.mubr.f32.mxu0 0.0
  %1059 = vmatmul.mubr.f32.gmra.mrb[0].mxu0 %v908
  %v1060 = vpop.f32.mrb[0].mxu0
  %v1061 = vadd.f32 0.0, %v1060
  %v1062 = vpop.f32.mrb[0].mxu0
  %1063 = vmatprep.mubr.f32.mxu0 0.0
  %1064 = vmatmul.mubr.f32.gmra.mrb[0].mxu0 %v909
  %v1065 = vpop.f32.mrb[0].mxu0
  %v1066 = vadd.f32 0.0, %v1065
  %v1067 = vpop.f32.mrb[0].mxu0
  %1068 = vmatprep.mubr.f32.mxu0 0.0
  %1069 = vmatmul.mubr.f32.gmra.mrb[0].mxu0 %v910
  %v1070 = vpop.f32.mrb[0].mxu0
  %v1071 = vadd.f32 0.0, %v1070
  %v1072 = vpop.f32.mrb[0].mxu0
  %1073 = vmatprep.mubr.f32.mxu0 0.0
  %1074 = vmatmul.mubr.f32.gmra.mrb[0].mxu0 %v911
  %v1075 = vpop.f32.mrb[0].mxu0
  %v1076 = vadd.f32 0.0, %v1075
  %v1077 = vpop.f32.mrb[0].mxu0
  %1078 = vmatprep.mubr.f32.mxu0 0.0
  %1079 = vmatmul.mubr.f32.gmra.mrb[0].mxu0 %v912
  %v1080 = vpop.f32.mrb[0].mxu0
  %v1081 = vadd.f32 0.0, %v1080
  %v1082 = vpop.f32.mrb[0].mxu0
  %1083 = vmatprep.mubr.f32.mxu0 0.0
  %1084 = vmatmul.mubr.f32.gmra.mrb[0].mxu0 %v913
  %v1085 = vpop.f32.mrb[0].mxu0
  %v1086 = vadd.f32 0.0, %v1085
  %v1087 = vpop.f32.mrb[0].mxu0
  %1088 = vmatprep.mubr.f32.mxu0 0.0
  %1089 = vmatmul.mubr.f32.gmra.mrb[0].mxu0 %v914
  %v1090 = vpop.f32.mrb[0].mxu0
  %v1091 = vadd.f32 0.0, %v1090
  %v1092 = vpop.f32.mrb[0].mxu0
  %1093 = vmatprep.mubr.f32.mxu0 0.0
  %1094 = vmatmul.mubr.f32.gmra.mrb[0].mxu0 %v915
  %v1095 = vpop.f32.mrb[0].mxu0
  %v1096 = vadd.f32 0.0, %v1095
  %v1097 = vpop.f32.mrb[0].mxu0
  %1098 = vmatprep.mubr.f32.mxu0 0.0
  %1099 = vmatmul.mubr.f32.gmra.mrb[0].mxu0 %v916
  %v1100 = vpop.f32.mrb[0].mxu0
  %v1101 = vadd.f32 0.0, %v1100
  %v1102 = vpop.f32.mrb[0].mxu0
  %1103 = vdwg.mxu0
  %v1104 = vadd.f32 %v875, %v1001
  %v1105 = vadd.f32 %v876, %v1006
  %v1106 = vadd.f32 %v877, %v1011
  %v1107 = vadd.f32 %v878, %v1016
  %v1108 = vadd.f32 %v879, %v1021
  %v1109 = vadd.f32 %v880, %v1026
  %v1110 = vadd.f32 %v881, %v1031
  %v1111 = vadd.f32 %v882, %v1036
  %v1112 = vadd.f32 %v883, %v1041
  %v1113 = vadd.f32 %v884, %v1046
  %v1114 = vadd.f32 %v885, %v1051
  %v1115 = vadd.f32 %v886, %v1056
  %v1116 = vadd.f32 %v887, %v1061
  %v1117 = vadd.f32 %v888, %v1066
  %v1118 = vadd.f32 %v889, %v1071
  %v1119 = vadd.f32 %v890, %v1076
  %v1120 = vadd.f32 %v891, %v1081
  %v1121 = vadd.f32 %v892, %v1086
  %v1122 = vadd.f32 %v893, %v1091
  %v1123 = vadd.f32 %v894, %v1096
  %v1124 = vadd.f32 %v895, %v1101
  %v1125 = vld [vmem:[%s0 + $0x10] sm:$0xff]
  %v1126 = vld [vmem:[%s0 + $0x18] sm:$0xff]
  %v1127 = vld [vmem:[%s0 + $0x20] sm:$0xff]
  %v1128 = vld [vmem:[%s0 + $0x28] sm:$0xff]
  %v1129 = vld [vmem:[%s0 + $0x30] sm:$0xff]
  %v1130 = vld [vmem:[%s0 + $0x38] sm:$0xff]
  %v1131 = vld [vmem:[%s0 + $0x40] sm:$0xff]
  %v1132 = vld [vmem:[%s0 + $0x48] sm:$0xff]
  %v1133 = vld [vmem:[%s0 + $0x50] sm:$0xff]
  %v1134 = vld [vmem:[%s0 + $0x58] sm:$0xff]
  %v1135 = vld [vmem:[%s0 + $0x60] sm:$0xff]
  %v1136 = vld [vmem:[%s0 + $0x68] sm:$0xff]
  %v1137 = vld [vmem:[%s0 + $0x70] sm:$0xff]
  %v1138 = vld [vmem:[%s0 + $0x78] sm:$0xff]
  %v1139 = vld [vmem:[%s0 + $0x80] sm:$0xff]
  %v1140 = vld [vmem:[%s0 + $0x88] sm:$0xff]
  %v1141 = vld [vmem:[%s0 + $0x90] sm:$0xff]
  %v1142 = vld [vmem:[%s0 + $0x98] sm:$0xff]
  %v1143 = vld [vmem:[%s0 + $0xa0] sm:$0xff]
  %v1144 = vld [vmem:[%s0 + $0xa8] sm:$0xff]
  %v1145 = vld [vmem:[%s0 + $0xb0] sm:$0xff]
  %s1146 = scalar_lea.vmem %s1, 640
  %v1147 = vld [vmem:[%s1146] sm:$0xff]
  %v1148 = vld [vmem:[%s1146 + $0x8] sm:$0xff]
  %v1149 = vld [vmem:[%s1146 + $0x10] sm:$0xff]
  %v1150 = vld [vmem:[%s1146 + $0x18] sm:$0xff]
  %v1151 = vld [vmem:[%s1146 + $0x20] sm:$0xff]
  %v1152 = vld [vmem:[%s1146 + $0x28] sm:$0xff]
  %v1153 = vld [vmem:[%s1146 + $0x30] sm:$0xff]
  %v1154 = vld [vmem:[%s1146 + $0x38] sm:$0xff]
  %v1155 = vld [vmem:[%s1146 + $0x40] sm:$0xff]
  %v1156 = vld [vmem:[%s1146 + $0x48] sm:$0xff]
  %v1157 = vld [vmem:[%s1146 + $0x50] sm:$0xff]
  %v1158 = vld [vmem:[%s1146 + $0x58] sm:$0xff]
  %v1159 = vld [vmem:[%s1146 + $0x60] sm:$0xff]
  %v1160 = vld [vmem:[%s1146 + $0x68] sm:$0xff]
  %v1161 = vld [vmem:[%s1146 + $0x70] sm:$0xff]
  %v1162 = vld [vmem:[%s1146 + $0x78] sm:$0xff]
  %1163 = vmatprep.subr.mxu0 0.0
  %1164 = vmatpush1.msra.mxu0 %v1147
  %1165 = vmatprep.subr.mxu0 0.0
  %1166 = vmatpush1.msra.mxu0 %v1148
  %1167 = vmatprep.subr.mxu0 0.0
  %1168 = vmatpush1.msra.mxu0 %v1149
  %1169 = vmatprep.subr.mxu0 0.0
  %1170 = vmatpush1.msra.mxu0 %v1150
  %1171 = vmatprep.subr.mxu0 0.0
  %1172 = vmatpush1.msra.mxu0 %v1151
  %1173 = vmatprep.subr.mxu0 0.0
  %1174 = vmatpush1.msra.mxu0 %v1152
  %1175 = vmatprep.subr.mxu0 0.0
  %1176 = vmatpush1.msra.mxu0 %v1153
  %1177 = vmatprep.subr.mxu0 0.0
  %1178 = vmatpush1.msra.mxu0 %v1154
  %1179 = vmatprep.subr.mxu0 0.0
  %1180 = vmatpush1.msra.mxu0 %v1155
  %1181 = vmatprep.subr.mxu0 0.0
  %1182 = vmatpush1.msra.mxu0 %v1156
  %1183 = vmatprep.subr.mxu0 0.0
  %1184 = vmatpush1.msra.mxu0 %v1157
  %1185 = vmatprep.subr.mxu0 0.0
  %1186 = vmatpush1.msra.mxu0 %v1158
  %1187 = vmatprep.subr.mxu0 0.0
  %1188 = vmatpush1.msra.mxu0 %v1159
  %1189 = vmatprep.subr.mxu0 0.0
  %1190 = vmatpush1.msra.mxu0 %v1160
  %1191 = vmatprep.subr.mxu0 0.0
  %1192 = vmatpush1.msra.mxu0 %v1161
  %1193 = vmatprep.subr.mxu0 0.0
  %1194 = vmatpush1.msra.mxu0 %v1162
  %1195 = vmatprep.subr.mxu0 0.0
  %1196 = vmatpush1.msra.mxu0 0.0
  %1197 = vmatprep.subr.mxu0 0.0
  %1198 = vmatpush1.msra.mxu0 0.0
  %1199 = vmatprep.subr.mxu0 0.0
  %1200 = vmatpush1.msra.mxu0 0.0
  %1201 = vmatprep.subr.mxu0 0.0
  %1202 = vmatpush1.msra.mxu0 0.0
  %1203 = vmatprep.subr.mxu0 0.0
  %1204 = vmatpush1.msra.mxu0 0.0
  %1205 = vmatprep.subr.mxu0 0.0
  %1206 = vmatpush1.msra.mxu0 0.0
  %1207 = vmatprep.subr.mxu0 0.0
  %1208 = vmatpush1.msra.mxu0 0.0
  %1209 = vmatprep.subr.mxu0 0.0
  %1210 = vmatpush1.msra.mxu0 0.0
  %1211 = vmatprep.subr.mxu0 0.0
  %1212 = vmatpush1.msra.mxu0 0.0
  %1213 = vmatprep.subr.mxu0 0.0
  %1214 = vmatpush1.msra.mxu0 0.0
  %1215 = vmatprep.subr.mxu0 0.0
  %1216 = vmatpush1.msra.mxu0 0.0
  %1217 = vmatprep.subr.mxu0 0.0
  %1218 = vmatpush1.msra.mxu0 0.0
  %1219 = vmatprep.subr.mxu0 0.0
  %1220 = vmatpush1.msra.mxu0 0.0
  %1221 = vmatprep.subr.mxu0 0.0
  %1222 = vmatpush1.msra.mxu0 0.0
  %1223 = vmatprep.subr.mxu0 0.0
  %1224 = vmatpush1.msra.mxu0 0.0
  %1225 = vmatprep.subr.mxu0 0.0
  %1226 = vmatpush1.msra.mxu0 0.0
  %1227 = vmatprep.mubr.f32.mxu0 0.0
  %1228 = vmatmul.mubr.f32.gmra.mrb[0].mxu0 %v1125
  %v1229 = vpop.f32.mrb[0].mxu0
  %v1230 = vadd.f32 0.0, %v1229
  %v1231 = vpop.f32.mrb[0].mxu0
  %1232 = vmatprep.mubr.f32.mxu0 0.0
  %1233 = vmatmul.mubr.f32.gmra.mrb[0].mxu0 %v1126
  %v1234 = vpop.f32.mrb[0].mxu0
  %v1235 = vadd.f32 0.0, %v1234
  %v1236 = vpop.f32.mrb[0].mxu0
  %1237 = vmatprep.mubr.f32.mxu0 0.0
  %1238 = vmatmul.mubr.f32.gmra.mrb[0].mxu0 %v1127
  %v1239 = vpop.f32.mrb[0].mxu0
  %v1240 = vadd.f32 0.0, %v1239
  %v1241 = vpop.f32.mrb[0].mxu0
  %1242 = vmatprep.mubr.f32.mxu0 0.0
  %1243 = vmatmul.mubr.f32.gmra.mrb[0].mxu0 %v1128
  %v1244 = vpop.f32.mrb[0].mxu0
  %v1245 = vadd.f32 0.0, %v1244
  %v1246 = vpop.f32.mrb[0].mxu0
  %1247 = vmatprep.mubr.f32.mxu0 0.0
  %1248 = vmatmul.mubr.f32.gmra.mrb[0].mxu0 %v1129
  %v1249 = vpop.f32.mrb[0].mxu0
  %v1250 = vadd.f32 0.0, %v1249
  %v1251 = vpop.f32.mrb[0].mxu0
  %1252 = vmatprep.mubr.f32.mxu0 0.0
  %1253 = vmatmul.mubr.f32.gmra.mrb[0].mxu0 %v1130
  %v1254 = vpop.f32.mrb[0].mxu0
  %v1255 = vadd.f32 0.0, %v1254
  %v1256 = vpop.f32.mrb[0].mxu0
  %1257 = vmatprep.mubr.f32.mxu0 0.0
  %1258 = vmatmul.mubr.f32.gmra.mrb[0].mxu0 %v1131
  %v1259 = vpop.f32.mrb[0].mxu0
  %v1260 = vadd.f32 0.0, %v1259
  %v1261 = vpop.f32.mrb[0].mxu0
  %1262 = vmatprep.mubr.f32.mxu0 0.0
  %1263 = vmatmul.mubr.f32.gmra.mrb[0].mxu0 %v1132
  %v1264 = vpop.f32.mrb[0].mxu0
  %v1265 = vadd.f32 0.0, %v1264
  %v1266 = vpop.f32.mrb[0].mxu0
  %1267 = vmatprep.mubr.f32.mxu0 0.0
  %1268 = vmatmul.mubr.f32.gmra.mrb[0].mxu0 %v1133
  %v1269 = vpop.f32.mrb[0].mxu0
  %v1270 = vadd.f32 0.0, %v1269
  %v1271 = vpop.f32.mrb[0].mxu0
  %1272 = vmatprep.mubr.f32.mxu0 0.0
  %1273 = vmatmul.mubr.f32.gmra.mrb[0].mxu0 %v1134
  %v1274 = vpop.f32.mrb[0].mxu0
  %v1275 = vadd.f32 0.0, %v1274
  %v1276 = vpop.f32.mrb[0].mxu0
  %1277 = vmatprep.mubr.f32.mxu0 0.0
  %1278 = vmatmul.mubr.f32.gmra.mrb[0].mxu0 %v1135
  %v1279 = vpop.f32.mrb[0].mxu0
  %v1280 = vadd.f32 0.0, %v1279
  %v1281 = vpop.f32.mrb[0].mxu0
  %1282 = vmatprep.mubr.f32.mxu0 0.0
  %1283 = vmatmul.mubr.f32.gmra.mrb[0].mxu0 %v1136
  %v1284 = vpop.f32.mrb[0].mxu0
  %v1285 = vadd.f32 0.0, %v1284
  %v1286 = vpop.f32.mrb[0].mxu0
  %1287 = vmatprep.mubr.f32.mxu0 0.0
  %1288 = vmatmul.mubr.f32.gmra.mrb[0].mxu0 %v1137
  %v1289 = vpop.f32.mrb[0].mxu0
  %v1290 = vadd.f32 0.0, %v1289
  %v1291 = vpop.f32.mrb[0].mxu0
  %1292 = vmatprep.mubr.f32.mxu0 0.0
  %1293 = vmatmul.mubr.f32.gmra.mrb[0].mxu0 %v1138
  %v1294 = vpop.f32.mrb[0].mxu0
  %v1295 = vadd.f32 0.0, %v1294
  %v1296 = vpop.f32.mrb[0].mxu0
  %1297 = vmatprep.mubr.f32.mxu0 0.0
  %1298 = vmatmul.mubr.f32.gmra.mrb[0].mxu0 %v1139
  %v1299 = vpop.f32.mrb[0].mxu0
  %v1300 = vadd.f32 0.0, %v1299
  %v1301 = vpop.f32.mrb[0].mxu0
  %1302 = vmatprep.mubr.f32.mxu0 0.0
  %1303 = vmatmul.mubr.f32.gmra.mrb[0].mxu0 %v1140
  %v1304 = vpop.f32.mrb[0].mxu0
  %v1305 = vadd.f32 0.0, %v1304
  %v1306 = vpop.f32.mrb[0].mxu0
  %1307 = vmatprep.mubr.f32.mxu0 0.0
  %1308 = vmatmul.mubr.f32.gmra.mrb[0].mxu0 %v1141
  %v1309 = vpop.f32.mrb[0].mxu0
  %v1310 = vadd.f32 0.0, %v1309
  %v1311 = vpop.f32.mrb[0].mxu0
  %1312 = vmatprep.mubr.f32.mxu0 0.0
  %1313 = vmatmul.mubr.f32.gmra.mrb[0].mxu0 %v1142
  %v1314 = vpop.f32.mrb[0].mxu0
  %v1315 = vadd.f32 0.0, %v1314
  %v1316 = vpop.f32.mrb[0].mxu0
  %1317 = vmatprep.mubr.f32.mxu0 0.0
  %1318 = vmatmul.mubr.f32.gmra.mrb[0].mxu0 %v1143
  %v1319 = vpop.f32.mrb[0].mxu0
  %v1320 = vadd.f32 0.0, %v1319
  %v1321 = vpop.f32.mrb[0].mxu0
  %1322 = vmatprep.mubr.f32.mxu0 0.0
  %1323 = vmatmul.mubr.f32.gmra.mrb[0].mxu0 %v1144
  %v1324 = vpop.f32.mrb[0].mxu0
  %v1325 = vadd.f32 0.0, %v1324
  %v1326 = vpop.f32.mrb[0].mxu0
  %1327 = vmatprep.mubr.f32.mxu0 0.0
  %1328 = vmatmul.mubr.f32.gmra.mrb[0].mxu0 %v1145
  %v1329 = vpop.f32.mrb[0].mxu0
  %v1330 = vadd.f32 0.0, %v1329
  %v1331 = vpop.f32.mrb[0].mxu0
  %1332 = vdwg.mxu0
  %v1333 = vadd.f32 %v1104, %v1230
  %v1334 = vadd.f32 %v1105, %v1235
  %v1335 = vadd.f32 %v1106, %v1240
  %v1336 = vadd.f32 %v1107, %v1245
  %v1337 = vadd.f32 %v1108, %v1250
  %v1338 = vadd.f32 %v1109, %v1255
  %v1339 = vadd.f32 %v1110, %v1260
  %v1340 = vadd.f32 %v1111, %v1265
  %v1341 = vadd.f32 %v1112, %v1270
  %v1342 = vadd.f32 %v1113, %v1275
  %v1343 = vadd.f32 %v1114, %v1280
  %v1344 = vadd.f32 %v1115, %v1285
  %v1345 = vadd.f32 %v1116, %v1290
  %v1346 = vadd.f32 %v1117, %v1295
  %v1347 = vadd.f32 %v1118, %v1300
  %v1348 = vadd.f32 %v1119, %v1305
  %v1349 = vadd.f32 %v1120, %v1310
  %v1350 = vadd.f32 %v1121, %v1315
  %v1351 = vadd.f32 %v1122, %v1320
  %v1352 = vadd.f32 %v1123, %v1325
  %v1353 = vadd.f32 %v1124, %v1330
  %v1354 = vld [vmem:[%s0 + $0x1c] sm:$0xff]
  %v1355 = vld [vmem:[%s0 + $0x24] sm:$0xff]
  %v1356 = vld [vmem:[%s0 + $0x2c] sm:$0xff]
  %v1357 = vld [vmem:[%s0 + $0x34] sm:$0xff]
  %v1358 = vld [vmem:[%s0 + $0x3c] sm:$0xff]
  %v1359 = vld [vmem:[%s0 + $0x44] sm:$0xff]
  %v1360 = vld [vmem:[%s0 + $0x4c] sm:$0xff]
  %v1361 = vld [vmem:[%s0 + $0x54] sm:$0xff]
  %v1362 = vld [vmem:[%s0 + $0x5c] sm:$0xff]
  %v1363 = vld [vmem:[%s0 + $0x64] sm:$0xff]
  %v1364 = vld [vmem:[%s0 + $0x6c] sm:$0xff]
  %v1365 = vld [vmem:[%s0 + $0x74] sm:$0xff]
  %v1366 = vld [vmem:[%s0 + $0x7c] sm:$0xff]
  %v1367 = vld [vmem:[%s0 + $0x84] sm:$0xff]
  %v1368 = vld [vmem:[%s0 + $0x8c] sm:$0xff]
  %v1369 = vld [vmem:[%s0 + $0x94] sm:$0xff]
  %v1370 = vld [vmem:[%s0 + $0x9c] sm:$0xff]
  %v1371 = vld [vmem:[%s0 + $0xa4] sm:$0xff]
  %v1372 = vld [vmem:[%s0 + $0xac] sm:$0xff]
  %v1373 = vld [vmem:[%s0 + $0xb4] sm:$0xff]
  %v1374 = vld [vmem:[%s0 + $0xbc] sm:$0xff]
  %s1375 = scalar_lea.vmem %s1, 768
  %v1376 = vld [vmem:[%s1375] sm:$0xff]
  %v1377 = vld [vmem:[%s1375 + $0x8] sm:$0xff]
  %v1378 = vld [vmem:[%s1375 + $0x10] sm:$0xff]
  %v1379 = vld [vmem:[%s1375 + $0x18] sm:$0xff]
  %v1380 = vld [vmem:[%s1375 + $0x20] sm:$0xff]
  %v1381 = vld [vmem:[%s1375 + $0x28] sm:$0xff]
  %v1382 = vld [vmem:[%s1375 + $0x30] sm:$0xff]
  %v1383 = vld [vmem:[%s1375 + $0x38] sm:$0xff]
  %v1384 = vld [vmem:[%s1375 + $0x40] sm:$0xff]
  %v1385 = vld [vmem:[%s1375 + $0x48] sm:$0xff]
  %v1386 = vld [vmem:[%s1375 + $0x50] sm:$0xff]
  %v1387 = vld [vmem:[%s1375 + $0x58] sm:$0xff]
  %v1388 = vld [vmem:[%s1375 + $0x60] sm:$0xff]
  %v1389 = vld [vmem:[%s1375 + $0x68] sm:$0xff]
  %v1390 = vld [vmem:[%s1375 + $0x70] sm:$0xff]
  %v1391 = vld [vmem:[%s1375 + $0x78] sm:$0xff]
  %1392 = vmatprep.subr.mxu0 0.0
  %1393 = vmatpush1.msra.mxu0 %v1376
  %1394 = vmatprep.subr.mxu0 0.0
  %1395 = vmatpush1.msra.mxu0 %v1377
  %1396 = vmatprep.subr.mxu0 0.0
  %1397 = vmatpush1.msra.mxu0 %v1378
  %1398 = vmatprep.subr.mxu0 0.0
  %1399 = vmatpush1.msra.mxu0 %v1379
  %1400 = vmatprep.subr.mxu0 0.0
  %1401 = vmatpush1.msra.mxu0 %v1380
  %1402 = vmatprep.subr.mxu0 0.0
  %1403 = vmatpush1.msra.mxu0 %v1381
  %1404 = vmatprep.subr.mxu0 0.0
  %1405 = vmatpush1.msra.mxu0 %v1382
  %1406 = vmatprep.subr.mxu0 0.0
  %1407 = vmatpush1.msra.mxu0 %v1383
  %1408 = vmatprep.subr.mxu0 0.0
  %1409 = vmatpush1.msra.mxu0 %v1384
  %1410 = vmatprep.subr.mxu0 0.0
  %1411 = vmatpush1.msra.mxu0 %v1385
  %1412 = vmatprep.subr.mxu0 0.0
  %1413 = vmatpush1.msra.mxu0 %v1386
  %1414 = vmatprep.subr.mxu0 0.0
  %1415 = vmatpush1.msra.mxu0 %v1387
  %1416 = vmatprep.subr.mxu0 0.0
  %1417 = vmatpush1.msra.mxu0 %v1388
  %1418 = vmatprep.subr.mxu0 0.0
  %1419 = vmatpush1.msra.mxu0 %v1389
  %1420 = vmatprep.subr.mxu0 0.0
  %1421 = vmatpush1.msra.mxu0 %v1390
  %1422 = vmatprep.subr.mxu0 0.0
  %1423 = vmatpush1.msra.mxu0 %v1391
  %1424 = vmatprep.subr.mxu0 0.0
  %1425 = vmatpush1.msra.mxu0 0.0
  %1426 = vmatprep.subr.mxu0 0.0
  %1427 = vmatpush1.msra.mxu0 0.0
  %1428 = vmatprep.subr.mxu0 0.0
  %1429 = vmatpush1.msra.mxu0 0.0
  %1430 = vmatprep.subr.mxu0 0.0
  %1431 = vmatpush1.msra.mxu0 0.0
  %1432 = vmatprep.subr.mxu0 0.0
  %1433 = vmatpush1.msra.mxu0 0.0
  %1434 = vmatprep.subr.mxu0 0.0
  %1435 = vmatpush1.msra.mxu0 0.0
  %1436 = vmatprep.subr.mxu0 0.0
  %1437 = vmatpush1.msra.mxu0 0.0
  %1438 = vmatprep.subr.mxu0 0.0
  %1439 = vmatpush1.msra.mxu0 0.0
  %1440 = vmatprep.subr.mxu0 0.0
  %1441 = vmatpush1.msra.mxu0 0.0
  %1442 = vmatprep.subr.mxu0 0.0
  %1443 = vmatpush1.msra.mxu0 0.0
  %1444 = vmatprep.subr.mxu0 0.0
  %1445 = vmatpush1.msra.mxu0 0.0
  %1446 = vmatprep.subr.mxu0 0.0
  %1447 = vmatpush1.msra.mxu0 0.0
  %1448 = vmatprep.subr.mxu0 0.0
  %1449 = vmatpush1.msra.mxu0 0.0
  %1450 = vmatprep.subr.mxu0 0.0
  %1451 = vmatpush1.msra.mxu0 0.0
  %1452 = vmatprep.subr.mxu0 0.0
  %1453 = vmatpush1.msra.mxu0 0.0
  %1454 = vmatprep.subr.mxu0 0.0
  %1455 = vmatpush1.msra.mxu0 0.0
  %1456 = vmatprep.mubr.f32.mxu0 0.0
  %1457 = vmatmul.mubr.f32.gmra.mrb[0].mxu0 %v1354
  %v1458 = vpop.f32.mrb[0].mxu0
  %v1459 = vadd.f32 0.0, %v1458
  %v1460 = vpop.f32.mrb[0].mxu0
  %1461 = vmatprep.mubr.f32.mxu0 0.0
  %1462 = vmatmul.mubr.f32.gmra.mrb[0].mxu0 %v1355
  %v1463 = vpop.f32.mrb[0].mxu0
  %v1464 = vadd.f32 0.0, %v1463
  %v1465 = vpop.f32.mrb[0].mxu0
  %1466 = vmatprep.mubr.f32.mxu0 0.0
  %1467 = vmatmul.mubr.f32.gmra.mrb[0].mxu0 %v1356
  %v1468 = vpop.f32.mrb[0].mxu0
  %v1469 = vadd.f32 0.0, %v1468
  %v1470 = vpop.f32.mrb[0].mxu0
  %1471 = vmatprep.mubr.f32.mxu0 0.0
  %1472 = vmatmul.mubr.f32.gmra.mrb[0].mxu0 %v1357
  %v1473 = vpop.f32.mrb[0].mxu0
  %v1474 = vadd.f32 0.0, %v1473
  %v1475 = vpop.f32.mrb[0].mxu0
  %1476 = vmatprep.mubr.f32.mxu0 0.0
  %1477 = vmatmul.mubr.f32.gmra.mrb[0].mxu0 %v1358
  %v1478 = vpop.f32.mrb[0].mxu0
  %v1479 = vadd.f32 0.0, %v1478
  %v1480 = vpop.f32.mrb[0].mxu0
  %1481 = vmatprep.mubr.f32.mxu0 0.0
  %1482 = vmatmul.mubr.f32.gmra.mrb[0].mxu0 %v1359
  %v1483 = vpop.f32.mrb[0].mxu0
  %v1484 = vadd.f32 0.0, %v1483
  %v1485 = vpop.f32.mrb[0].mxu0
  %1486 = vmatprep.mubr.f32.mxu0 0.0
  %1487 = vmatmul.mubr.f32.gmra.mrb[0].mxu0 %v1360
  %v1488 = vpop.f32.mrb[0].mxu0
  %v1489 = vadd.f32 0.0, %v1488
  %v1490 = vpop.f32.mrb[0].mxu0
  %1491 = vmatprep.mubr.f32.mxu0 0.0
  %1492 = vmatmul.mubr.f32.gmra.mrb[0].mxu0 %v1361
  %v1493 = vpop.f32.mrb[0].mxu0
  %v1494 = vadd.f32 0.0, %v1493
  %v1495 = vpop.f32.mrb[0].mxu0
  %1496 = vmatprep.mubr.f32.mxu0 0.0
  %1497 = vmatmul.mubr.f32.gmra.mrb[0].mxu0 %v1362
  %v1498 = vpop.f32.mrb[0].mxu0
  %v1499 = vadd.f32 0.0, %v1498
  %v1500 = vpop.f32.mrb[0].mxu0
  %1501 = vmatprep.mubr.f32.mxu0 0.0
  %1502 = vmatmul.mubr.f32.gmra.mrb[0].mxu0 %v1363
  %v1503 = vpop.f32.mrb[0].mxu0
  %v1504 = vadd.f32 0.0, %v1503
  %v1505 = vpop.f32.mrb[0].mxu0
  %1506 = vmatprep.mubr.f32.mxu0 0.0
  %1507 = vmatmul.mubr.f32.gmra.mrb[0].mxu0 %v1364
  %v1508 = vpop.f32.mrb[0].mxu0
  %v1509 = vadd.f32 0.0, %v1508
  %v1510 = vpop.f32.mrb[0].mxu0
  %1511 = vmatprep.mubr.f32.mxu0 0.0
  %1512 = vmatmul.mubr.f32.gmra.mrb[0].mxu0 %v1365
  %v1513 = vpop.f32.mrb[0].mxu0
  %v1514 = vadd.f32 0.0, %v1513
  %v1515 = vpop.f32.mrb[0].mxu0
  %1516 = vmatprep.mubr.f32.mxu0 0.0
  %1517 = vmatmul.mubr.f32.gmra.mrb[0].mxu0 %v1366
  %v1518 = vpop.f32.mrb[0].mxu0
  %v1519 = vadd.f32 0.0, %v1518
  %v1520 = vpop.f32.mrb[0].mxu0
  %1521 = vmatprep.mubr.f32.mxu0 0.0
  %1522 = vmatmul.mubr.f32.gmra.mrb[0].mxu0 %v1367
  %v1523 = vpop.f32.mrb[0].mxu0
  %v1524 = vadd.f32 0.0, %v1523
  %v1525 = vpop.f32.mrb[0].mxu0
  %1526 = vmatprep.mubr.f32.mxu0 0.0
  %1527 = vmatmul.mubr.f32.gmra.mrb[0].mxu0 %v1368
  %v1528 = vpop.f32.mrb[0].mxu0
  %v1529 = vadd.f32 0.0, %v1528
  %v1530 = vpop.f32.mrb[0].mxu0
  %1531 = vmatprep.mubr.f32.mxu0 0.0
  %1532 = vmatmul.mubr.f32.gmra.mrb[0].mxu0 %v1369
  %v1533 = vpop.f32.mrb[0].mxu0
  %v1534 = vadd.f32 0.0, %v1533
  %v1535 = vpop.f32.mrb[0].mxu0
  %1536 = vmatprep.mubr.f32.mxu0 0.0
  %1537 = vmatmul.mubr.f32.gmra.mrb[0].mxu0 %v1370
  %v1538 = vpop.f32.mrb[0].mxu0
  %v1539 = vadd.f32 0.0, %v1538
  %v1540 = vpop.f32.mrb[0].mxu0
  %1541 = vmatprep.mubr.f32.mxu0 0.0
  %1542 = vmatmul.mubr.f32.gmra.mrb[0].mxu0 %v1371
  %v1543 = vpop.f32.mrb[0].mxu0
  %v1544 = vadd.f32 0.0, %v1543
  %v1545 = vpop.f32.mrb[0].mxu0
  %1546 = vmatprep.mubr.f32.mxu0 0.0
  %1547 = vmatmul.mubr.f32.gmra.mrb[0].mxu0 %v1372
  %v1548 = vpop.f32.mrb[0].mxu0
  %v1549 = vadd.f32 0.0, %v1548
  %v1550 = vpop.f32.mrb[0].mxu0
  %1551 = vmatprep.mubr.f32.mxu0 0.0
  %1552 = vmatmul.mubr.f32.gmra.mrb[0].mxu0 %v1373
  %v1553 = vpop.f32.mrb[0].mxu0
  %v1554 = vadd.f32 0.0, %v1553
  %v1555 = vpop.f32.mrb[0].mxu0
  %1556 = vmatprep.mubr.f32.mxu0 0.0
  %1557 = vmatmul.mubr.f32.gmra.mrb[0].mxu0 %v1374
  %v1558 = vpop.f32.mrb[0].mxu0
  %v1559 = vadd.f32 0.0, %v1558
  %v1560 = vpop.f32.mrb[0].mxu0
  %1561 = vdwg.mxu0
  %v1562 = vadd.f32 %v1333, %v1459
  %v1563 = vadd.f32 %v1334, %v1464
  %v1564 = vadd.f32 %v1335, %v1469
  %v1565 = vadd.f32 %v1336, %v1474
  %v1566 = vadd.f32 %v1337, %v1479
  %v1567 = vadd.f32 %v1338, %v1484
  %v1568 = vadd.f32 %v1339, %v1489
  %v1569 = vadd.f32 %v1340, %v1494
  %v1570 = vadd.f32 %v1341, %v1499
  %v1571 = vadd.f32 %v1342, %v1504
  %v1572 = vadd.f32 %v1343, %v1509
  %v1573 = vadd.f32 %v1344, %v1514
  %v1574 = vadd.f32 %v1345, %v1519
  %v1575 = vadd.f32 %v1346, %v1524
  %v1576 = vadd.f32 %v1347, %v1529
  %v1577 = vadd.f32 %v1348, %v1534
  %v1578 = vadd.f32 %v1349, %v1539
  %v1579 = vadd.f32 %v1350, %v1544
  %v1580 = vadd.f32 %v1351, %v1549
  %v1581 = vadd.f32 %v1352, %v1554
  %v1582 = vadd.f32 %v1353, %v1559
  %v1583 = vld [vmem:[%s0 + $0x1d] sm:$0xff]
  %v1584 = vld [vmem:[%s0 + $0x25] sm:$0xff]
  %v1585 = vld [vmem:[%s0 + $0x2d] sm:$0xff]
  %v1586 = vld [vmem:[%s0 + $0x35] sm:$0xff]
  %v1587 = vld [vmem:[%s0 + $0x3d] sm:$0xff]
  %v1588 = vld [vmem:[%s0 + $0x45] sm:$0xff]
  %v1589 = vld [vmem:[%s0 + $0x4d] sm:$0xff]
  %v1590 = vld [vmem:[%s0 + $0x55] sm:$0xff]
  %v1591 = vld [vmem:[%s0 + $0x5d] sm:$0xff]
  %v1592 = vld [vmem:[%s0 + $0x65] sm:$0xff]
  %v1593 = vld [vmem:[%s0 + $0x6d] sm:$0xff]
  %v1594 = vld [vmem:[%s0 + $0x75] sm:$0xff]
  %v1595 = vld [vmem:[%s0 + $0x7d] sm:$0xff]
  %v1596 = vld [vmem:[%s0 + $0x85] sm:$0xff]
  %v1597 = vld [vmem:[%s0 + $0x8d] sm:$0xff]
  %v1598 = vld [vmem:[%s0 + $0x95] sm:$0xff]
  %v1599 = vld [vmem:[%s0 + $0x9d] sm:$0xff]
  %v1600 = vld [vmem:[%s0 + $0xa5] sm:$0xff]
  %v1601 = vld [vmem:[%s0 + $0xad] sm:$0xff]
  %v1602 = vld [vmem:[%s0 + $0xb5] sm:$0xff]
  %v1603 = vld [vmem:[%s0 + $0xbd] sm:$0xff]
  %s1604 = scalar_lea.vmem %s1, 896
  %v1605 = vld [vmem:[%s1604] sm:$0xff]
  %v1606 = vld [vmem:[%s1604 + $0x8] sm:$0xff]
  %v1607 = vld [vmem:[%s1604 + $0x10] sm:$0xff]
  %v1608 = vld [vmem:[%s1604 + $0x18] sm:$0xff]
  %v1609 = vld [vmem:[%s1604 + $0x20] sm:$0xff]
  %v1610 = vld [vmem:[%s1604 + $0x28] sm:$0xff]
  %v1611 = vld [vmem:[%s1604 + $0x30] sm:$0xff]
  %v1612 = vld [vmem:[%s1604 + $0x38] sm:$0xff]
  %v1613 = vld [vmem:[%s1604 + $0x40] sm:$0xff]
  %v1614 = vld [vmem:[%s1604 + $0x48] sm:$0xff]
  %v1615 = vld [vmem:[%s1604 + $0x50] sm:$0xff]
  %v1616 = vld [vmem:[%s1604 + $0x58] sm:$0xff]
  %v1617 = vld [vmem:[%s1604 + $0x60] sm:$0xff]
  %v1618 = vld [vmem:[%s1604 + $0x68] sm:$0xff]
  %v1619 = vld [vmem:[%s1604 + $0x70] sm:$0xff]
  %v1620 = vld [vmem:[%s1604 + $0x78] sm:$0xff]
  %1621 = vmatprep.subr.mxu0 0.0
  %1622 = vmatpush1.msra.mxu0 %v1605
  %1623 = vmatprep.subr.mxu0 0.0
  %1624 = vmatpush1.msra.mxu0 %v1606
  %1625 = vmatprep.subr.mxu0 0.0
  %1626 = vmatpush1.msra.mxu0 %v1607
  %1627 = vmatprep.subr.mxu0 0.0
  %1628 = vmatpush1.msra.mxu0 %v1608
  %1629 = vmatprep.subr.mxu0 0.0
  %1630 = vmatpush1.msra.mxu0 %v1609
  %1631 = vmatprep.subr.mxu0 0.0
  %1632 = vmatpush1.msra.mxu0 %v1610
  %1633 = vmatprep.subr.mxu0 0.0
  %1634 = vmatpush1.msra.mxu0 %v1611
  %1635 = vmatprep.subr.mxu0 0.0
  %1636 = vmatpush1.msra.mxu0 %v1612
  %1637 = vmatprep.subr.mxu0 0.0
  %1638 = vmatpush1.msra.mxu0 %v1613
  %1639 = vmatprep.subr.mxu0 0.0
  %1640 = vmatpush1.msra.mxu0 %v1614
  %1641 = vmatprep.subr.mxu0 0.0
  %1642 = vmatpush1.msra.mxu0 %v1615
  %1643 = vmatprep.subr.mxu0 0.0
  %1644 = vmatpush1.msra.mxu0 %v1616
  %1645 = vmatprep.subr.mxu0 0.0
  %1646 = vmatpush1.msra.mxu0 %v1617
  %1647 = vmatprep.subr.mxu0 0.0
  %1648 = vmatpush1.msra.mxu0 %v1618
  %1649 = vmatprep.subr.mxu0 0.0
  %1650 = vmatpush1.msra.mxu0 %v1619
  %1651 = vmatprep.subr.mxu0 0.0
  %1652 = vmatpush1.msra.mxu0 %v1620
  %1653 = vmatprep.subr.mxu0 0.0
  %1654 = vmatpush1.msra.mxu0 0.0
  %1655 = vmatprep.subr.mxu0 0.0
  %1656 = vmatpush1.msra.mxu0 0.0
  %1657 = vmatprep.subr.mxu0 0.0
  %1658 = vmatpush1.msra.mxu0 0.0
  %1659 = vmatprep.subr.mxu0 0.0
  %1660 = vmatpush1.msra.mxu0 0.0
  %1661 = vmatprep.subr.mxu0 0.0
  %1662 = vmatpush1.msra.mxu0 0.0
  %1663 = vmatprep.subr.mxu0 0.0
  %1664 = vmatpush1.msra.mxu0 0.0
  %1665 = vmatprep.subr.mxu0 0.0
  %1666 = vmatpush1.msra.mxu0 0.0
  %1667 = vmatprep.subr.mxu0 0.0
  %1668 = vmatpush1.msra.mxu0 0.0
  %1669 = vmatprep.subr.mxu0 0.0
  %1670 = vmatpush1.msra.mxu0 0.0
  %1671 = vmatprep.subr.mxu0 0.0
  %1672 = vmatpush1.msra.mxu0 0.0
  %1673 = vmatprep.subr.mxu0 0.0
  %1674 = vmatpush1.msra.mxu0 0.0
  %1675 = vmatprep.subr.mxu0 0.0
  %1676 = vmatpush1.msra.mxu0 0.0
  %1677 = vmatprep.subr.mxu0 0.0
  %1678 = vmatpush1.msra.mxu0 0.0
  %1679 = vmatprep.subr.mxu0 0.0
  %1680 = vmatpush1.msra.mxu0 0.0
  %1681 = vmatprep.subr.mxu0 0.0
  %1682 = vmatpush1.msra.mxu0 0.0
  %1683 = vmatprep.subr.mxu0 0.0
  %1684 = vmatpush1.msra.mxu0 0.0
  %1685 = vmatprep.mubr.f32.mxu0 0.0
  %1686 = vmatmul.mubr.f32.gmra.mrb[0].mxu0 %v1583
  %v1687 = vpop.f32.mrb[0].mxu0
  %v1688 = vadd.f32 0.0, %v1687
  %v1689 = vpop.f32.mrb[0].mxu0
  %1690 = vmatprep.mubr.f32.mxu0 0.0
  %1691 = vmatmul.mubr.f32.gmra.mrb[0].mxu0 %v1584
  %v1692 = vpop.f32.mrb[0].mxu0
  %v1693 = vadd.f32 0.0, %v1692
  %v1694 = vpop.f32.mrb[0].mxu0
  %1695 = vmatprep.mubr.f32.mxu0 0.0
  %1696 = vmatmul.mubr.f32.gmra.mrb[0].mxu0 %v1585
  %v1697 = vpop.f32.mrb[0].mxu0
  %v1698 = vadd.f32 0.0, %v1697
  %v1699 = vpop.f32.mrb[0].mxu0
  %1700 = vmatprep.mubr.f32.mxu0 0.0
  %1701 = vmatmul.mubr.f32.gmra.mrb[0].mxu0 %v1586
  %v1702 = vpop.f32.mrb[0].mxu0
  %v1703 = vadd.f32 0.0, %v1702
  %v1704 = vpop.f32.mrb[0].mxu0
  %1705 = vmatprep.mubr.f32.mxu0 0.0
  %1706 = vmatmul.mubr.f32.gmra.mrb[0].mxu0 %v1587
  %v1707 = vpop.f32.mrb[0].mxu0
  %v1708 = vadd.f32 0.0, %v1707
  %v1709 = vpop.f32.mrb[0].mxu0
  %1710 = vmatprep.mubr.f32.mxu0 0.0
  %1711 = vmatmul.mubr.f32.gmra.mrb[0].mxu0 %v1588
  %v1712 = vpop.f32.mrb[0].mxu0
  %v1713 = vadd.f32 0.0, %v1712
  %v1714 = vpop.f32.mrb[0].mxu0
  %1715 = vmatprep.mubr.f32.mxu0 0.0
  %1716 = vmatmul.mubr.f32.gmra.mrb[0].mxu0 %v1589
  %v1717 = vpop.f32.mrb[0].mxu0
  %v1718 = vadd.f32 0.0, %v1717
  %v1719 = vpop.f32.mrb[0].mxu0
  %1720 = vmatprep.mubr.f32.mxu0 0.0
  %1721 = vmatmul.mubr.f32.gmra.mrb[0].mxu0 %v1590
  %v1722 = vpop.f32.mrb[0].mxu0
  %v1723 = vadd.f32 0.0, %v1722
  %v1724 = vpop.f32.mrb[0].mxu0
  %1725 = vmatprep.mubr.f32.mxu0 0.0
  %1726 = vmatmul.mubr.f32.gmra.mrb[0].mxu0 %v1591
  %v1727 = vpop.f32.mrb[0].mxu0
  %v1728 = vadd.f32 0.0, %v1727
  %v1729 = vpop.f32.mrb[0].mxu0
  %1730 = vmatprep.mubr.f32.mxu0 0.0
  %1731 = vmatmul.mubr.f32.gmra.mrb[0].mxu0 %v1592
  %v1732 = vpop.f32.mrb[0].mxu0
  %v1733 = vadd.f32 0.0, %v1732
  %v1734 = vpop.f32.mrb[0].mxu0
  %1735 = vmatprep.mubr.f32.mxu0 0.0
  %1736 = vmatmul.mubr.f32.gmra.mrb[0].mxu0 %v1593
  %v1737 = vpop.f32.mrb[0].mxu0
  %v1738 = vadd.f32 0.0, %v1737
  %v1739 = vpop.f32.mrb[0].mxu0
  %1740 = vmatprep.mubr.f32.mxu0 0.0
  %1741 = vmatmul.mubr.f32.gmra.mrb[0].mxu0 %v1594
  %v1742 = vpop.f32.mrb[0].mxu0
  %v1743 = vadd.f32 0.0, %v1742
  %v1744 = vpop.f32.mrb[0].mxu0
  %1745 = vmatprep.mubr.f32.mxu0 0.0
  %1746 = vmatmul.mubr.f32.gmra.mrb[0].mxu0 %v1595
  %v1747 = vpop.f32.mrb[0].mxu0
  %v1748 = vadd.f32 0.0, %v1747
  %v1749 = vpop.f32.mrb[0].mxu0
  %1750 = vmatprep.mubr.f32.mxu0 0.0
  %1751 = vmatmul.mubr.f32.gmra.mrb[0].mxu0 %v1596
  %v1752 = vpop.f32.mrb[0].mxu0
  %v1753 = vadd.f32 0.0, %v1752
  %v1754 = vpop.f32.mrb[0].mxu0
  %1755 = vmatprep.mubr.f32.mxu0 0.0
  %1756 = vmatmul.mubr.f32.gmra.mrb[0].mxu0 %v1597
  %v1757 = vpop.f32.mrb[0].mxu0
  %v1758 = vadd.f32 0.0, %v1757
  %v1759 = vpop.f32.mrb[0].mxu0
  %1760 = vmatprep.mubr.f32.mxu0 0.0
  %1761 = vmatmul.mubr.f32.gmra.mrb[0].mxu0 %v1598
  %v1762 = vpop.f32.mrb[0].mxu0
  %v1763 = vadd.f32 0.0, %v1762
  %v1764 = vpop.f32.mrb[0].mxu0
  %1765 = vmatprep.mubr.f32.mxu0 0.0
  %1766 = vmatmul.mubr.f32.gmra.mrb[0].mxu0 %v1599
  %v1767 = vpop.f32.mrb[0].mxu0
  %v1768 = vadd.f32 0.0, %v1767
  %v1769 = vpop.f32.mrb[0].mxu0
  %1770 = vmatprep.mubr.f32.mxu0 0.0
  %1771 = vmatmul.mubr.f32.gmra.mrb[0].mxu0 %v1600
  %v1772 = vpop.f32.mrb[0].mxu0
  %v1773 = vadd.f32 0.0, %v1772
  %v1774 = vpop.f32.mrb[0].mxu0
  %1775 = vmatprep.mubr.f32.mxu0 0.0
  %1776 = vmatmul.mubr.f32.gmra.mrb[0].mxu0 %v1601
  %v1777 = vpop.f32.mrb[0].mxu0
  %v1778 = vadd.f32 0.0, %v1777
  %v1779 = vpop.f32.mrb[0].mxu0
  %1780 = vmatprep.mubr.f32.mxu0 0.0
  %1781 = vmatmul.mubr.f32.gmra.mrb[0].mxu0 %v1602
  %v1782 = vpop.f32.mrb[0].mxu0
  %v1783 = vadd.f32 0.0, %v1782
  %v1784 = vpop.f32.mrb[0].mxu0
  %1785 = vmatprep.mubr.f32.mxu0 0.0
  %1786 = vmatmul.mubr.f32.gmra.mrb[0].mxu0 %v1603
  %v1787 = vpop.f32.mrb[0].mxu0
  %v1788 = vadd.f32 0.0, %v1787
  %v1789 = vpop.f32.mrb[0].mxu0
  %1790 = vdwg.mxu0
  %v1791 = vadd.f32 %v1562, %v1688
  %v1792 = vadd.f32 %v1563, %v1693
  %v1793 = vadd.f32 %v1564, %v1698
  %v1794 = vadd.f32 %v1565, %v1703
  %v1795 = vadd.f32 %v1566, %v1708
  %v1796 = vadd.f32 %v1567, %v1713
  %v1797 = vadd.f32 %v1568, %v1718
  %v1798 = vadd.f32 %v1569, %v1723
  %v1799 = vadd.f32 %v1570, %v1728
  %v1800 = vadd.f32 %v1571, %v1733
  %v1801 = vadd.f32 %v1572, %v1738
  %v1802 = vadd.f32 %v1573, %v1743
  %v1803 = vadd.f32 %v1574, %v1748
  %v1804 = vadd.f32 %v1575, %v1753
  %v1805 = vadd.f32 %v1576, %v1758
  %v1806 = vadd.f32 %v1577, %v1763
  %v1807 = vadd.f32 %v1578, %v1768
  %v1808 = vadd.f32 %v1579, %v1773
  %v1809 = vadd.f32 %v1580, %v1778
  %v1810 = vadd.f32 %v1581, %v1783
  %v1811 = vadd.f32 %v1582, %v1788
  %v1812 = vld [vmem:[%s0 + $0x1e] sm:$0xff]
  %v1813 = vld [vmem:[%s0 + $0x26] sm:$0xff]
  %v1814 = vld [vmem:[%s0 + $0x2e] sm:$0xff]
  %v1815 = vld [vmem:[%s0 + $0x36] sm:$0xff]
  %v1816 = vld [vmem:[%s0 + $0x3e] sm:$0xff]
  %v1817 = vld [vmem:[%s0 + $0x46] sm:$0xff]
  %v1818 = vld [vmem:[%s0 + $0x4e] sm:$0xff]
  %v1819 = vld [vmem:[%s0 + $0x56] sm:$0xff]
  %v1820 = vld [vmem:[%s0 + $0x5e] sm:$0xff]
  %v1821 = vld [vmem:[%s0 + $0x66] sm:$0xff]
  %v1822 = vld [vmem:[%s0 + $0x6e] sm:$0xff]
  %v1823 = vld [vmem:[%s0 + $0x76] sm:$0xff]
  %v1824 = vld [vmem:[%s0 + $0x7e] sm:$0xff]
  %v1825 = vld [vmem:[%s0 + $0x86] sm:$0xff]
  %v1826 = vld [vmem:[%s0 + $0x8e] sm:$0xff]
  %v1827 = vld [vmem:[%s0 + $0x96] sm:$0xff]
  %v1828 = vld [vmem:[%s0 + $0x9e] sm:$0xff]
  %v1829 = vld [vmem:[%s0 + $0xa6] sm:$0xff]
  %v1830 = vld [vmem:[%s0 + $0xae] sm:$0xff]
  %v1831 = vld [vmem:[%s0 + $0xb6] sm:$0xff]
  %v1832 = vld [vmem:[%s0 + $0xbe] sm:$0xff]
  %s1833 = scalar_lea.vmem %s1, 1024
  %v1834 = vld [vmem:[%s1833] sm:$0xff]
  %v1835 = vld [vmem:[%s1833 + $0x8] sm:$0xff]
  %v1836 = vld [vmem:[%s1833 + $0x10] sm:$0xff]
  %v1837 = vld [vmem:[%s1833 + $0x18] sm:$0xff]
  %v1838 = vld [vmem:[%s1833 + $0x20] sm:$0xff]
  %v1839 = vld [vmem:[%s1833 + $0x28] sm:$0xff]
  %v1840 = vld [vmem:[%s1833 + $0x30] sm:$0xff]
  %v1841 = vld [vmem:[%s1833 + $0x38] sm:$0xff]
  %v1842 = vld [vmem:[%s1833 + $0x40] sm:$0xff]
  %v1843 = vld [vmem:[%s1833 + $0x48] sm:$0xff]
  %v1844 = vld [vmem:[%s1833 + $0x50] sm:$0xff]
  %v1845 = vld [vmem:[%s1833 + $0x58] sm:$0xff]
  %v1846 = vld [vmem:[%s1833 + $0x60] sm:$0xff]
  %v1847 = vld [vmem:[%s1833 + $0x68] sm:$0xff]
  %v1848 = vld [vmem:[%s1833 + $0x70] sm:$0xff]
  %v1849 = vld [vmem:[%s1833 + $0x78] sm:$0xff]
  %1850 = vmatprep.subr.mxu0 0.0
  %1851 = vmatpush1.msra.mxu0 %v1834
  %1852 = vmatprep.subr.mxu0 0.0
  %1853 = vmatpush1.msra.mxu0 %v1835
  %1854 = vmatprep.subr.mxu0 0.0
  %1855 = vmatpush1.msra.mxu0 %v1836
  %1856 = vmatprep.subr.mxu0 0.0
  %1857 = vmatpush1.msra.mxu0 %v1837
  %1858 = vmatprep.subr.mxu0 0.0
  %1859 = vmatpush1.msra.mxu0 %v1838
  %1860 = vmatprep.subr.mxu0 0.0
  %1861 = vmatpush1.msra.mxu0 %v1839
  %1862 = vmatprep.subr.mxu0 0.0
  %1863 = vmatpush1.msra.mxu0 %v1840
  %1864 = vmatprep.subr.mxu0 0.0
  %1865 = vmatpush1.msra.mxu0 %v1841
  %1866 = vmatprep.subr.mxu0 0.0
  %1867 = vmatpush1.msra.mxu0 %v1842
  %1868 = vmatprep.subr.mxu0 0.0
  %1869 = vmatpush1.msra.mxu0 %v1843
  %1870 = vmatprep.subr.mxu0 0.0
  %1871 = vmatpush1.msra.mxu0 %v1844
  %1872 = vmatprep.subr.mxu0 0.0
  %1873 = vmatpush1.msra.mxu0 %v1845
  %1874 = vmatprep.subr.mxu0 0.0
  %1875 = vmatpush1.msra.mxu0 %v1846
  %1876 = vmatprep.subr.mxu0 0.0
  %1877 = vmatpush1.msra.mxu0 %v1847
  %1878 = vmatprep.subr.mxu0 0.0
  %1879 = vmatpush1.msra.mxu0 %v1848
  %1880 = vmatprep.subr.mxu0 0.0
  %1881 = vmatpush1.msra.mxu0 %v1849
  %1882 = vmatprep.subr.mxu0 0.0
  %1883 = vmatpush1.msra.mxu0 0.0
  %1884 = vmatprep.subr.mxu0 0.0
  %1885 = vmatpush1.msra.mxu0 0.0
  %1886 = vmatprep.subr.mxu0 0.0
  %1887 = vmatpush1.msra.mxu0 0.0
  %1888 = vmatprep.subr.mxu0 0.0
  %1889 = vmatpush1.msra.mxu0 0.0
  %1890 = vmatprep.subr.mxu0 0.0
  %1891 = vmatpush1.msra.mxu0 0.0
  %1892 = vmatprep.subr.mxu0 0.0
  %1893 = vmatpush1.msra.mxu0 0.0
  %1894 = vmatprep.subr.mxu0 0.0
  %1895 = vmatpush1.msra.mxu0 0.0
  %1896 = vmatprep.subr.mxu0 0.0
  %1897 = vmatpush1.msra.mxu0 0.0
  %1898 = vmatprep.subr.mxu0 0.0
  %1899 = vmatpush1.msra.mxu0 0.0
  %1900 = vmatprep.subr.mxu0 0.0
  %1901 = vmatpush1.msra.mxu0 0.0
  %1902 = vmatprep.subr.mxu0 0.0
  %1903 = vmatpush1.msra.mxu0 0.0
  %1904 = vmatprep.subr.mxu0 0.0
  %1905 = vmatpush1.msra.mxu0 0.0
  %1906 = vmatprep.subr.mxu0 0.0
  %1907 = vmatpush1.msra.mxu0 0.0
  %1908 = vmatprep.subr.mxu0 0.0
  %1909 = vmatpush1.msra.mxu0 0.0
  %1910 = vmatprep.subr.mxu0 0.0
  %1911 = vmatpush1.msra.mxu0 0.0
  %1912 = vmatprep.subr.mxu0 0.0
  %1913 = vmatpush1.msra.mxu0 0.0
  %1914 = vmatprep.mubr.f32.mxu0 0.0
  %1915 = vmatmul.mubr.f32.gmra.mrb[0].mxu0 %v1812
  %v1916 = vpop.f32.mrb[0].mxu0
  %v1917 = vadd.f32 0.0, %v1916
  %v1918 = vpop.f32.mrb[0].mxu0
  %1919 = vmatprep.mubr.f32.mxu0 0.0
  %1920 = vmatmul.mubr.f32.gmra.mrb[0].mxu0 %v1813
  %v1921 = vpop.f32.mrb[0].mxu0
  %v1922 = vadd.f32 0.0, %v1921
  %v1923 = vpop.f32.mrb[0].mxu0
  %1924 = vmatprep.mubr.f32.mxu0 0.0
  %1925 = vmatmul.mubr.f32.gmra.mrb[0].mxu0 %v1814
  %v1926 = vpop.f32.mrb[0].mxu0
  %v1927 = vadd.f32 0.0, %v1926
  %v1928 = vpop.f32.mrb[0].mxu0
  %1929 = vmatprep.mubr.f32.mxu0 0.0
  %1930 = vmatmul.mubr.f32.gmra.mrb[0].mxu0 %v1815
  %v1931 = vpop.f32.mrb[0].mxu0
  %v1932 = vadd.f32 0.0, %v1931
  %v1933 = vpop.f32.mrb[0].mxu0
  %1934 = vmatprep.mubr.f32.mxu0 0.0
  %1935 = vmatmul.mubr.f32.gmra.mrb[0].mxu0 %v1816
  %v1936 = vpop.f32.mrb[0].mxu0
  %v1937 = vadd.f32 0.0, %v1936
  %v1938 = vpop.f32.mrb[0].mxu0
  %1939 = vmatprep.mubr.f32.mxu0 0.0
  %1940 = vmatmul.mubr.f32.gmra.mrb[0].mxu0 %v1817
  %v1941 = vpop.f32.mrb[0].mxu0
  %v1942 = vadd.f32 0.0, %v1941
  %v1943 = vpop.f32.mrb[0].mxu0
  %1944 = vmatprep.mubr.f32.mxu0 0.0
  %1945 = vmatmul.mubr.f32.gmra.mrb[0].mxu0 %v1818
  %v1946 = vpop.f32.mrb[0].mxu0
  %v1947 = vadd.f32 0.0, %v1946
  %v1948 = vpop.f32.mrb[0].mxu0
  %1949 = vmatprep.mubr.f32.mxu0 0.0
  %1950 = vmatmul.mubr.f32.gmra.mrb[0].mxu0 %v1819
  %v1951 = vpop.f32.mrb[0].mxu0
  %v1952 = vadd.f32 0.0, %v1951
  %v1953 = vpop.f32.mrb[0].mxu0
  %1954 = vmatprep.mubr.f32.mxu0 0.0
  %1955 = vmatmul.mubr.f32.gmra.mrb[0].mxu0 %v1820
  %v1956 = vpop.f32.mrb[0].mxu0
  %v1957 = vadd.f32 0.0, %v1956
  %v1958 = vpop.f32.mrb[0].mxu0
  %1959 = vmatprep.mubr.f32.mxu0 0.0
  %1960 = vmatmul.mubr.f32.gmra.mrb[0].mxu0 %v1821
  %v1961 = vpop.f32.mrb[0].mxu0
  %v1962 = vadd.f32 0.0, %v1961
  %v1963 = vpop.f32.mrb[0].mxu0
  %1964 = vmatprep.mubr.f32.mxu0 0.0
  %1965 = vmatmul.mubr.f32.gmra.mrb[0].mxu0 %v1822
  %v1966 = vpop.f32.mrb[0].mxu0
  %v1967 = vadd.f32 0.0, %v1966
  %v1968 = vpop.f32.mrb[0].mxu0
  %1969 = vmatprep.mubr.f32.mxu0 0.0
  %1970 = vmatmul.mubr.f32.gmra.mrb[0].mxu0 %v1823
  %v1971 = vpop.f32.mrb[0].mxu0
  %v1972 = vadd.f32 0.0, %v1971
  %v1973 = vpop.f32.mrb[0].mxu0
  %1974 = vmatprep.mubr.f32.mxu0 0.0
  %1975 = vmatmul.mubr.f32.gmra.mrb[0].mxu0 %v1824
  %v1976 = vpop.f32.mrb[0].mxu0
  %v1977 = vadd.f32 0.0, %v1976
  %v1978 = vpop.f32.mrb[0].mxu0
  %1979 = vmatprep.mubr.f32.mxu0 0.0
  %1980 = vmatmul.mubr.f32.gmra.mrb[0].mxu0 %v1825
  %v1981 = vpop.f32.mrb[0].mxu0
  %v1982 = vadd.f32 0.0, %v1981
  %v1983 = vpop.f32.mrb[0].mxu0
  %1984 = vmatprep.mubr.f32.mxu0 0.0
  %1985 = vmatmul.mubr.f32.gmra.mrb[0].mxu0 %v1826
  %v1986 = vpop.f32.mrb[0].mxu0
  %v1987 = vadd.f32 0.0, %v1986
  %v1988 = vpop.f32.mrb[0].mxu0
  %1989 = vmatprep.mubr.f32.mxu0 0.0
  %1990 = vmatmul.mubr.f32.gmra.mrb[0].mxu0 %v1827
  %v1991 = vpop.f32.mrb[0].mxu0
  %v1992 = vadd.f32 0.0, %v1991
  %v1993 = vpop.f32.mrb[0].mxu0
  %1994 = vmatprep.mubr.f32.mxu0 0.0
  %1995 = vmatmul.mubr.f32.gmra.mrb[0].mxu0 %v1828
  %v1996 = vpop.f32.mrb[0].mxu0
  %v1997 = vadd.f32 0.0, %v1996
  %v1998 = vpop.f32.mrb[0].mxu0
  %1999 = vmatprep.mubr.f32.mxu0 0.0
  %2000 = vmatmul.mubr.f32.gmra.mrb[0].mxu0 %v1829
  %v2001 = vpop.f32.mrb[0].mxu0
  %v2002 = vadd.f32 0.0, %v2001
  %v2003 = vpop.f32.mrb[0].mxu0
  %2004 = vmatprep.mubr.f32.mxu0 0.0
  %2005 = vmatmul.mubr.f32.gmra.mrb[0].mxu0 %v1830
  %v2006 = vpop.f32.mrb[0].mxu0
  %v2007 = vadd.f32 0.0, %v2006
  %v2008 = vpop.f32.mrb[0].mxu0
  %2009 = vmatprep.mubr.f32.mxu0 0.0
  %2010 = vmatmul.mubr.f32.gmra.mrb[0].mxu0 %v1831
  %v2011 = vpop.f32.mrb[0].mxu0
  %v2012 = vadd.f32 0.0, %v2011
  %v2013 = vpop.f32.mrb[0].mxu0
  %2014 = vmatprep.mubr.f32.mxu0 0.0
  %2015 = vmatmul.mubr.f32.gmra.mrb[0].mxu0 %v1832
  %v2016 = vpop.f32.mrb[0].mxu0
  %v2017 = vadd.f32 0.0, %v2016
  %v2018 = vpop.f32.mrb[0].mxu0
  %2019 = vdwg.mxu0
  %v2020 = vadd.f32 %v1791, %v1917
  %v2021 = vadd.f32 %v1792, %v1922
  %v2022 = vadd.f32 %v1793, %v1927
  %v2023 = vadd.f32 %v1794, %v1932
  %v2024 = vadd.f32 %v1795, %v1937
  %v2025 = vadd.f32 %v1796, %v1942
  %v2026 = vadd.f32 %v1797, %v1947
  %v2027 = vadd.f32 %v1798, %v1952
  %v2028 = vadd.f32 %v1799, %v1957
  %v2029 = vadd.f32 %v1800, %v1962
  %v2030 = vadd.f32 %v1801, %v1967
  %v2031 = vadd.f32 %v1802, %v1972
  %v2032 = vadd.f32 %v1803, %v1977
  %v2033 = vadd.f32 %v1804, %v1982
  %v2034 = vadd.f32 %v1805, %v1987
  %v2035 = vadd.f32 %v1806, %v1992
  %v2036 = vadd.f32 %v1807, %v1997
  %v2037 = vadd.f32 %v1808, %v2002
  %v2038 = vadd.f32 %v1809, %v2007
  %v2039 = vadd.f32 %v1810, %v2012
  %v2040 = vadd.f32 %v1811, %v2017
  %2041 = vst [vmem:[#allocation2] sm:$0xff] %v2020
  %2042 = vst [vmem:[#allocation2 + $0x8] sm:$0xff] %v2021
  %2043 = vst [vmem:[#allocation2 + $0x10] sm:$0xff] %v2022
  %2044 = vst [vmem:[#allocation2 + $0x18] sm:$0xff] %v2023
  %2045 = vst [vmem:[#allocation2 + $0x20] sm:$0xff] %v2024
  %2046 = vst [vmem:[#allocation2 + $0x28] sm:$0xff] %v2025
  %2047 = vst [vmem:[#allocation2 + $0x30] sm:$0xff] %v2026
  %2048 = vst [vmem:[#allocation2 + $0x38] sm:$0xff] %v2027
  %2049 = vst [vmem:[#allocation2 + $0x40] sm:$0xff] %v2028
  %2050 = vst [vmem:[#allocation2 + $0x48] sm:$0xff] %v2029
  %2051 = vst [vmem:[#allocation2 + $0x50] sm:$0xff] %v2030
  %2052 = vst [vmem:[#allocation2 + $0x58] sm:$0xff] %v2031
  %2053 = vst [vmem:[#allocation2 + $0x60] sm:$0xff] %v2032
  %2054 = vst [vmem:[#allocation2 + $0x68] sm:$0xff] %v2033
  %2055 = vst [vmem:[#allocation2 + $0x70] sm:$0xff] %v2034
  %2056 = vst [vmem:[#allocation2 + $0x78] sm:$0xff] %v2035
  %2057 = vst [vmem:[#allocation2 + $0x80] sm:$0xff] %v2036
  %2058 = vst [vmem:[#allocation2 + $0x88] sm:$0xff] %v2037
  %2059 = vst [vmem:[#allocation2 + $0x90] sm:$0xff] %v2038
  %2060 = vst [vmem:[#allocation2 + $0x98] sm:$0xff] %v2039
  %2061 = vst [vmem:[#allocation2 + $0xa0] sm:$0xff] %v2040
  %v2062 = vld [vmem:[%s0 + $0xd2] sm:$0xff]
  %v2063 = vld [vmem:[%s0 + $0xda] sm:$0xff]
  %v2064 = vld [vmem:[%s0 + $0xe2] sm:$0xff]
  %v2065 = vld [vmem:[%s0 + $0xea] sm:$0xff]
  %v2066 = vld [vmem:[%s0 + $0xf2] sm:$0xff]
  %v2067 = vld [vmem:[%s0 + $0xfa] sm:$0xff]
  %v2068 = vld [vmem:[%s0 + $0x102] sm:$0xff]
  %v2069 = vld [vmem:[%s0 + $0x10a] sm:$0xff]
  %v2070 = vld [vmem:[%s0 + $0x112] sm:$0xff]
  %v2071 = vld [vmem:[%s0 + $0x11a] sm:$0xff]
  %v2072 = vld [vmem:[%s0 + $0x122] sm:$0xff]
  %v2073 = vld [vmem:[%s0 + $0x12a] sm:$0xff]
  %v2074 = vld [vmem:[%s0 + $0x132] sm:$0xff]
  %v2075 = vld [vmem:[%s0 + $0x13a] sm:$0xff]
  %v2076 = vld [vmem:[%s0 + $0x142] sm:$0xff]
  %v2077 = vld [vmem:[%s0 + $0x14a] sm:$0xff]
  %v2078 = vld [vmem:[%s0 + $0x152] sm:$0xff]
  %v2079 = vld [vmem:[%s0 + $0x15a] sm:$0xff]
  %v2080 = vld [vmem:[%s0 + $0x162] sm:$0xff]
  %v2081 = vld [vmem:[%s0 + $0x16a] sm:$0xff]
  %v2082 = vld [vmem:[%s0 + $0x172] sm:$0xff]
  %v2083 = vld [vmem:[%s1] sm:$0xff]
  %v2084 = vld [vmem:[%s1 + $0x8] sm:$0xff]
  %v2085 = vld [vmem:[%s1 + $0x10] sm:$0xff]
  %v2086 = vld [vmem:[%s1 + $0x18] sm:$0xff]
  %v2087 = vld [vmem:[%s1 + $0x20] sm:$0xff]
  %v2088 = vld [vmem:[%s1 + $0x28] sm:$0xff]
  %v2089 = vld [vmem:[%s1 + $0x30] sm:$0xff]
  %v2090 = vld [vmem:[%s1 + $0x38] sm:$0xff]
  %v2091 = vld [vmem:[%s1 + $0x40] sm:$0xff]
  %v2092 = vld [vmem:[%s1 + $0x48] sm:$0xff]
  %v2093 = vld [vmem:[%s1 + $0x50] sm:$0xff]
  %v2094 = vld [vmem:[%s1 + $0x58] sm:$0xff]
  %v2095 = vld [vmem:[%s1 + $0x60] sm:$0xff]
  %v2096 = vld [vmem:[%s1 + $0x68] sm:$0xff]
  %v2097 = vld [vmem:[%s1 + $0x70] sm:$0xff]
  %v2098 = vld [vmem:[%s1 + $0x78] sm:$0xff]
  %v2099 = vld [vmem:[%s0 + $0xd3] sm:$0xff]
  %v2100 = vld [vmem:[%s0 + $0xdb] sm:$0xff]
  %v2101 = vld [vmem:[%s0 + $0xe3] sm:$0xff]
  %v2102 = vld [vmem:[%s0 + $0xeb] sm:$0xff]
  %v2103 = vld [vmem:[%s0 + $0xf3] sm:$0xff]
  %v2104 = vld [vmem:[%s0 + $0xfb] sm:$0xff]
  %v2105 = vld [vmem:[%s0 + $0x103] sm:$0xff]
  %v2106 = vld [vmem:[%s0 + $0x10b] sm:$0xff]
  %v2107 = vld [vmem:[%s0 + $0x113] sm:$0xff]
  %v2108 = vld [vmem:[%s0 + $0x11b] sm:$0xff]
  %v2109 = vld [vmem:[%s0 + $0x123] sm:$0xff]
  %v2110 = vld [vmem:[%s0 + $0x12b] sm:$0xff]
  %v2111 = vld [vmem:[%s0 + $0x133] sm:$0xff]
  %v2112 = vld [vmem:[%s0 + $0x13b] sm:$0xff]
  %v2113 = vld [vmem:[%s0 + $0x143] sm:$0xff]
  %v2114 = vld [vmem:[%s0 + $0x14b] sm:$0xff]
  %v2115 = vld [vmem:[%s0 + $0x153] sm:$0xff]
  %v2116 = vld [vmem:[%s0 + $0x15b] sm:$0xff]
  %v2117 = vld [vmem:[%s0 + $0x163] sm:$0xff]
  %v2118 = vld [vmem:[%s0 + $0x16b] sm:$0xff]
  %v2119 = vld [vmem:[%s0 + $0x173] sm:$0xff]
  %v2120 = vld [vmem:[%s81] sm:$0xff]
  %v2121 = vld [vmem:[%s81 + $0x8] sm:$0xff]
  %v2122 = vld [vmem:[%s81 + $0x10] sm:$0xff]
  %v2123 = vld [vmem:[%s81 + $0x18] sm:$0xff]
  %v2124 = vld [vmem:[%s81 + $0x20] sm:$0xff]
  %v2125 = vld [vmem:[%s81 + $0x28] sm:$0xff]
  %v2126 = vld [vmem:[%s81 + $0x30] sm:$0xff]
  %v2127 = vld [vmem:[%s81 + $0x38] sm:$0xff]
  %v2128 = vld [vmem:[%s81 + $0x40] sm:$0xff]
  %v2129 = vld [vmem:[%s81 + $0x48] sm:$0xff]
  %v2130 = vld [vmem:[%s81 + $0x50] sm:$0xff]
  %v2131 = vld [vmem:[%s81 + $0x58] sm:$0xff]
  %v2132 = vld [vmem:[%s81 + $0x60] sm:$0xff]
  %v2133 = vld [vmem:[%s81 + $0x68] sm:$0xff]
  %v2134 = vld [vmem:[%s81 + $0x70] sm:$0xff]
  %v2135 = vld [vmem:[%s81 + $0x78] sm:$0xff]
  %2136 = vmatprep.subr.mxu0 0.0
  %2137 = vmatpush1.msra.mxu0 %v2120
  %2138 = vmatprep.subr.mxu0 0.0
  %2139 = vmatpush1.msra.mxu0 %v2121
  %2140 = vmatprep.subr.mxu0 0.0
  %2141 = vmatpush1.msra.mxu0 %v2122
  %2142 = vmatprep.subr.mxu0 0.0
  %2143 = vmatpush1.msra.mxu0 %v2123
  %2144 = vmatprep.subr.mxu0 0.0
  %2145 = vmatpush1.msra.mxu0 %v2124
  %2146 = vmatprep.subr.mxu0 0.0
  %2147 = vmatpush1.msra.mxu0 %v2125
  %2148 = vmatprep.subr.mxu0 0.0
  %2149 = vmatpush1.msra.mxu0 %v2126
  %2150 = vmatprep.subr.mxu0 0.0
  %2151 = vmatpush1.msra.mxu0 %v2127
  %2152 = vmatprep.subr.mxu0 0.0
  %2153 = vmatpush1.msra.mxu0 %v2128
  %2154 = vmatprep.subr.mxu0 0.0
  %2155 = vmatpush1.msra.mxu0 %v2129
  %2156 = vmatprep.subr.mxu0 0.0
  %2157 = vmatpush1.msra.mxu0 %v2130
  %2158 = vmatprep.subr.mxu0 0.0
  %2159 = vmatpush1.msra.mxu0 %v2131
  %2160 = vmatprep.subr.mxu0 0.0
  %2161 = vmatpush1.msra.mxu0 %v2132
  %2162 = vmatprep.subr.mxu0 0.0
  %2163 = vmatpush1.msra.mxu0 %v2133
  %2164 = vmatprep.subr.mxu0 0.0
  %2165 = vmatpush1.msra.mxu0 %v2134
  %2166 = vmatprep.subr.mxu0 0.0
  %2167 = vmatpush1.msra.mxu0 %v2135
  %2168 = vmatprep.subr.mxu0 0.0
  %2169 = vmatpush1.msra.mxu0 0.0
  %2170 = vmatprep.subr.mxu0 0.0
  %2171 = vmatpush1.msra.mxu0 0.0
  %2172 = vmatprep.subr.mxu0 0.0
  %2173 = vmatpush1.msra.mxu0 0.0
  %2174 = vmatprep.subr.mxu0 0.0
  %2175 = vmatpush1.msra.mxu0 0.0
  %2176 = vmatprep.subr.mxu0 0.0
  %2177 = vmatpush1.msra.mxu0 0.0
  %2178 = vmatprep.subr.mxu0 0.0
  %2179 = vmatpush1.msra.mxu0 0.0
  %2180 = vmatprep.subr.mxu0 0.0
  %2181 = vmatpush1.msra.mxu0 0.0
  %2182 = vmatprep.subr.mxu0 0.0
  %2183 = vmatpush1.msra.mxu0 0.0
  %2184 = vmatprep.subr.mxu0 0.0
  %2185 = vmatpush1.msra.mxu0 0.0
  %2186 = vmatprep.subr.mxu0 0.0
  %2187 = vmatpush1.msra.mxu0 0.0
  %2188 = vmatprep.subr.mxu0 0.0
  %2189 = vmatpush1.msra.mxu0 0.0
  %2190 = vmatprep.subr.mxu0 0.0
  %2191 = vmatpush1.msra.mxu0 0.0
  %2192 = vmatprep.subr.mxu0 0.0
  %2193 = vmatpush1.msra.mxu0 0.0
  %2194 = vmatprep.subr.mxu0 0.0
  %2195 = vmatpush1.msra.mxu0 0.0
  %2196 = vmatprep.subr.mxu0 0.0
  %2197 = vmatpush1.msra.mxu0 0.0
  %2198 = vmatprep.subr.mxu0 0.0
  %2199 = vmatpush1.msra.mxu0 0.0
  %2200 = vmatprep.mubr.f32.mxu0 0.0
  %2201 = vmatmul.mubr.f32.gmra.mrb[0].mxu0 %v2099
  %v2202 = vpop.f32.mrb[0].mxu0
  %v2203 = vadd.f32 0.0, %v2202
  %v2204 = vpop.f32.mrb[0].mxu0
  %2205 = vmatprep.mubr.f32.mxu0 0.0
  %2206 = vmatmul.mubr.f32.gmra.mrb[0].mxu0 %v2100
  %v2207 = vpop.f32.mrb[0].mxu0
  %v2208 = vadd.f32 0.0, %v2207
  %v2209 = vpop.f32.mrb[0].mxu0
  %2210 = vmatprep.mubr.f32.mxu0 0.0
  %2211 = vmatmul.mubr.f32.gmra.mrb[0].mxu0 %v2101
  %v2212 = vpop.f32.mrb[0].mxu0
  %v2213 = vadd.f32 0.0, %v2212
  %v2214 = vpop.f32.mrb[0].mxu0
  %2215 = vmatprep.mubr.f32.mxu0 0.0
  %2216 = vmatmul.mubr.f32.gmra.mrb[0].mxu0 %v2102
  %v2217 = vpop.f32.mrb[0].mxu0
  %v2218 = vadd.f32 0.0, %v2217
  %v2219 = vpop.f32.mrb[0].mxu0
  %2220 = vmatprep.mubr.f32.mxu0 0.0
  %2221 = vmatmul.mubr.f32.gmra.mrb[0].mxu0 %v2103
  %v2222 = vpop.f32.mrb[0].mxu0
  %v2223 = vadd.f32 0.0, %v2222
  %v2224 = vpop.f32.mrb[0].mxu0
  %2225 = vmatprep.mubr.f32.mxu0 0.0
  %2226 = vmatmul.mubr.f32.gmra.mrb[0].mxu0 %v2104
  %v2227 = vpop.f32.mrb[0].mxu0
  %v2228 = vadd.f32 0.0, %v2227
  %v2229 = vpop.f32.mrb[0].mxu0
  %2230 = vmatprep.mubr.f32.mxu0 0.0
  %2231 = vmatmul.mubr.f32.gmra.mrb[0].mxu0 %v2105
  %v2232 = vpop.f32.mrb[0].mxu0
  %v2233 = vadd.f32 0.0, %v2232
  %v2234 = vpop.f32.mrb[0].mxu0
  %2235 = vmatprep.mubr.f32.mxu0 0.0
  %2236 = vmatmul.mubr.f32.gmra.mrb[0].mxu0 %v2106
  %v2237 = vpop.f32.mrb[0].mxu0
  %v2238 = vadd.f32 0.0, %v2237
  %v2239 = vpop.f32.mrb[0].mxu0
  %2240 = vmatprep.mubr.f32.mxu0 0.0
  %2241 = vmatmul.mubr.f32.gmra.mrb[0].mxu0 %v2107
  %v2242 = vpop.f32.mrb[0].mxu0
  %v2243 = vadd.f32 0.0, %v2242
  %v2244 = vpop.f32.mrb[0].mxu0
  %2245 = vmatprep.mubr.f32.mxu0 0.0
  %2246 = vmatmul.mubr.f32.gmra.mrb[0].mxu0 %v2108
  %v2247 = vpop.f32.mrb[0].mxu0
  %v2248 = vadd.f32 0.0, %v2247
  %v2249 = vpop.f32.mrb[0].mxu0
  %2250 = vmatprep.mubr.f32.mxu0 0.0
  %2251 = vmatmul.mubr.f32.gmra.mrb[0].mxu0 %v2109
  %v2252 = vpop.f32.mrb[0].mxu0
  %v2253 = vadd.f32 0.0, %v2252
  %v2254 = vpop.f32.mrb[0].mxu0
  %2255 = vmatprep.mubr.f32.mxu0 0.0
  %2256 = vmatmul.mubr.f32.gmra.mrb[0].mxu0 %v2110
  %v2257 = vpop.f32.mrb[0].mxu0
  %v2258 = vadd.f32 0.0, %v2257
  %v2259 = vpop.f32.mrb[0].mxu0
  %2260 = vmatprep.mubr.f32.mxu0 0.0
  %2261 = vmatmul.mubr.f32.gmra.mrb[0].mxu0 %v2111
  %v2262 = vpop.f32.mrb[0].mxu0
  %v2263 = vadd.f32 0.0, %v2262
  %v2264 = vpop.f32.mrb[0].mxu0
  %2265 = vmatprep.mubr.f32.mxu0 0.0
  %2266 = vmatmul.mubr.f32.gmra.mrb[0].mxu0 %v2112
  %v2267 = vpop.f32.mrb[0].mxu0
  %v2268 = vadd.f32 0.0, %v2267
  %v2269 = vpop.f32.mrb[0].mxu0
  %2270 = vmatprep.mubr.f32.mxu0 0.0
  %2271 = vmatmul.mubr.f32.gmra.mrb[0].mxu0 %v2113
  %v2272 = vpop.f32.mrb[0].mxu0
  %v2273 = vadd.f32 0.0, %v2272
  %v2274 = vpop.f32.mrb[0].mxu0
  %2275 = vmatprep.mubr.f32.mxu0 0.0
  %2276 = vmatmul.mubr.f32.gmra.mrb[0].mxu0 %v2114
  %v2277 = vpop.f32.mrb[0].mxu0
  %v2278 = vadd.f32 0.0, %v2277
  %v2279 = vpop.f32.mrb[0].mxu0
  %2280 = vmatprep.mubr.f32.mxu0 0.0
  %2281 = vmatmul.mubr.f32.gmra.mrb[0].mxu0 %v2115
  %v2282 = vpop.f32.mrb[0].mxu0
  %v2283 = vadd.f32 0.0, %v2282
  %v2284 = vpop.f32.mrb[0].mxu0
  %2285 = vmatprep.mubr.f32.mxu0 0.0
  %2286 = vmatmul.mubr.f32.gmra.mrb[0].mxu0 %v2116
  %v2287 = vpop.f32.mrb[0].mxu0
  %v2288 = vadd.f32 0.0, %v2287
  %v2289 = vpop.f32.mrb[0].mxu0
  %2290 = vmatprep.mubr.f32.mxu0 0.0
  %2291 = vmatmul.mubr.f32.gmra.mrb[0].mxu0 %v2117
  %v2292 = vpop.f32.mrb[0].mxu0
  %v2293 = vadd.f32 0.0, %v2292
  %v2294 = vpop.f32.mrb[0].mxu0
  %2295 = vmatprep.mubr.f32.mxu0 0.0
  %2296 = vmatmul.mubr.f32.gmra.mrb[0].mxu0 %v2118
  %v2297 = vpop.f32.mrb[0].mxu0
  %v2298 = vadd.f32 0.0, %v2297
  %v2299 = vpop.f32.mrb[0].mxu0
  %2300 = vmatprep.mubr.f32.mxu0 0.0
  %2301 = vmatmul.mubr.f32.gmra.mrb[0].mxu0 %v2119
  %v2302 = vpop.f32.mrb[0].mxu0
  %v2303 = vadd.f32 0.0, %v2302
  %v2304 = vpop.f32.mrb[0].mxu0
  %2305 = vdwg.mxu0
  %2306 = vmatprep.subr.mxu0 0.0
  %2307 = vmatpush1.msra.mxu0 %v2083
  %2308 = vmatprep.subr.mxu0 0.0
  %2309 = vmatpush1.msra.mxu0 %v2084
  %2310 = vmatprep.subr.mxu0 0.0
  %2311 = vmatpush1.msra.mxu0 %v2085
  %2312 = vmatprep.subr.mxu0 0.0
  %2313 = vmatpush1.msra.mxu0 %v2086
  %2314 = vmatprep.subr.mxu0 0.0
  %2315 = vmatpush1.msra.mxu0 %v2087
  %2316 = vmatprep.subr.mxu0 0.0
  %2317 = vmatpush1.msra.mxu0 %v2088
  %2318 = vmatprep.subr.mxu0 0.0
  %2319 = vmatpush1.msra.mxu0 %v2089
  %2320 = vmatprep.subr.mxu0 0.0
  %2321 = vmatpush1.msra.mxu0 %v2090
  %2322 = vmatprep.subr.mxu0 0.0
  %2323 = vmatpush1.msra.mxu0 %v2091
  %2324 = vmatprep.subr.mxu0 0.0
  %2325 = vmatpush1.msra.mxu0 %v2092
  %2326 = vmatprep.subr.mxu0 0.0
  %2327 = vmatpush1.msra.mxu0 %v2093
  %2328 = vmatprep.subr.mxu0 0.0
  %2329 = vmatpush1.msra.mxu0 %v2094
  %2330 = vmatprep.subr.mxu0 0.0
  %2331 = vmatpush1.msra.mxu0 %v2095
  %2332 = vmatprep.subr.mxu0 0.0
  %2333 = vmatpush1.msra.mxu0 %v2096
  %2334 = vmatprep.subr.mxu0 0.0
  %2335 = vmatpush1.msra.mxu0 %v2097
  %2336 = vmatprep.subr.mxu0 0.0
  %2337 = vmatpush1.msra.mxu0 %v2098
  %2338 = vmatprep.subr.mxu0 0.0
  %2339 = vmatpush1.msra.mxu0 0.0
  %2340 = vmatprep.subr.mxu0 0.0
  %2341 = vmatpush1.msra.mxu0 0.0
  %2342 = vmatprep.subr.mxu0 0.0
  %2343 = vmatpush1.msra.mxu0 0.0
  %2344 = vmatprep.subr.mxu0 0.0
  %2345 = vmatpush1.msra.mxu0 0.0
  %2346 = vmatprep.subr.mxu0 0.0
  %2347 = vmatpush1.msra.mxu0 0.0
  %2348 = vmatprep.subr.mxu0 0.0
  %2349 = vmatpush1.msra.mxu0 0.0
  %2350 = vmatprep.subr.mxu0 0.0
  %2351 = vmatpush1.msra.mxu0 0.0
  %2352 = vmatprep.subr.mxu0 0.0
  %2353 = vmatpush1.msra.mxu0 0.0
  %2354 = vmatprep.subr.mxu0 0.0
  %2355 = vmatpush1.msra.mxu0 0.0
  %2356 = vmatprep.subr.mxu0 0.0
  %2357 = vmatpush1.msra.mxu0 0.0
  %2358 = vmatprep.subr.mxu0 0.0
  %2359 = vmatpush1.msra.mxu0 0.0
  %2360 = vmatprep.subr.mxu0 0.0
  %2361 = vmatpush1.msra.mxu0 0.0
  %2362 = vmatprep.subr.mxu0 0.0
  %2363 = vmatpush1.msra.mxu0 0.0
  %2364 = vmatprep.subr.mxu0 0.0
  %2365 = vmatpush1.msra.mxu0 0.0
  %2366 = vmatprep.subr.mxu0 0.0
  %2367 = vmatpush1.msra.mxu0 0.0
  %2368 = vmatprep.subr.mxu0 0.0
  %2369 = vmatpush1.msra.mxu0 0.0
  %2370 = vmatprep.mubr.f32.mxu0 0.0
  %2371 = vmatmul.mubr.f32.gmra.mrb[0].mxu0 %v2062
  %v2372 = vpop.f32.mrb[0].mxu0
  %v2373 = vadd.f32 %v2203, %v2372
  %v2374 = vpop.f32.mrb[0].mxu0
  %2375 = vmatprep.mubr.f32.mxu0 0.0
  %2376 = vmatmul.mubr.f32.gmra.mrb[0].mxu0 %v2063
  %v2377 = vpop.f32.mrb[0].mxu0
  %v2378 = vadd.f32 %v2208, %v2377
  %v2379 = vpop.f32.mrb[0].mxu0
  %2380 = vmatprep.mubr.f32.mxu0 0.0
  %2381 = vmatmul.mubr.f32.gmra.mrb[0].mxu0 %v2064
  %v2382 = vpop.f32.mrb[0].mxu0
  %v2383 = vadd.f32 %v2213, %v2382
  %v2384 = vpop.f32.mrb[0].mxu0
  %2385 = vmatprep.mubr.f32.mxu0 0.0
  %2386 = vmatmul.mubr.f32.gmra.mrb[0].mxu0 %v2065
  %v2387 = vpop.f32.mrb[0].mxu0
  %v2388 = vadd.f32 %v2218, %v2387
  %v2389 = vpop.f32.mrb[0].mxu0
  %2390 = vmatprep.mubr.f32.mxu0 0.0
  %2391 = vmatmul.mubr.f32.gmra.mrb[0].mxu0 %v2066
  %v2392 = vpop.f32.mrb[0].mxu0
  %v2393 = vadd.f32 %v2223, %v2392
  %v2394 = vpop.f32.mrb[0].mxu0
  %2395 = vmatprep.mubr.f32.mxu0 0.0
  %2396 = vmatmul.mubr.f32.gmra.mrb[0].mxu0 %v2067
  %v2397 = vpop.f32.mrb[0].mxu0
  %v2398 = vadd.f32 %v2228, %v2397
  %v2399 = vpop.f32.mrb[0].mxu0
  %2400 = vmatprep.mubr.f32.mxu0 0.0
  %2401 = vmatmul.mubr.f32.gmra.mrb[0].mxu0 %v2068
  %v2402 = vpop.f32.mrb[0].mxu0
  %v2403 = vadd.f32 %v2233, %v2402
  %v2404 = vpop.f32.mrb[0].mxu0
  %2405 = vmatprep.mubr.f32.mxu0 0.0
  %2406 = vmatmul.mubr.f32.gmra.mrb[0].mxu0 %v2069
  %v2407 = vpop.f32.mrb[0].mxu0
  %v2408 = vadd.f32 %v2238, %v2407
  %v2409 = vpop.f32.mrb[0].mxu0
  %2410 = vmatprep.mubr.f32.mxu0 0.0
  %2411 = vmatmul.mubr.f32.gmra.mrb[0].mxu0 %v2070
  %v2412 = vpop.f32.mrb[0].mxu0
  %v2413 = vadd.f32 %v2243, %v2412
  %v2414 = vpop.f32.mrb[0].mxu0
  %2415 = vmatprep.mubr.f32.mxu0 0.0
  %2416 = vmatmul.mubr.f32.gmra.mrb[0].mxu0 %v2071
  %v2417 = vpop.f32.mrb[0].mxu0
  %v2418 = vadd.f32 %v2248, %v2417
  %v2419 = vpop.f32.mrb[0].mxu0
  %2420 = vmatprep.mubr.f32.mxu0 0.0
  %2421 = vmatmul.mubr.f32.gmra.mrb[0].mxu0 %v2072
  %v2422 = vpop.f32.mrb[0].mxu0
  %v2423 = vadd.f32 %v2253, %v2422
  %v2424 = vpop.f32.mrb[0].mxu0
  %2425 = vmatprep.mubr.f32.mxu0 0.0
  %2426 = vmatmul.mubr.f32.gmra.mrb[0].mxu0 %v2073
  %v2427 = vpop.f32.mrb[0].mxu0
  %v2428 = vadd.f32 %v2258, %v2427
  %v2429 = vpop.f32.mrb[0].mxu0
  %2430 = vmatprep.mubr.f32.mxu0 0.0
  %2431 = vmatmul.mubr.f32.gmra.mrb[0].mxu0 %v2074
  %v2432 = vpop.f32.mrb[0].mxu0
  %v2433 = vadd.f32 %v2263, %v2432
  %v2434 = vpop.f32.mrb[0].mxu0
  %2435 = vmatprep.mubr.f32.mxu0 0.0
  %2436 = vmatmul.mubr.f32.gmra.mrb[0].mxu0 %v2075
  %v2437 = vpop.f32.mrb[0].mxu0
  %v2438 = vadd.f32 %v2268, %v2437
  %v2439 = vpop.f32.mrb[0].mxu0
  %2440 = vmatprep.mubr.f32.mxu0 0.0
  %2441 = vmatmul.mubr.f32.gmra.mrb[0].mxu0 %v2076
  %v2442 = vpop.f32.mrb[0].mxu0
  %v2443 = vadd.f32 %v2273, %v2442
  %v2444 = vpop.f32.mrb[0].mxu0
  %2445 = vmatprep.mubr.f32.mxu0 0.0
  %2446 = vmatmul.mubr.f32.gmra.mrb[0].mxu0 %v2077
  %v2447 = vpop.f32.mrb[0].mxu0
  %v2448 = vadd.f32 %v2278, %v2447
  %v2449 = vpop.f32.mrb[0].mxu0
  %2450 = vmatprep.mubr.f32.mxu0 0.0
  %2451 = vmatmul.mubr.f32.gmra.mrb[0].mxu0 %v2078
  %v2452 = vpop.f32.mrb[0].mxu0
  %v2453 = vadd.f32 %v2283, %v2452
  %v2454 = vpop.f32.mrb[0].mxu0
  %2455 = vmatprep.mubr.f32.mxu0 0.0
  %2456 = vmatmul.mubr.f32.gmra.mrb[0].mxu0 %v2079
  %v2457 = vpop.f32.mrb[0].mxu0
  %v2458 = vadd.f32 %v2288, %v2457
  %v2459 = vpop.f32.mrb[0].mxu0
  %2460 = vmatprep.mubr.f32.mxu0 0.0
  %2461 = vmatmul.mubr.f32.gmra.mrb[0].mxu0 %v2080
  %v2462 = vpop.f32.mrb[0].mxu0
  %v2463 = vadd.f32 %v2293, %v2462
  %v2464 = vpop.f32.mrb[0].mxu0
  %2465 = vmatprep.mubr.f32.mxu0 0.0
  %2466 = vmatmul.mubr.f32.gmra.mrb[0].mxu0 %v2081
  %v2467 = vpop.f32.mrb[0].mxu0
  %v2468 = vadd.f32 %v2298, %v2467
  %v2469 = vpop.f32.mrb[0].mxu0
  %2470 = vmatprep.mubr.f32.mxu0 0.0
  %2471 = vmatmul.mubr.f32.gmra.mrb[0].mxu0 %v2082
  %v2472 = vpop.f32.mrb[0].mxu0
  %v2473 = vadd.f32 %v2303, %v2472
  %v2474 = vpop.f32.mrb[0].mxu0
  %2475 = vdwg.mxu0
  %v2476 = vld [vmem:[%s0 + $0xd4] sm:$0xff]
  %v2477 = vld [vmem:[%s0 + $0xdc] sm:$0xff]
  %v2478 = vld [vmem:[%s0 + $0xe4] sm:$0xff]
  %v2479 = vld [vmem:[%s0 + $0xec] sm:$0xff]
  %v2480 = vld [vmem:[%s0 + $0xf4] sm:$0xff]
  %v2481 = vld [vmem:[%s0 + $0xfc] sm:$0xff]
  %v2482 = vld [vmem:[%s0 + $0x104] sm:$0xff]
  %v2483 = vld [vmem:[%s0 + $0x10c] sm:$0xff]
  %v2484 = vld [vmem:[%s0 + $0x114] sm:$0xff]
  %v2485 = vld [vmem:[%s0 + $0x11c] sm:$0xff]
  %v2486 = vld [vmem:[%s0 + $0x124] sm:$0xff]
  %v2487 = vld [vmem:[%s0 + $0x12c] sm:$0xff]
  %v2488 = vld [vmem:[%s0 + $0x134] sm:$0xff]
  %v2489 = vld [vmem:[%s0 + $0x13c] sm:$0xff]
  %v2490 = vld [vmem:[%s0 + $0x144] sm:$0xff]
  %v2491 = vld [vmem:[%s0 + $0x14c] sm:$0xff]
  %v2492 = vld [vmem:[%s0 + $0x154] sm:$0xff]
  %v2493 = vld [vmem:[%s0 + $0x15c] sm:$0xff]
  %v2494 = vld [vmem:[%s0 + $0x164] sm:$0xff]
  %v2495 = vld [vmem:[%s0 + $0x16c] sm:$0xff]
  %v2496 = vld [vmem:[%s0 + $0x174] sm:$0xff]
  %v2497 = vld [vmem:[%s459] sm:$0xff]
  %v2498 = vld [vmem:[%s459 + $0x8] sm:$0xff]
  %v2499 = vld [vmem:[%s459 + $0x10] sm:$0xff]
  %v2500 = vld [vmem:[%s459 + $0x18] sm:$0xff]
  %v2501 = vld [vmem:[%s459 + $0x20] sm:$0xff]
  %v2502 = vld [vmem:[%s459 + $0x28] sm:$0xff]
  %v2503 = vld [vmem:[%s459 + $0x30] sm:$0xff]
  %v2504 = vld [vmem:[%s459 + $0x38] sm:$0xff]
  %v2505 = vld [vmem:[%s459 + $0x40] sm:$0xff]
  %v2506 = vld [vmem:[%s459 + $0x48] sm:$0xff]
  %v2507 = vld [vmem:[%s459 + $0x50] sm:$0xff]
  %v2508 = vld [vmem:[%s459 + $0x58] sm:$0xff]
  %v2509 = vld [vmem:[%s459 + $0x60] sm:$0xff]
  %v2510 = vld [vmem:[%s459 + $0x68] sm:$0xff]
  %v2511 = vld [vmem:[%s459 + $0x70] sm:$0xff]
  %v2512 = vld [vmem:[%s459 + $0x78] sm:$0xff]
  %2513 = vmatprep.subr.mxu0 0.0
  %2514 = vmatpush1.msra.mxu0 %v2497
  %2515 = vmatprep.subr.mxu0 0.0
  %2516 = vmatpush1.msra.mxu0 %v2498
  %2517 = vmatprep.subr.mxu0 0.0
  %2518 = vmatpush1.msra.mxu0 %v2499
  %2519 = vmatprep.subr.mxu0 0.0
  %2520 = vmatpush1.msra.mxu0 %v2500
  %2521 = vmatprep.subr.mxu0 0.0
  %2522 = vmatpush1.msra.mxu0 %v2501
  %2523 = vmatprep.subr.mxu0 0.0
  %2524 = vmatpush1.msra.mxu0 %v2502
  %2525 = vmatprep.subr.mxu0 0.0
  %2526 = vmatpush1.msra.mxu0 %v2503
  %2527 = vmatprep.subr.mxu0 0.0
  %2528 = vmatpush1.msra.mxu0 %v2504
  %2529 = vmatprep.subr.mxu0 0.0
  %2530 = vmatpush1.msra.mxu0 %v2505
  %2531 = vmatprep.subr.mxu0 0.0
  %2532 = vmatpush1.msra.mxu0 %v2506
  %2533 = vmatprep.subr.mxu0 0.0
  %2534 = vmatpush1.msra.mxu0 %v2507
  %2535 = vmatprep.subr.mxu0 0.0
  %2536 = vmatpush1.msra.mxu0 %v2508
  %2537 = vmatprep.subr.mxu0 0.0
  %2538 = vmatpush1.msra.mxu0 %v2509
  %2539 = vmatprep.subr.mxu0 0.0
  %2540 = vmatpush1.msra.mxu0 %v2510
  %2541 = vmatprep.subr.mxu0 0.0
  %2542 = vmatpush1.msra.mxu0 %v2511
  %2543 = vmatprep.subr.mxu0 0.0
  %2544 = vmatpush1.msra.mxu0 %v2512
  %2545 = vmatprep.subr.mxu0 0.0
  %2546 = vmatpush1.msra.mxu0 0.0
  %2547 = vmatprep.subr.mxu0 0.0
  %2548 = vmatpush1.msra.mxu0 0.0
  %2549 = vmatprep.subr.mxu0 0.0
  %2550 = vmatpush1.msra.mxu0 0.0
  %2551 = vmatprep.subr.mxu0 0.0
  %2552 = vmatpush1.msra.mxu0 0.0
  %2553 = vmatprep.subr.mxu0 0.0
  %2554 = vmatpush1.msra.mxu0 0.0
  %2555 = vmatprep.subr.mxu0 0.0
  %2556 = vmatpush1.msra.mxu0 0.0
  %2557 = vmatprep.subr.mxu0 0.0
  %2558 = vmatpush1.msra.mxu0 0.0
  %2559 = vmatprep.subr.mxu0 0.0
  %2560 = vmatpush1.msra.mxu0 0.0
  %2561 = vmatprep.subr.mxu0 0.0
  %2562 = vmatpush1.msra.mxu0 0.0
  %2563 = vmatprep.subr.mxu0 0.0
  %2564 = vmatpush1.msra.mxu0 0.0
  %2565 = vmatprep.subr.mxu0 0.0
  %2566 = vmatpush1.msra.mxu0 0.0
  %2567 = vmatprep.subr.mxu0 0.0
  %2568 = vmatpush1.msra.mxu0 0.0
  %2569 = vmatprep.subr.mxu0 0.0
  %2570 = vmatpush1.msra.mxu0 0.0
  %2571 = vmatprep.subr.mxu0 0.0
  %2572 = vmatpush1.msra.mxu0 0.0
  %2573 = vmatprep.subr.mxu0 0.0
  %2574 = vmatpush1.msra.mxu0 0.0
  %2575 = vmatprep.subr.mxu0 0.0
  %2576 = vmatpush1.msra.mxu0 0.0
  %2577 = vmatprep.mubr.f32.mxu0 0.0
  %2578 = vmatmul.mubr.f32.gmra.mrb[0].mxu0 %v2476
  %v2579 = vpop.f32.mrb[0].mxu0
  %v2580 = vadd.f32 0.0, %v2579
  %v2581 = vpop.f32.mrb[0].mxu0
  %2582 = vmatprep.mubr.f32.mxu0 0.0
  %2583 = vmatmul.mubr.f32.gmra.mrb[0].mxu0 %v2477
  %v2584 = vpop.f32.mrb[0].mxu0
  %v2585 = vadd.f32 0.0, %v2584
  %v2586 = vpop.f32.mrb[0].mxu0
  %2587 = vmatprep.mubr.f32.mxu0 0.0
  %2588 = vmatmul.mubr.f32.gmra.mrb[0].mxu0 %v2478
  %v2589 = vpop.f32.mrb[0].mxu0
  %v2590 = vadd.f32 0.0, %v2589
  %v2591 = vpop.f32.mrb[0].mxu0
  %2592 = vmatprep.mubr.f32.mxu0 0.0
  %2593 = vmatmul.mubr.f32.gmra.mrb[0].mxu0 %v2479
  %v2594 = vpop.f32.mrb[0].mxu0
  %v2595 = vadd.f32 0.0, %v2594
  %v2596 = vpop.f32.mrb[0].mxu0
  %2597 = vmatprep.mubr.f32.mxu0 0.0
  %2598 = vmatmul.mubr.f32.gmra.mrb[0].mxu0 %v2480
  %v2599 = vpop.f32.mrb[0].mxu0
  %v2600 = vadd.f32 0.0, %v2599
  %v2601 = vpop.f32.mrb[0].mxu0
  %2602 = vmatprep.mubr.f32.mxu0 0.0
  %2603 = vmatmul.mubr.f32.gmra.mrb[0].mxu0 %v2481
  %v2604 = vpop.f32.mrb[0].mxu0
  %v2605 = vadd.f32 0.0, %v2604
  %v2606 = vpop.f32.mrb[0].mxu0
  %2607 = vmatprep.mubr.f32.mxu0 0.0
  %2608 = vmatmul.mubr.f32.gmra.mrb[0].mxu0 %v2482
  %v2609 = vpop.f32.mrb[0].mxu0
  %v2610 = vadd.f32 0.0, %v2609
  %v2611 = vpop.f32.mrb[0].mxu0
  %2612 = vmatprep.mubr.f32.mxu0 0.0
  %2613 = vmatmul.mubr.f32.gmra.mrb[0].mxu0 %v2483
  %v2614 = vpop.f32.mrb[0].mxu0
  %v2615 = vadd.f32 0.0, %v2614
  %v2616 = vpop.f32.mrb[0].mxu0
  %2617 = vmatprep.mubr.f32.mxu0 0.0
  %2618 = vmatmul.mubr.f32.gmra.mrb[0].mxu0 %v2484
  %v2619 = vpop.f32.mrb[0].mxu0
  %v2620 = vadd.f32 0.0, %v2619
  %v2621 = vpop.f32.mrb[0].mxu0
  %2622 = vmatprep.mubr.f32.mxu0 0.0
  %2623 = vmatmul.mubr.f32.gmra.mrb[0].mxu0 %v2485
  %v2624 = vpop.f32.mrb[0].mxu0
  %v2625 = vadd.f32 0.0, %v2624
  %v2626 = vpop.f32.mrb[0].mxu0
  %2627 = vmatprep.mubr.f32.mxu0 0.0
  %2628 = vmatmul.mubr.f32.gmra.mrb[0].mxu0 %v2486
  %v2629 = vpop.f32.mrb[0].mxu0
  %v2630 = vadd.f32 0.0, %v2629
  %v2631 = vpop.f32.mrb[0].mxu0
  %2632 = vmatprep.mubr.f32.mxu0 0.0
  %2633 = vmatmul.mubr.f32.gmra.mrb[0].mxu0 %v2487
  %v2634 = vpop.f32.mrb[0].mxu0
  %v2635 = vadd.f32 0.0, %v2634
  %v2636 = vpop.f32.mrb[0].mxu0
  %2637 = vmatprep.mubr.f32.mxu0 0.0
  %2638 = vmatmul.mubr.f32.gmra.mrb[0].mxu0 %v2488
  %v2639 = vpop.f32.mrb[0].mxu0
  %v2640 = vadd.f32 0.0, %v2639
  %v2641 = vpop.f32.mrb[0].mxu0
  %2642 = vmatprep.mubr.f32.mxu0 0.0
  %2643 = vmatmul.mubr.f32.gmra.mrb[0].mxu0 %v2489
  %v2644 = vpop.f32.mrb[0].mxu0
  %v2645 = vadd.f32 0.0, %v2644
  %v2646 = vpop.f32.mrb[0].mxu0
  %2647 = vmatprep.mubr.f32.mxu0 0.0
  %2648 = vmatmul.mubr.f32.gmra.mrb[0].mxu0 %v2490
  %v2649 = vpop.f32.mrb[0].mxu0
  %v2650 = vadd.f32 0.0, %v2649
  %v2651 = vpop.f32.mrb[0].mxu0
  %2652 = vmatprep.mubr.f32.mxu0 0.0
  %2653 = vmatmul.mubr.f32.gmra.mrb[0].mxu0 %v2491
  %v2654 = vpop.f32.mrb[0].mxu0
  %v2655 = vadd.f32 0.0, %v2654
  %v2656 = vpop.f32.mrb[0].mxu0
  %2657 = vmatprep.mubr.f32.mxu0 0.0
  %2658 = vmatmul.mubr.f32.gmra.mrb[0].mxu0 %v2492
  %v2659 = vpop.f32.mrb[0].mxu0
  %v2660 = vadd.f32 0.0, %v2659
  %v2661 = vpop.f32.mrb[0].mxu0
  %2662 = vmatprep.mubr.f32.mxu0 0.0
  %2663 = vmatmul.mubr.f32.gmra.mrb[0].mxu0 %v2493
  %v2664 = vpop.f32.mrb[0].mxu0
  %v2665 = vadd.f32 0.0, %v2664
  %v2666 = vpop.f32.mrb[0].mxu0
  %2667 = vmatprep.mubr.f32.mxu0 0.0
  %2668 = vmatmul.mubr.f32.gmra.mrb[0].mxu0 %v2494
  %v2669 = vpop.f32.mrb[0].mxu0
  %v2670 = vadd.f32 0.0, %v2669
  %v2671 = vpop.f32.mrb[0].mxu0
  %2672 = vmatprep.mubr.f32.mxu0 0.0
  %2673 = vmatmul.mubr.f32.gmra.mrb[0].mxu0 %v2495
  %v2674 = vpop.f32.mrb[0].mxu0
  %v2675 = vadd.f32 0.0, %v2674
  %v2676 = vpop.f32.mrb[0].mxu0
  %2677 = vmatprep.mubr.f32.mxu0 0.0
  %2678 = vmatmul.mubr.f32.gmra.mrb[0].mxu0 %v2496
  %v2679 = vpop.f32.mrb[0].mxu0
  %v2680 = vadd.f32 0.0, %v2679
  %v2681 = vpop.f32.mrb[0].mxu0
  %2682 = vdwg.mxu0
  %v2683 = vadd.f32 %v2373, %v2580
  %v2684 = vadd.f32 %v2378, %v2585
  %v2685 = vadd.f32 %v2383, %v2590
  %v2686 = vadd.f32 %v2388, %v2595
  %v2687 = vadd.f32 %v2393, %v2600
  %v2688 = vadd.f32 %v2398, %v2605
  %v2689 = vadd.f32 %v2403, %v2610
  %v2690 = vadd.f32 %v2408, %v2615
  %v2691 = vadd.f32 %v2413, %v2620
  %v2692 = vadd.f32 %v2418, %v2625
  %v2693 = vadd.f32 %v2423, %v2630
  %v2694 = vadd.f32 %v2428, %v2635
  %v2695 = vadd.f32 %v2433, %v2640
  %v2696 = vadd.f32 %v2438, %v2645
  %v2697 = vadd.f32 %v2443, %v2650
  %v2698 = vadd.f32 %v2448, %v2655
  %v2699 = vadd.f32 %v2453, %v2660
  %v2700 = vadd.f32 %v2458, %v2665
  %v2701 = vadd.f32 %v2463, %v2670
  %v2702 = vadd.f32 %v2468, %v2675
  %v2703 = vadd.f32 %v2473, %v2680
  %v2704 = vld [vmem:[%s0 + $0xe0] sm:$0xff]
  %v2705 = vld [vmem:[%s0 + $0xe8] sm:$0xff]
  %v2706 = vld [vmem:[%s0 + $0xf0] sm:$0xff]
  %v2707 = vld [vmem:[%s0 + $0xf8] sm:$0xff]
  %v2708 = vld [vmem:[%s0 + $0x100] sm:$0xff]
  %v2709 = vld [vmem:[%s0 + $0x108] sm:$0xff]
  %v2710 = vld [vmem:[%s0 + $0x110] sm:$0xff]
  %v2711 = vld [vmem:[%s0 + $0x118] sm:$0xff]
  %v2712 = vld [vmem:[%s0 + $0x120] sm:$0xff]
  %v2713 = vld [vmem:[%s0 + $0x128] sm:$0xff]
  %v2714 = vld [vmem:[%s0 + $0x130] sm:$0xff]
  %v2715 = vld [vmem:[%s0 + $0x138] sm:$0xff]
  %v2716 = vld [vmem:[%s0 + $0x140] sm:$0xff]
  %v2717 = vld [vmem:[%s0 + $0x148] sm:$0xff]
  %v2718 = vld [vmem:[%s0 + $0x150] sm:$0xff]
  %v2719 = vld [vmem:[%s0 + $0x158] sm:$0xff]
  %v2720 = vld [vmem:[%s0 + $0x160] sm:$0xff]
  %v2721 = vld [vmem:[%s0 + $0x168] sm:$0xff]
  %v2722 = vld [vmem:[%s0 + $0x170] sm:$0xff]
  %v2723 = vld [vmem:[%s0 + $0x178] sm:$0xff]
  %v2724 = vld [vmem:[%s0 + $0x180] sm:$0xff]
  %v2725 = vld [vmem:[%s688] sm:$0xff]
  %v2726 = vld [vmem:[%s688 + $0x8] sm:$0xff]
  %v2727 = vld [vmem:[%s688 + $0x10] sm:$0xff]
  %v2728 = vld [vmem:[%s688 + $0x18] sm:$0xff]
  %v2729 = vld [vmem:[%s688 + $0x20] sm:$0xff]
  %v2730 = vld [vmem:[%s688 + $0x28] sm:$0xff]
  %v2731 = vld [vmem:[%s688 + $0x30] sm:$0xff]
  %v2732 = vld [vmem:[%s688 + $0x38] sm:$0xff]
  %v2733 = vld [vmem:[%s688 + $0x40] sm:$0xff]
  %v2734 = vld [vmem:[%s688 + $0x48] sm:$0xff]
  %v2735 = vld [vmem:[%s688 + $0x50] sm:$0xff]
  %v2736 = vld [vmem:[%s688 + $0x58] sm:$0xff]
  %v2737 = vld [vmem:[%s688 + $0x60] sm:$0xff]
  %v2738 = vld [vmem:[%s688 + $0x68] sm:$0xff]
  %v2739 = vld [vmem:[%s688 + $0x70] sm:$0xff]
  %v2740 = vld [vmem:[%s688 + $0x78] sm:$0xff]
  %2741 = vmatprep.subr.mxu0 0.0
  %2742 = vmatpush1.msra.mxu0 %v2725
  %2743 = vmatprep.subr.mxu0 0.0
  %2744 = vmatpush1.msra.mxu0 %v2726
  %2745 = vmatprep.subr.mxu0 0.0
  %2746 = vmatpush1.msra.mxu0 %v2727
  %2747 = vmatprep.subr.mxu0 0.0
  %2748 = vmatpush1.msra.mxu0 %v2728
  %2749 = vmatprep.subr.mxu0 0.0
  %2750 = vmatpush1.msra.mxu0 %v2729
  %2751 = vmatprep.subr.mxu0 0.0
  %2752 = vmatpush1.msra.mxu0 %v2730
  %2753 = vmatprep.subr.mxu0 0.0
  %2754 = vmatpush1.msra.mxu0 %v2731
  %2755 = vmatprep.subr.mxu0 0.0
  %2756 = vmatpush1.msra.mxu0 %v2732
  %2757 = vmatprep.subr.mxu0 0.0
  %2758 = vmatpush1.msra.mxu0 %v2733
  %2759 = vmatprep.subr.mxu0 0.0
  %2760 = vmatpush1.msra.mxu0 %v2734
  %2761 = vmatprep.subr.mxu0 0.0
  %2762 = vmatpush1.msra.mxu0 %v2735
  %2763 = vmatprep.subr.mxu0 0.0
  %2764 = vmatpush1.msra.mxu0 %v2736
  %2765 = vmatprep.subr.mxu0 0.0
  %2766 = vmatpush1.msra.mxu0 %v2737
  %2767 = vmatprep.subr.mxu0 0.0
  %2768 = vmatpush1.msra.mxu0 %v2738
  %2769 = vmatprep.subr.mxu0 0.0
  %2770 = vmatpush1.msra.mxu0 %v2739
  %2771 = vmatprep.subr.mxu0 0.0
  %2772 = vmatpush1.msra.mxu0 %v2740
  %2773 = vmatprep.subr.mxu0 0.0
  %2774 = vmatpush1.msra.mxu0 0.0
  %2775 = vmatprep.subr.mxu0 0.0
  %2776 = vmatpush1.msra.mxu0 0.0
  %2777 = vmatprep.subr.mxu0 0.0
  %2778 = vmatpush1.msra.mxu0 0.0
  %2779 = vmatprep.subr.mxu0 0.0
  %2780 = vmatpush1.msra.mxu0 0.0
  %2781 = vmatprep.subr.mxu0 0.0
  %2782 = vmatpush1.msra.mxu0 0.0
  %2783 = vmatprep.subr.mxu0 0.0
  %2784 = vmatpush1.msra.mxu0 0.0
  %2785 = vmatprep.subr.mxu0 0.0
  %2786 = vmatpush1.msra.mxu0 0.0
  %2787 = vmatprep.subr.mxu0 0.0
  %2788 = vmatpush1.msra.mxu0 0.0
  %2789 = vmatprep.subr.mxu0 0.0
  %2790 = vmatpush1.msra.mxu0 0.0
  %2791 = vmatprep.subr.mxu0 0.0
  %2792 = vmatpush1.msra.mxu0 0.0
  %2793 = vmatprep.subr.mxu0 0.0
  %2794 = vmatpush1.msra.mxu0 0.0
  %2795 = vmatprep.subr.mxu0 0.0
  %2796 = vmatpush1.msra.mxu0 0.0
  %2797 = vmatprep.subr.mxu0 0.0
  %2798 = vmatpush1.msra.mxu0 0.0
  %2799 = vmatprep.subr.mxu0 0.0
  %2800 = vmatpush1.msra.mxu0 0.0
  %2801 = vmatprep.subr.mxu0 0.0
  %2802 = vmatpush1.msra.mxu0 0.0
  %2803 = vmatprep.subr.mxu0 0.0
  %2804 = vmatpush1.msra.mxu0 0.0
  %2805 = vmatprep.mubr.f32.mxu0 0.0
  %2806 = vmatmul.mubr.f32.gmra.mrb[0].mxu0 %v2704
  %v2807 = vpop.f32.mrb[0].mxu0
  %v2808 = vadd.f32 0.0, %v2807
  %v2809 = vpop.f32.mrb[0].mxu0
  %2810 = vmatprep.mubr.f32.mxu0 0.0
  %2811 = vmatmul.mubr.f32.gmra.mrb[0].mxu0 %v2705
  %v2812 = vpop.f32.mrb[0].mxu0
  %v2813 = vadd.f32 0.0, %v2812
  %v2814 = vpop.f32.mrb[0].mxu0
  %2815 = vmatprep.mubr.f32.mxu0 0.0
  %2816 = vmatmul.mubr.f32.gmra.mrb[0].mxu0 %v2706
  %v2817 = vpop.f32.mrb[0].mxu0
  %v2818 = vadd.f32 0.0, %v2817
  %v2819 = vpop.f32.mrb[0].mxu0
  %2820 = vmatprep.mubr.f32.mxu0 0.0
  %2821 = vmatmul.mubr.f32.gmra.mrb[0].mxu0 %v2707
  %v2822 = vpop.f32.mrb[0].mxu0
  %v2823 = vadd.f32 0.0, %v2822
  %v2824 = vpop.f32.mrb[0].mxu0
  %2825 = vmatprep.mubr.f32.mxu0 0.0
  %2826 = vmatmul.mubr.f32.gmra.mrb[0].mxu0 %v2708
  %v2827 = vpop.f32.mrb[0].mxu0
  %v2828 = vadd.f32 0.0, %v2827
  %v2829 = vpop.f32.mrb[0].mxu0
  %2830 = vmatprep.mubr.f32.mxu0 0.0
  %2831 = vmatmul.mubr.f32.gmra.mrb[0].mxu0 %v2709
  %v2832 = vpop.f32.mrb[0].mxu0
  %v2833 = vadd.f32 0.0, %v2832
  %v2834 = vpop.f32.mrb[0].mxu0
  %2835 = vmatprep.mubr.f32.mxu0 0.0
  %2836 = vmatmul.mubr.f32.gmra.mrb[0].mxu0 %v2710
  %v2837 = vpop.f32.mrb[0].mxu0
  %v2838 = vadd.f32 0.0, %v2837
  %v2839 = vpop.f32.mrb[0].mxu0
  %2840 = vmatprep.mubr.f32.mxu0 0.0
  %2841 = vmatmul.mubr.f32.gmra.mrb[0].mxu0 %v2711
  %v2842 = vpop.f32.mrb[0].mxu0
  %v2843 = vadd.f32 0.0, %v2842
  %v2844 = vpop.f32.mrb[0].mxu0
  %2845 = vmatprep.mubr.f32.mxu0 0.0
  %2846 = vmatmul.mubr.f32.gmra.mrb[0].mxu0 %v2712
  %v2847 = vpop.f32.mrb[0].mxu0
  %v2848 = vadd.f32 0.0, %v2847
  %v2849 = vpop.f32.mrb[0].mxu0
  %2850 = vmatprep.mubr.f32.mxu0 0.0
  %2851 = vmatmul.mubr.f32.gmra.mrb[0].mxu0 %v2713
  %v2852 = vpop.f32.mrb[0].mxu0
  %v2853 = vadd.f32 0.0, %v2852
  %v2854 = vpop.f32.mrb[0].mxu0
  %2855 = vmatprep.mubr.f32.mxu0 0.0
  %2856 = vmatmul.mubr.f32.gmra.mrb[0].mxu0 %v2714
  %v2857 = vpop.f32.mrb[0].mxu0
  %v2858 = vadd.f32 0.0, %v2857
  %v2859 = vpop.f32.mrb[0].mxu0
  %2860 = vmatprep.mubr.f32.mxu0 0.0
  %2861 = vmatmul.mubr.f32.gmra.mrb[0].mxu0 %v2715
  %v2862 = vpop.f32.mrb[0].mxu0
  %v2863 = vadd.f32 0.0, %v2862
  %v2864 = vpop.f32.mrb[0].mxu0
  %2865 = vmatprep.mubr.f32.mxu0 0.0
  %2866 = vmatmul.mubr.f32.gmra.mrb[0].mxu0 %v2716
  %v2867 = vpop.f32.mrb[0].mxu0
  %v2868 = vadd.f32 0.0, %v2867
  %v2869 = vpop.f32.mrb[0].mxu0
  %2870 = vmatprep.mubr.f32.mxu0 0.0
  %2871 = vmatmul.mubr.f32.gmra.mrb[0].mxu0 %v2717
  %v2872 = vpop.f32.mrb[0].mxu0
  %v2873 = vadd.f32 0.0, %v2872
  %v2874 = vpop.f32.mrb[0].mxu0
  %2875 = vmatprep.mubr.f32.mxu0 0.0
  %2876 = vmatmul.mubr.f32.gmra.mrb[0].mxu0 %v2718
  %v2877 = vpop.f32.mrb[0].mxu0
  %v2878 = vadd.f32 0.0, %v2877
  %v2879 = vpop.f32.mrb[0].mxu0
  %2880 = vmatprep.mubr.f32.mxu0 0.0
  %2881 = vmatmul.mubr.f32.gmra.mrb[0].mxu0 %v2719
  %v2882 = vpop.f32.mrb[0].mxu0
  %v2883 = vadd.f32 0.0, %v2882
  %v2884 = vpop.f32.mrb[0].mxu0
  %2885 = vmatprep.mubr.f32.mxu0 0.0
  %2886 = vmatmul.mubr.f32.gmra.mrb[0].mxu0 %v2720
  %v2887 = vpop.f32.mrb[0].mxu0
  %v2888 = vadd.f32 0.0, %v2887
  %v2889 = vpop.f32.mrb[0].mxu0
  %2890 = vmatprep.mubr.f32.mxu0 0.0
  %2891 = vmatmul.mubr.f32.gmra.mrb[0].mxu0 %v2721
  %v2892 = vpop.f32.mrb[0].mxu0
  %v2893 = vadd.f32 0.0, %v2892
  %v2894 = vpop.f32.mrb[0].mxu0
  %2895 = vmatprep.mubr.f32.mxu0 0.0
  %2896 = vmatmul.mubr.f32.gmra.mrb[0].mxu0 %v2722
  %v2897 = vpop.f32.mrb[0].mxu0
  %v2898 = vadd.f32 0.0, %v2897
  %v2899 = vpop.f32.mrb[0].mxu0
  %2900 = vmatprep.mubr.f32.mxu0 0.0
  %2901 = vmatmul.mubr.f32.gmra.mrb[0].mxu0 %v2723
  %v2902 = vpop.f32.mrb[0].mxu0
  %v2903 = vadd.f32 0.0, %v2902
  %v2904 = vpop.f32.mrb[0].mxu0
  %2905 = vmatprep.mubr.f32.mxu0 0.0
  %2906 = vmatmul.mubr.f32.gmra.mrb[0].mxu0 %v2724
  %v2907 = vpop.f32.mrb[0].mxu0
  %v2908 = vadd.f32 0.0, %v2907
  %v2909 = vpop.f32.mrb[0].mxu0
  %2910 = vdwg.mxu0
  %v2911 = vadd.f32 %v2683, %v2808
  %v2912 = vadd.f32 %v2684, %v2813
  %v2913 = vadd.f32 %v2685, %v2818
  %v2914 = vadd.f32 %v2686, %v2823
  %v2915 = vadd.f32 %v2687, %v2828
  %v2916 = vadd.f32 %v2688, %v2833
  %v2917 = vadd.f32 %v2689, %v2838
  %v2918 = vadd.f32 %v2690, %v2843
  %v2919 = vadd.f32 %v2691, %v2848
  %v2920 = vadd.f32 %v2692, %v2853
  %v2921 = vadd.f32 %v2693, %v2858
  %v2922 = vadd.f32 %v2694, %v2863
  %v2923 = vadd.f32 %v2695, %v2868
  %v2924 = vadd.f32 %v2696, %v2873
  %v2925 = vadd.f32 %v2697, %v2878
  %v2926 = vadd.f32 %v2698, %v2883
  %v2927 = vadd.f32 %v2699, %v2888
  %v2928 = vadd.f32 %v2700, %v2893
  %v2929 = vadd.f32 %v2701, %v2898
  %v2930 = vadd.f32 %v2702, %v2903
  %v2931 = vadd.f32 %v2703, %v2908
  %v2932 = vld [vmem:[%s0 + $0xe1] sm:$0xff]
  %v2933 = vld [vmem:[%s0 + $0xe9] sm:$0xff]
  %v2934 = vld [vmem:[%s0 + $0xf1] sm:$0xff]
  %v2935 = vld [vmem:[%s0 + $0xf9] sm:$0xff]
  %v2936 = vld [vmem:[%s0 + $0x101] sm:$0xff]
  %v2937 = vld [vmem:[%s0 + $0x109] sm:$0xff]
  %v2938 = vld [vmem:[%s0 + $0x111] sm:$0xff]
  %v2939 = vld [vmem:[%s0 + $0x119] sm:$0xff]
  %v2940 = vld [vmem:[%s0 + $0x121] sm:$0xff]
  %v2941 = vld [vmem:[%s0 + $0x129] sm:$0xff]
  %v2942 = vld [vmem:[%s0 + $0x131] sm:$0xff]
  %v2943 = vld [vmem:[%s0 + $0x139] sm:$0xff]
  %v2944 = vld [vmem:[%s0 + $0x141] sm:$0xff]
  %v2945 = vld [vmem:[%s0 + $0x149] sm:$0xff]
  %v2946 = vld [vmem:[%s0 + $0x151] sm:$0xff]
  %v2947 = vld [vmem:[%s0 + $0x159] sm:$0xff]
  %v2948 = vld [vmem:[%s0 + $0x161] sm:$0xff]
  %v2949 = vld [vmem:[%s0 + $0x169] sm:$0xff]
  %v2950 = vld [vmem:[%s0 + $0x171] sm:$0xff]
  %v2951 = vld [vmem:[%s0 + $0x179] sm:$0xff]
  %v2952 = vld [vmem:[%s0 + $0x181] sm:$0xff]
  %v2953 = vld [vmem:[%s917] sm:$0xff]
  %v2954 = vld [vmem:[%s917 + $0x8] sm:$0xff]
  %v2955 = vld [vmem:[%s917 + $0x10] sm:$0xff]
  %v2956 = vld [vmem:[%s917 + $0x18] sm:$0xff]
  %v2957 = vld [vmem:[%s917 + $0x20] sm:$0xff]
  %v2958 = vld [vmem:[%s917 + $0x28] sm:$0xff]
  %v2959 = vld [vmem:[%s917 + $0x30] sm:$0xff]
  %v2960 = vld [vmem:[%s917 + $0x38] sm:$0xff]
  %v2961 = vld [vmem:[%s917 + $0x40] sm:$0xff]
  %v2962 = vld [vmem:[%s917 + $0x48] sm:$0xff]
  %v2963 = vld [vmem:[%s917 + $0x50] sm:$0xff]
  %v2964 = vld [vmem:[%s917 + $0x58] sm:$0xff]
  %v2965 = vld [vmem:[%s917 + $0x60] sm:$0xff]
  %v2966 = vld [vmem:[%s917 + $0x68] sm:$0xff]
  %v2967 = vld [vmem:[%s917 + $0x70] sm:$0xff]
  %v2968 = vld [vmem:[%s917 + $0x78] sm:$0xff]
  %2969 = vmatprep.subr.mxu0 0.0
  %2970 = vmatpush1.msra.mxu0 %v2953
  %2971 = vmatprep.subr.mxu0 0.0
  %2972 = vmatpush1.msra.mxu0 %v2954
  %2973 = vmatprep.subr.mxu0 0.0
  %2974 = vmatpush1.msra.mxu0 %v2955
  %2975 = vmatprep.subr.mxu0 0.0
  %2976 = vmatpush1.msra.mxu0 %v2956
  %2977 = vmatprep.subr.mxu0 0.0
  %2978 = vmatpush1.msra.mxu0 %v2957
  %2979 = vmatprep.subr.mxu0 0.0
  %2980 = vmatpush1.msra.mxu0 %v2958
  %2981 = vmatprep.subr.mxu0 0.0
  %2982 = vmatpush1.msra.mxu0 %v2959
  %2983 = vmatprep.subr.mxu0 0.0
  %2984 = vmatpush1.msra.mxu0 %v2960
  %2985 = vmatprep.subr.mxu0 0.0
  %2986 = vmatpush1.msra.mxu0 %v2961
  %2987 = vmatprep.subr.mxu0 0.0
  %2988 = vmatpush1.msra.mxu0 %v2962
  %2989 = vmatprep.subr.mxu0 0.0
  %2990 = vmatpush1.msra.mxu0 %v2963
  %2991 = vmatprep.subr.mxu0 0.0
  %2992 = vmatpush1.msra.mxu0 %v2964
  %2993 = vmatprep.subr.mxu0 0.0
  %2994 = vmatpush1.msra.mxu0 %v2965
  %2995 = vmatprep.subr.mxu0 0.0
  %2996 = vmatpush1.msra.mxu0 %v2966
  %2997 = vmatprep.subr.mxu0 0.0
  %2998 = vmatpush1.msra.mxu0 %v2967
  %2999 = vmatprep.subr.mxu0 0.0
  %3000 = vmatpush1.msra.mxu0 %v2968
  %3001 = vmatprep.subr.mxu0 0.0
  %3002 = vmatpush1.msra.mxu0 0.0
  %3003 = vmatprep.subr.mxu0 0.0
  %3004 = vmatpush1.msra.mxu0 0.0
  %3005 = vmatprep.subr.mxu0 0.0
  %3006 = vmatpush1.msra.mxu0 0.0
  %3007 = vmatprep.subr.mxu0 0.0
  %3008 = vmatpush1.msra.mxu0 0.0
  %3009 = vmatprep.subr.mxu0 0.0
  %3010 = vmatpush1.msra.mxu0 0.0
  %3011 = vmatprep.subr.mxu0 0.0
  %3012 = vmatpush1.msra.mxu0 0.0
  %3013 = vmatprep.subr.mxu0 0.0
  %3014 = vmatpush1.msra.mxu0 0.0
  %3015 = vmatprep.subr.mxu0 0.0
  %3016 = vmatpush1.msra.mxu0 0.0
  %3017 = vmatprep.subr.mxu0 0.0
  %3018 = vmatpush1.msra.mxu0 0.0
  %3019 = vmatprep.subr.mxu0 0.0
  %3020 = vmatpush1.msra.mxu0 0.0
  %3021 = vmatprep.subr.mxu0 0.0
  %3022 = vmatpush1.msra.mxu0 0.0
  %3023 = vmatprep.subr.mxu0 0.0
  %3024 = vmatpush1.msra.mxu0 0.0
  %3025 = vmatprep.subr.mxu0 0.0
  %3026 = vmatpush1.msra.mxu0 0.0
  %3027 = vmatprep.subr.mxu0 0.0
  %3028 = vmatpush1.msra.mxu0 0.0
  %3029 = vmatprep.subr.mxu0 0.0
  %3030 = vmatpush1.msra.mxu0 0.0
  %3031 = vmatprep.subr.mxu0 0.0
  %3032 = vmatpush1.msra.mxu0 0.0
  %3033 = vmatprep.mubr.f32.mxu0 0.0
  %3034 = vmatmul.mubr.f32.gmra.mrb[0].mxu0 %v2932
  %v3035 = vpop.f32.mrb[0].mxu0
  %v3036 = vadd.f32 0.0, %v3035
  %v3037 = vpop.f32.mrb[0].mxu0
  %3038 = vmatprep.mubr.f32.mxu0 0.0
  %3039 = vmatmul.mubr.f32.gmra.mrb[0].mxu0 %v2933
  %v3040 = vpop.f32.mrb[0].mxu0
  %v3041 = vadd.f32 0.0, %v3040
  %v3042 = vpop.f32.mrb[0].mxu0
  %3043 = vmatprep.mubr.f32.mxu0 0.0
  %3044 = vmatmul.mubr.f32.gmra.mrb[0].mxu0 %v2934
  %v3045 = vpop.f32.mrb[0].mxu0
  %v3046 = vadd.f32 0.0, %v3045
  %v3047 = vpop.f32.mrb[0].mxu0
  %3048 = vmatprep.mubr.f32.mxu0 0.0
  %3049 = vmatmul.mubr.f32.gmra.mrb[0].mxu0 %v2935
  %v3050 = vpop.f32.mrb[0].mxu0
  %v3051 = vadd.f32 0.0, %v3050
  %v3052 = vpop.f32.mrb[0].mxu0
  %3053 = vmatprep.mubr.f32.mxu0 0.0
  %3054 = vmatmul.mubr.f32.gmra.mrb[0].mxu0 %v2936
  %v3055 = vpop.f32.mrb[0].mxu0
  %v3056 = vadd.f32 0.0, %v3055
  %v3057 = vpop.f32.mrb[0].mxu0
  %3058 = vmatprep.mubr.f32.mxu0 0.0
  %3059 = vmatmul.mubr.f32.gmra.mrb[0].mxu0 %v2937
  %v3060 = vpop.f32.mrb[0].mxu0
  %v3061 = vadd.f32 0.0, %v3060
  %v3062 = vpop.f32.mrb[0].mxu0
  %3063 = vmatprep.mubr.f32.mxu0 0.0
  %3064 = vmatmul.mubr.f32.gmra.mrb[0].mxu0 %v2938
  %v3065 = vpop.f32.mrb[0].mxu0
  %v3066 = vadd.f32 0.0, %v3065
  %v3067 = vpop.f32.mrb[0].mxu0
  %3068 = vmatprep.mubr.f32.mxu0 0.0
  %3069 = vmatmul.mubr.f32.gmra.mrb[0].mxu0 %v2939
  %v3070 = vpop.f32.mrb[0].mxu0
  %v3071 = vadd.f32 0.0, %v3070
  %v3072 = vpop.f32.mrb[0].mxu0
  %3073 = vmatprep.mubr.f32.mxu0 0.0
  %3074 = vmatmul.mubr.f32.gmra.mrb[0].mxu0 %v2940
  %v3075 = vpop.f32.mrb[0].mxu0
  %v3076 = vadd.f32 0.0, %v3075
  %v3077 = vpop.f32.mrb[0].mxu0
  %3078 = vmatprep.mubr.f32.mxu0 0.0
  %3079 = vmatmul.mubr.f32.gmra.mrb[0].mxu0 %v2941
  %v3080 = vpop.f32.mrb[0].mxu0
  %v3081 = vadd.f32 0.0, %v3080
  %v3082 = vpop.f32.mrb[0].mxu0
  %3083 = vmatprep.mubr.f32.mxu0 0.0
  %3084 = vmatmul.mubr.f32.gmra.mrb[0].mxu0 %v2942
  %v3085 = vpop.f32.mrb[0].mxu0
  %v3086 = vadd.f32 0.0, %v3085
  %v3087 = vpop.f32.mrb[0].mxu0
  %3088 = vmatprep.mubr.f32.mxu0 0.0
  %3089 = vmatmul.mubr.f32.gmra.mrb[0].mxu0 %v2943
  %v3090 = vpop.f32.mrb[0].mxu0
  %v3091 = vadd.f32 0.0, %v3090
  %v3092 = vpop.f32.mrb[0].mxu0
  %3093 = vmatprep.mubr.f32.mxu0 0.0
  %3094 = vmatmul.mubr.f32.gmra.mrb[0].mxu0 %v2944
  %v3095 = vpop.f32.mrb[0].mxu0
  %v3096 = vadd.f32 0.0, %v3095
  %v3097 = vpop.f32.mrb[0].mxu0
  %3098 = vmatprep.mubr.f32.mxu0 0.0
  %3099 = vmatmul.mubr.f32.gmra.mrb[0].mxu0 %v2945
  %v3100 = vpop.f32.mrb[0].mxu0
  %v3101 = vadd.f32 0.0, %v3100
  %v3102 = vpop.f32.mrb[0].mxu0
  %3103 = vmatprep.mubr.f32.mxu0 0.0
  %3104 = vmatmul.mubr.f32.gmra.mrb[0].mxu0 %v2946
  %v3105 = vpop.f32.mrb[0].mxu0
  %v3106 = vadd.f32 0.0, %v3105
  %v3107 = vpop.f32.mrb[0].mxu0
  %3108 = vmatprep.mubr.f32.mxu0 0.0
  %3109 = vmatmul.mubr.f32.gmra.mrb[0].mxu0 %v2947
  %v3110 = vpop.f32.mrb[0].mxu0
  %v3111 = vadd.f32 0.0, %v3110
  %v3112 = vpop.f32.mrb[0].mxu0
  %3113 = vmatprep.mubr.f32.mxu0 0.0
  %3114 = vmatmul.mubr.f32.gmra.mrb[0].mxu0 %v2948
  %v3115 = vpop.f32.mrb[0].mxu0
  %v3116 = vadd.f32 0.0, %v3115
  %v3117 = vpop.f32.mrb[0].mxu0
  %3118 = vmatprep.mubr.f32.mxu0 0.0
  %3119 = vmatmul.mubr.f32.gmra.mrb[0].mxu0 %v2949
  %v3120 = vpop.f32.mrb[0].mxu0
  %v3121 = vadd.f32 0.0, %v3120
  %v3122 = vpop.f32.mrb[0].mxu0
  %3123 = vmatprep.mubr.f32.mxu0 0.0
  %3124 = vmatmul.mubr.f32.gmra.mrb[0].mxu0 %v2950
  %v3125 = vpop.f32.mrb[0].mxu0
  %v3126 = vadd.f32 0.0, %v3125
  %v3127 = vpop.f32.mrb[0].mxu0
  %3128 = vmatprep.mubr.f32.mxu0 0.0
  %3129 = vmatmul.mubr.f32.gmra.mrb[0].mxu0 %v2951
  %v3130 = vpop.f32.mrb[0].mxu0
  %v3131 = vadd.f32 0.0, %v3130
  %v3132 = vpop.f32.mrb[0].mxu0
  %3133 = vmatprep.mubr.f32.mxu0 0.0
  %3134 = vmatmul.mubr.f32.gmra.mrb[0].mxu0 %v2952
  %v3135 = vpop.f32.mrb[0].mxu0
  %v3136 = vadd.f32 0.0, %v3135
  %v3137 = vpop.f32.mrb[0].mxu0
  %3138 = vdwg.mxu0
  %v3139 = vadd.f32 %v2911, %v3036
  %v3140 = vadd.f32 %v2912, %v3041
  %v3141 = vadd.f32 %v2913, %v3046
  %v3142 = vadd.f32 %v2914, %v3051
  %v3143 = vadd.f32 %v2915, %v3056
  %v3144 = vadd.f32 %v2916, %v3061
  %v3145 = vadd.f32 %v2917, %v3066
  %v3146 = vadd.f32 %v2918, %v3071
  %v3147 = vadd.f32 %v2919, %v3076
  %v3148 = vadd.f32 %v2920, %v3081
  %v3149 = vadd.f32 %v2921, %v3086
  %v3150 = vadd.f32 %v2922, %v3091
  %v3151 = vadd.f32 %v2923, %v3096
  %v3152 = vadd.f32 %v2924, %v3101
  %v3153 = vadd.f32 %v2925, %v3106
  %v3154 = vadd.f32 %v2926, %v3111
  %v3155 = vadd.f32 %v2927, %v3116
  %v3156 = vadd.f32 %v2928, %v3121
  %v3157 = vadd.f32 %v2929, %v3126
  %v3158 = vadd.f32 %v2930, %v3131
  %v3159 = vadd.f32 %v2931, %v3136
  %v3160 = vld [vmem:[%s0 + $0xe2] sm:$0xff]
  %v3161 = vld [vmem:[%s0 + $0xea] sm:$0xff]
  %v3162 = vld [vmem:[%s0 + $0xf2] sm:$0xff]
  %v3163 = vld [vmem:[%s0 + $0xfa] sm:$0xff]
  %v3164 = vld [vmem:[%s0 + $0x102] sm:$0xff]
  %v3165 = vld [vmem:[%s0 + $0x10a] sm:$0xff]
  %v3166 = vld [vmem:[%s0 + $0x112] sm:$0xff]
  %v3167 = vld [vmem:[%s0 + $0x11a] sm:$0xff]
  %v3168 = vld [vmem:[%s0 + $0x122] sm:$0xff]
  %v3169 = vld [vmem:[%s0 + $0x12a] sm:$0xff]
  %v3170 = vld [vmem:[%s0 + $0x132] sm:$0xff]
  %v3171 = vld [vmem:[%s0 + $0x13a] sm:$0xff]
  %v3172 = vld [vmem:[%s0 + $0x142] sm:$0xff]
  %v3173 = vld [vmem:[%s0 + $0x14a] sm:$0xff]
  %v3174 = vld [vmem:[%s0 + $0x152] sm:$0xff]
  %v3175 = vld [vmem:[%s0 + $0x15a] sm:$0xff]
  %v3176 = vld [vmem:[%s0 + $0x162] sm:$0xff]
  %v3177 = vld [vmem:[%s0 + $0x16a] sm:$0xff]
  %v3178 = vld [vmem:[%s0 + $0x172] sm:$0xff]
  %v3179 = vld [vmem:[%s0 + $0x17a] sm:$0xff]
  %v3180 = vld [vmem:[%s0 + $0x182] sm:$0xff]
  %v3181 = vld [vmem:[%s1146] sm:$0xff]
  %v3182 = vld [vmem:[%s1146 + $0x8] sm:$0xff]
  %v3183 = vld [vmem:[%s1146 + $0x10] sm:$0xff]
  %v3184 = vld [vmem:[%s1146 + $0x18] sm:$0xff]
  %v3185 = vld [vmem:[%s1146 + $0x20] sm:$0xff]
  %v3186 = vld [vmem:[%s1146 + $0x28] sm:$0xff]
  %v3187 = vld [vmem:[%s1146 + $0x30] sm:$0xff]
  %v3188 = vld [vmem:[%s1146 + $0x38] sm:$0xff]
  %v3189 = vld [vmem:[%s1146 + $0x40] sm:$0xff]
  %v3190 = vld [vmem:[%s1146 + $0x48] sm:$0xff]
  %v3191 = vld [vmem:[%s1146 + $0x50] sm:$0xff]
  %v3192 = vld [vmem:[%s1146 + $0x58] sm:$0xff]
  %v3193 = vld [vmem:[%s1146 + $0x60] sm:$0xff]
  %v3194 = vld [vmem:[%s1146 + $0x68] sm:$0xff]
  %v3195 = vld [vmem:[%s1146 + $0x70] sm:$0xff]
  %v3196 = vld [vmem:[%s1146 + $0x78] sm:$0xff]
  %3197 = vmatprep.subr.mxu0 0.0
  %3198 = vmatpush1.msra.mxu0 %v3181
  %3199 = vmatprep.subr.mxu0 0.0
  %3200 = vmatpush1.msra.mxu0 %v3182
  %3201 = vmatprep.subr.mxu0 0.0
  %3202 = vmatpush1.msra.mxu0 %v3183
  %3203 = vmatprep.subr.mxu0 0.0
  %3204 = vmatpush1.msra.mxu0 %v3184
  %3205 = vmatprep.subr.mxu0 0.0
  %3206 = vmatpush1.msra.mxu0 %v3185
  %3207 = vmatprep.subr.mxu0 0.0
  %3208 = vmatpush1.msra.mxu0 %v3186
  %3209 = vmatprep.subr.mxu0 0.0
  %3210 = vmatpush1.msra.mxu0 %v3187
  %3211 = vmatprep.subr.mxu0 0.0
  %3212 = vmatpush1.msra.mxu0 %v3188
  %3213 = vmatprep.subr.mxu0 0.0
  %3214 = vmatpush1.msra.mxu0 %v3189
  %3215 = vmatprep.subr.mxu0 0.0
  %3216 = vmatpush1.msra.mxu0 %v3190
  %3217 = vmatprep.subr.mxu0 0.0
  %3218 = vmatpush1.msra.mxu0 %v3191
  %3219 = vmatprep.subr.mxu0 0.0
  %3220 = vmatpush1.msra.mxu0 %v3192
  %3221 = vmatprep.subr.mxu0 0.0
  %3222 = vmatpush1.msra.mxu0 %v3193
  %3223 = vmatprep.subr.mxu0 0.0
  %3224 = vmatpush1.msra.mxu0 %v3194
  %3225 = vmatprep.subr.mxu0 0.0
  %3226 = vmatpush1.msra.mxu0 %v3195
  %3227 = vmatprep.subr.mxu0 0.0
  %3228 = vmatpush1.msra.mxu0 %v3196
  %3229 = vmatprep.subr.mxu0 0.0
  %3230 = vmatpush1.msra.mxu0 0.0
  %3231 = vmatprep.subr.mxu0 0.0
  %3232 = vmatpush1.msra.mxu0 0.0
  %3233 = vmatprep.subr.mxu0 0.0
  %3234 = vmatpush1.msra.mxu0 0.0
  %3235 = vmatprep.subr.mxu0 0.0
  %3236 = vmatpush1.msra.mxu0 0.0
  %3237 = vmatprep.subr.mxu0 0.0
  %3238 = vmatpush1.msra.mxu0 0.0
  %3239 = vmatprep.subr.mxu0 0.0
  %3240 = vmatpush1.msra.mxu0 0.0
  %3241 = vmatprep.subr.mxu0 0.0
  %3242 = vmatpush1.msra.mxu0 0.0
  %3243 = vmatprep.subr.mxu0 0.0
  %3244 = vmatpush1.msra.mxu0 0.0
  %3245 = vmatprep.subr.mxu0 0.0
  %3246 = vmatpush1.msra.mxu0 0.0
  %3247 = vmatprep.subr.mxu0 0.0
  %3248 = vmatpush1.msra.mxu0 0.0
  %3249 = vmatprep.subr.mxu0 0.0
  %3250 = vmatpush1.msra.mxu0 0.0
  %3251 = vmatprep.subr.mxu0 0.0
  %3252 = vmatpush1.msra.mxu0 0.0
  %3253 = vmatprep.subr.mxu0 0.0
  %3254 = vmatpush1.msra.mxu0 0.0
  %3255 = vmatprep.subr.mxu0 0.0
  %3256 = vmatpush1.msra.mxu0 0.0
  %3257 = vmatprep.subr.mxu0 0.0
  %3258 = vmatpush1.msra.mxu0 0.0
  %3259 = vmatprep.subr.mxu0 0.0
  %3260 = vmatpush1.msra.mxu0 0.0
  %3261 = vmatprep.mubr.f32.mxu0 0.0
  %3262 = vmatmul.mubr.f32.gmra.mrb[0].mxu0 %v3160
  %v3263 = vpop.f32.mrb[0].mxu0
  %v3264 = vadd.f32 0.0, %v3263
  %v3265 = vpop.f32.mrb[0].mxu0
  %3266 = vmatprep.mubr.f32.mxu0 0.0
  %3267 = vmatmul.mubr.f32.gmra.mrb[0].mxu0 %v3161
  %v3268 = vpop.f32.mrb[0].mxu0
  %v3269 = vadd.f32 0.0, %v3268
  %v3270 = vpop.f32.mrb[0].mxu0
  %3271 = vmatprep.mubr.f32.mxu0 0.0
  %3272 = vmatmul.mubr.f32.gmra.mrb[0].mxu0 %v3162
  %v3273 = vpop.f32.mrb[0].mxu0
  %v3274 = vadd.f32 0.0, %v3273
  %v3275 = vpop.f32.mrb[0].mxu0
  %3276 = vmatprep.mubr.f32.mxu0 0.0
  %3277 = vmatmul.mubr.f32.gmra.mrb[0].mxu0 %v3163
  %v3278 = vpop.f32.mrb[0].mxu0
  %v3279 = vadd.f32 0.0, %v3278
  %v3280 = vpop.f32.mrb[0].mxu0
  %3281 = vmatprep.mubr.f32.mxu0 0.0
  %3282 = vmatmul.mubr.f32.gmra.mrb[0].mxu0 %v3164
  %v3283 = vpop.f32.mrb[0].mxu0
  %v3284 = vadd.f32 0.0, %v3283
  %v3285 = vpop.f32.mrb[0].mxu0
  %3286 = vmatprep.mubr.f32.mxu0 0.0
  %3287 = vmatmul.mubr.f32.gmra.mrb[0].mxu0 %v3165
  %v3288 = vpop.f32.mrb[0].mxu0
  %v3289 = vadd.f32 0.0, %v3288
  %v3290 = vpop.f32.mrb[0].mxu0
  %3291 = vmatprep.mubr.f32.mxu0 0.0
  %3292 = vmatmul.mubr.f32.gmra.mrb[0].mxu0 %v3166
  %v3293 = vpop.f32.mrb[0].mxu0
  %v3294 = vadd.f32 0.0, %v3293
  %v3295 = vpop.f32.mrb[0].mxu0
  %3296 = vmatprep.mubr.f32.mxu0 0.0
  %3297 = vmatmul.mubr.f32.gmra.mrb[0].mxu0 %v3167
  %v3298 = vpop.f32.mrb[0].mxu0
  %v3299 = vadd.f32 0.0, %v3298
  %v3300 = vpop.f32.mrb[0].mxu0
  %3301 = vmatprep.mubr.f32.mxu0 0.0
  %3302 = vmatmul.mubr.f32.gmra.mrb[0].mxu0 %v3168
  %v3303 = vpop.f32.mrb[0].mxu0
  %v3304 = vadd.f32 0.0, %v3303
  %v3305 = vpop.f32.mrb[0].mxu0
  %3306 = vmatprep.mubr.f32.mxu0 0.0
  %3307 = vmatmul.mubr.f32.gmra.mrb[0].mxu0 %v3169
  %v3308 = vpop.f32.mrb[0].mxu0
  %v3309 = vadd.f32 0.0, %v3308
  %v3310 = vpop.f32.mrb[0].mxu0
  %3311 = vmatprep.mubr.f32.mxu0 0.0
  %3312 = vmatmul.mubr.f32.gmra.mrb[0].mxu0 %v3170
  %v3313 = vpop.f32.mrb[0].mxu0
  %v3314 = vadd.f32 0.0, %v3313
  %v3315 = vpop.f32.mrb[0].mxu0
  %3316 = vmatprep.mubr.f32.mxu0 0.0
  %3317 = vmatmul.mubr.f32.gmra.mrb[0].mxu0 %v3171
  %v3318 = vpop.f32.mrb[0].mxu0
  %v3319 = vadd.f32 0.0, %v3318
  %v3320 = vpop.f32.mrb[0].mxu0
  %3321 = vmatprep.mubr.f32.mxu0 0.0
  %3322 = vmatmul.mubr.f32.gmra.mrb[0].mxu0 %v3172
  %v3323 = vpop.f32.mrb[0].mxu0
  %v3324 = vadd.f32 0.0, %v3323
  %v3325 = vpop.f32.mrb[0].mxu0
  %3326 = vmatprep.mubr.f32.mxu0 0.0
  %3327 = vmatmul.mubr.f32.gmra.mrb[0].mxu0 %v3173
  %v3328 = vpop.f32.mrb[0].mxu0
  %v3329 = vadd.f32 0.0, %v3328
  %v3330 = vpop.f32.mrb[0].mxu0
  %3331 = vmatprep.mubr.f32.mxu0 0.0
  %3332 = vmatmul.mubr.f32.gmra.mrb[0].mxu0 %v3174
  %v3333 = vpop.f32.mrb[0].mxu0
  %v3334 = vadd.f32 0.0, %v3333
  %v3335 = vpop.f32.mrb[0].mxu0
  %3336 = vmatprep.mubr.f32.mxu0 0.0
  %3337 = vmatmul.mubr.f32.gmra.mrb[0].mxu0 %v3175
  %v3338 = vpop.f32.mrb[0].mxu0
  %v3339 = vadd.f32 0.0, %v3338
  %v3340 = vpop.f32.mrb[0].mxu0
  %3341 = vmatprep.mubr.f32.mxu0 0.0
  %3342 = vmatmul.mubr.f32.gmra.mrb[0].mxu0 %v3176
  %v3343 = vpop.f32.mrb[0].mxu0
  %v3344 = vadd.f32 0.0, %v3343
  %v3345 = vpop.f32.mrb[0].mxu0
  %3346 = vmatprep.mubr.f32.mxu0 0.0
  %3347 = vmatmul.mubr.f32.gmra.mrb[0].mxu0 %v3177
  %v3348 = vpop.f32.mrb[0].mxu0
  %v3349 = vadd.f32 0.0, %v3348
  %v3350 = vpop.f32.mrb[0].mxu0
  %3351 = vmatprep.mubr.f32.mxu0 0.0
  %3352 = vmatmul.mubr.f32.gmra.mrb[0].mxu0 %v3178
  %v3353 = vpop.f32.mrb[0].mxu0
  %v3354 = vadd.f32 0.0, %v3353
  %v3355 = vpop.f32.mrb[0].mxu0
  %3356 = vmatprep.mubr.f32.mxu0 0.0
  %3357 = vmatmul.mubr.f32.gmra.mrb[0].mxu0 %v3179
  %v3358 = vpop.f32.mrb[0].mxu0
  %v3359 = vadd.f32 0.0, %v3358
  %v3360 = vpop.f32.mrb[0].mxu0
  %3361 = vmatprep.mubr.f32.mxu0 0.0
  %3362 = vmatmul.mubr.f32.gmra.mrb[0].mxu0 %v3180
  %v3363 = vpop.f32.mrb[0].mxu0
  %v3364 = vadd.f32 0.0, %v3363
  %v3365 = vpop.f32.mrb[0].mxu0
  %3366 = vdwg.mxu0
  %v3367 = vadd.f32 %v3139, %v3264
  %v3368 = vadd.f32 %v3140, %v3269
  %v3369 = vadd.f32 %v3141, %v3274
  %v3370 = vadd.f32 %v3142, %v3279
  %v3371 = vadd.f32 %v3143, %v3284
  %v3372 = vadd.f32 %v3144, %v3289
  %v3373 = vadd.f32 %v3145, %v3294
  %v3374 = vadd.f32 %v3146, %v3299
  %v3375 = vadd.f32 %v3147, %v3304
  %v3376 = vadd.f32 %v3148, %v3309
  %v3377 = vadd.f32 %v3149, %v3314
  %v3378 = vadd.f32 %v3150, %v3319
  %v3379 = vadd.f32 %v3151, %v3324
  %v3380 = vadd.f32 %v3152, %v3329
  %v3381 = vadd.f32 %v3153, %v3334
  %v3382 = vadd.f32 %v3154, %v3339
  %v3383 = vadd.f32 %v3155, %v3344
  %v3384 = vadd.f32 %v3156, %v3349
  %v3385 = vadd.f32 %v3157, %v3354
  %v3386 = vadd.f32 %v3158, %v3359
  %v3387 = vadd.f32 %v3159, %v3364
  %v3388 = vld [vmem:[%s0 + $0xee] sm:$0xff]
  %v3389 = vld [vmem:[%s0 + $0xf6] sm:$0xff]
  %v3390 = vld [vmem:[%s0 + $0xfe] sm:$0xff]
  %v3391 = vld [vmem:[%s0 + $0x106] sm:$0xff]
  %v3392 = vld [vmem:[%s0 + $0x10e] sm:$0xff]
  %v3393 = vld [vmem:[%s0 + $0x116] sm:$0xff]
  %v3394 = vld [vmem:[%s0 + $0x11e] sm:$0xff]
  %v3395 = vld [vmem:[%s0 + $0x126] sm:$0xff]
  %v3396 = vld [vmem:[%s0 + $0x12e] sm:$0xff]
  %v3397 = vld [vmem:[%s0 + $0x136] sm:$0xff]
  %v3398 = vld [vmem:[%s0 + $0x13e] sm:$0xff]
  %v3399 = vld [vmem:[%s0 + $0x146] sm:$0xff]
  %v3400 = vld [vmem:[%s0 + $0x14e] sm:$0xff]
  %v3401 = vld [vmem:[%s0 + $0x156] sm:$0xff]
  %v3402 = vld [vmem:[%s0 + $0x15e] sm:$0xff]
  %v3403 = vld [vmem:[%s0 + $0x166] sm:$0xff]
  %v3404 = vld [vmem:[%s0 + $0x16e] sm:$0xff]
  %v3405 = vld [vmem:[%s0 + $0x176] sm:$0xff]
  %v3406 = vld [vmem:[%s0 + $0x17e] sm:$0xff]
  %v3407 = vld [vmem:[%s0 + $0x186] sm:$0xff]
  %v3408 = vld [vmem:[%s0 + $0x18e] sm:$0xff]
  %v3409 = vld [vmem:[%s1375] sm:$0xff]
  %v3410 = vld [vmem:[%s1375 + $0x8] sm:$0xff]
  %v3411 = vld [vmem:[%s1375 + $0x10] sm:$0xff]
  %v3412 = vld [vmem:[%s1375 + $0x18] sm:$0xff]
  %v3413 = vld [vmem:[%s1375 + $0x20] sm:$0xff]
  %v3414 = vld [vmem:[%s1375 + $0x28] sm:$0xff]
  %v3415 = vld [vmem:[%s1375 + $0x30] sm:$0xff]
  %v3416 = vld [vmem:[%s1375 + $0x38] sm:$0xff]
  %v3417 = vld [vmem:[%s1375 + $0x40] sm:$0xff]
  %v3418 = vld [vmem:[%s1375 + $0x48] sm:$0xff]
  %v3419 = vld [vmem:[%s1375 + $0x50] sm:$0xff]
  %v3420 = vld [vmem:[%s1375 + $0x58] sm:$0xff]
  %v3421 = vld [vmem:[%s1375 + $0x60] sm:$0xff]
  %v3422 = vld [vmem:[%s1375 + $0x68] sm:$0xff]
  %v3423 = vld [vmem:[%s1375 + $0x70] sm:$0xff]
  %v3424 = vld [vmem:[%s1375 + $0x78] sm:$0xff]
  %3425 = vmatprep.subr.mxu0 0.0
  %3426 = vmatpush1.msra.mxu0 %v3409
  %3427 = vmatprep.subr.mxu0 0.0
  %3428 = vmatpush1.msra.mxu0 %v3410
  %3429 = vmatprep.subr.mxu0 0.0
  %3430 = vmatpush1.msra.mxu0 %v3411
  %3431 = vmatprep.subr.mxu0 0.0
  %3432 = vmatpush1.msra.mxu0 %v3412
  %3433 = vmatprep.subr.mxu0 0.0
  %3434 = vmatpush1.msra.mxu0 %v3413
  %3435 = vmatprep.subr.mxu0 0.0
  %3436 = vmatpush1.msra.mxu0 %v3414
  %3437 = vmatprep.subr.mxu0 0.0
  %3438 = vmatpush1.msra.mxu0 %v3415
  %3439 = vmatprep.subr.mxu0 0.0
  %3440 = vmatpush1.msra.mxu0 %v3416
  %3441 = vmatprep.subr.mxu0 0.0
  %3442 = vmatpush1.msra.mxu0 %v3417
  %3443 = vmatprep.subr.mxu0 0.0
  %3444 = vmatpush1.msra.mxu0 %v3418
  %3445 = vmatprep.subr.mxu0 0.0
  %3446 = vmatpush1.msra.mxu0 %v3419
  %3447 = vmatprep.subr.mxu0 0.0
  %3448 = vmatpush1.msra.mxu0 %v3420
  %3449 = vmatprep.subr.mxu0 0.0
  %3450 = vmatpush1.msra.mxu0 %v3421
  %3451 = vmatprep.subr.mxu0 0.0
  %3452 = vmatpush1.msra.mxu0 %v3422
  %3453 = vmatprep.subr.mxu0 0.0
  %3454 = vmatpush1.msra.mxu0 %v3423
  %3455 = vmatprep.subr.mxu0 0.0
  %3456 = vmatpush1.msra.mxu0 %v3424
  %3457 = vmatprep.subr.mxu0 0.0
  %3458 = vmatpush1.msra.mxu0 0.0
  %3459 = vmatprep.subr.mxu0 0.0
  %3460 = vmatpush1.msra.mxu0 0.0
  %3461 = vmatprep.subr.mxu0 0.0
  %3462 = vmatpush1.msra.mxu0 0.0
  %3463 = vmatprep.subr.mxu0 0.0
  %3464 = vmatpush1.msra.mxu0 0.0
  %3465 = vmatprep.subr.mxu0 0.0
  %3466 = vmatpush1.msra.mxu0 0.0
  %3467 = vmatprep.subr.mxu0 0.0
  %3468 = vmatpush1.msra.mxu0 0.0
  %3469 = vmatprep.subr.mxu0 0.0
  %3470 = vmatpush1.msra.mxu0 0.0
  %3471 = vmatprep.subr.mxu0 0.0
  %3472 = vmatpush1.msra.mxu0 0.0
  %3473 = vmatprep.subr.mxu0 0.0
  %3474 = vmatpush1.msra.mxu0 0.0
  %3475 = vmatprep.subr.mxu0 0.0
  %3476 = vmatpush1.msra.mxu0 0.0
  %3477 = vmatprep.subr.mxu0 0.0
  %3478 = vmatpush1.msra.mxu0 0.0
  %3479 = vmatprep.subr.mxu0 0.0
  %3480 = vmatpush1.msra.mxu0 0.0
  %3481 = vmatprep.subr.mxu0 0.0
  %3482 = vmatpush1.msra.mxu0 0.0
  %3483 = vmatprep.subr.mxu0 0.0
  %3484 = vmatpush1.msra.mxu0 0.0
  %3485 = vmatprep.subr.mxu0 0.0
  %3486 = vmatpush1.msra.mxu0 0.0
  %3487 = vmatprep.subr.mxu0 0.0
  %3488 = vmatpush1.msra.mxu0 0.0
  %3489 = vmatprep.mubr.f32.mxu0 0.0
  %3490 = vmatmul.mubr.f32.gmra.mrb[0].mxu0 %v3388
  %v3491 = vpop.f32.mrb[0].mxu0
  %v3492 = vadd.f32 0.0, %v3491
  %v3493 = vpop.f32.mrb[0].mxu0
  %3494 = vmatprep.mubr.f32.mxu0 0.0
  %3495 = vmatmul.mubr.f32.gmra.mrb[0].mxu0 %v3389
  %v3496 = vpop.f32.mrb[0].mxu0
  %v3497 = vadd.f32 0.0, %v3496
  %v3498 = vpop.f32.mrb[0].mxu0
  %3499 = vmatprep.mubr.f32.mxu0 0.0
  %3500 = vmatmul.mubr.f32.gmra.mrb[0].mxu0 %v3390
  %v3501 = vpop.f32.mrb[0].mxu0
  %v3502 = vadd.f32 0.0, %v3501
  %v3503 = vpop.f32.mrb[0].mxu0
  %3504 = vmatprep.mubr.f32.mxu0 0.0
  %3505 = vmatmul.mubr.f32.gmra.mrb[0].mxu0 %v3391
  %v3506 = vpop.f32.mrb[0].mxu0
  %v3507 = vadd.f32 0.0, %v3506
  %v3508 = vpop.f32.mrb[0].mxu0
  %3509 = vmatprep.mubr.f32.mxu0 0.0
  %3510 = vmatmul.mubr.f32.gmra.mrb[0].mxu0 %v3392
  %v3511 = vpop.f32.mrb[0].mxu0
  %v3512 = vadd.f32 0.0, %v3511
  %v3513 = vpop.f32.mrb[0].mxu0
  %3514 = vmatprep.mubr.f32.mxu0 0.0
  %3515 = vmatmul.mubr.f32.gmra.mrb[0].mxu0 %v3393
  %v3516 = vpop.f32.mrb[0].mxu0
  %v3517 = vadd.f32 0.0, %v3516
  %v3518 = vpop.f32.mrb[0].mxu0
  %3519 = vmatprep.mubr.f32.mxu0 0.0
  %3520 = vmatmul.mubr.f32.gmra.mrb[0].mxu0 %v3394
  %v3521 = vpop.f32.mrb[0].mxu0
  %v3522 = vadd.f32 0.0, %v3521
  %v3523 = vpop.f32.mrb[0].mxu0
  %3524 = vmatprep.mubr.f32.mxu0 0.0
  %3525 = vmatmul.mubr.f32.gmra.mrb[0].mxu0 %v3395
  %v3526 = vpop.f32.mrb[0].mxu0
  %v3527 = vadd.f32 0.0, %v3526
  %v3528 = vpop.f32.mrb[0].mxu0
  %3529 = vmatprep.mubr.f32.mxu0 0.0
  %3530 = vmatmul.mubr.f32.gmra.mrb[0].mxu0 %v3396
  %v3531 = vpop.f32.mrb[0].mxu0
  %v3532 = vadd.f32 0.0, %v3531
  %v3533 = vpop.f32.mrb[0].mxu0
  %3534 = vmatprep.mubr.f32.mxu0 0.0
  %3535 = vmatmul.mubr.f32.gmra.mrb[0].mxu0 %v3397
  %v3536 = vpop.f32.mrb[0].mxu0
  %v3537 = vadd.f32 0.0, %v3536
  %v3538 = vpop.f32.mrb[0].mxu0
  %3539 = vmatprep.mubr.f32.mxu0 0.0
  %3540 = vmatmul.mubr.f32.gmra.mrb[0].mxu0 %v3398
  %v3541 = vpop.f32.mrb[0].mxu0
  %v3542 = vadd.f32 0.0, %v3541
  %v3543 = vpop.f32.mrb[0].mxu0
  %3544 = vmatprep.mubr.f32.mxu0 0.0
  %3545 = vmatmul.mubr.f32.gmra.mrb[0].mxu0 %v3399
  %v3546 = vpop.f32.mrb[0].mxu0
  %v3547 = vadd.f32 0.0, %v3546
  %v3548 = vpop.f32.mrb[0].mxu0
  %3549 = vmatprep.mubr.f32.mxu0 0.0
  %3550 = vmatmul.mubr.f32.gmra.mrb[0].mxu0 %v3400
  %v3551 = vpop.f32.mrb[0].mxu0
  %v3552 = vadd.f32 0.0, %v3551
  %v3553 = vpop.f32.mrb[0].mxu0
  %3554 = vmatprep.mubr.f32.mxu0 0.0
  %3555 = vmatmul.mubr.f32.gmra.mrb[0].mxu0 %v3401
  %v3556 = vpop.f32.mrb[0].mxu0
  %v3557 = vadd.f32 0.0, %v3556
  %v3558 = vpop.f32.mrb[0].mxu0
  %3559 = vmatprep.mubr.f32.mxu0 0.0
  %3560 = vmatmul.mubr.f32.gmra.mrb[0].mxu0 %v3402
  %v3561 = vpop.f32.mrb[0].mxu0
  %v3562 = vadd.f32 0.0, %v3561
  %v3563 = vpop.f32.mrb[0].mxu0
  %3564 = vmatprep.mubr.f32.mxu0 0.0
  %3565 = vmatmul.mubr.f32.gmra.mrb[0].mxu0 %v3403
  %v3566 = vpop.f32.mrb[0].mxu0
  %v3567 = vadd.f32 0.0, %v3566
  %v3568 = vpop.f32.mrb[0].mxu0
  %3569 = vmatprep.mubr.f32.mxu0 0.0
  %3570 = vmatmul.mubr.f32.gmra.mrb[0].mxu0 %v3404
  %v3571 = vpop.f32.mrb[0].mxu0
  %v3572 = vadd.f32 0.0, %v3571
  %v3573 = vpop.f32.mrb[0].mxu0
  %3574 = vmatprep.mubr.f32.mxu0 0.0
  %3575 = vmatmul.mubr.f32.gmra.mrb[0].mxu0 %v3405
  %v3576 = vpop.f32.mrb[0].mxu0
  %v3577 = vadd.f32 0.0, %v3576
  %v3578 = vpop.f32.mrb[0].mxu0
  %3579 = vmatprep.mubr.f32.mxu0 0.0
  %3580 = vmatmul.mubr.f32.gmra.mrb[0].mxu0 %v3406
  %v3581 = vpop.f32.mrb[0].mxu0
  %v3582 = vadd.f32 0.0, %v3581
  %v3583 = vpop.f32.mrb[0].mxu0
  %3584 = vmatprep.mubr.f32.mxu0 0.0
  %3585 = vmatmul.mubr.f32.gmra.mrb[0].mxu0 %v3407
  %v3586 = vpop.f32.mrb[0].mxu0
  %v3587 = vadd.f32 0.0, %v3586
  %v3588 = vpop.f32.mrb[0].mxu0
  %3589 = vmatprep.mubr.f32.mxu0 0.0
  %3590 = vmatmul.mubr.f32.gmra.mrb[0].mxu0 %v3408
  %v3591 = vpop.f32.mrb[0].mxu0
  %v3592 = vadd.f32 0.0, %v3591
  %v3593 = vpop.f32.mrb[0].mxu0
  %3594 = vdwg.mxu0
  %v3595 = vadd.f32 %v3367, %v3492
  %v3596 = vadd.f32 %v3368, %v3497
  %v3597 = vadd.f32 %v3369, %v3502
  %v3598 = vadd.f32 %v3370, %v3507
  %v3599 = vadd.f32 %v3371, %v3512
  %v3600 = vadd.f32 %v3372, %v3517
  %v3601 = vadd.f32 %v3373, %v3522
  %v3602 = vadd.f32 %v3374, %v3527
  %v3603 = vadd.f32 %v3375, %v3532
  %v3604 = vadd.f32 %v3376, %v3537
  %v3605 = vadd.f32 %v3377, %v3542
  %v3606 = vadd.f32 %v3378, %v3547
  %v3607 = vadd.f32 %v3379, %v3552
  %v3608 = vadd.f32 %v3380, %v3557
  %v3609 = vadd.f32 %v3381, %v3562
  %v3610 = vadd.f32 %v3382, %v3567
  %v3611 = vadd.f32 %v3383, %v3572
  %v3612 = vadd.f32 %v3384, %v3577
  %v3613 = vadd.f32 %v3385, %v3582
  %v3614 = vadd.f32 %v3386, %v3587
  %v3615 = vadd.f32 %v3387, %v3592
  %v3616 = vld [vmem:[%s0 + $0xef] sm:$0xff]
  %v3617 = vld [vmem:[%s0 + $0xf7] sm:$0xff]
  %v3618 = vld [vmem:[%s0 + $0xff] sm:$0xff]
  %v3619 = vld [vmem:[%s0 + $0x107] sm:$0xff]
  %v3620 = vld [vmem:[%s0 + $0x10f] sm:$0xff]
  %v3621 = vld [vmem:[%s0 + $0x117] sm:$0xff]
  %v3622 = vld [vmem:[%s0 + $0x11f] sm:$0xff]
  %v3623 = vld [vmem:[%s0 + $0x127] sm:$0xff]
  %v3624 = vld [vmem:[%s0 + $0x12f] sm:$0xff]
  %v3625 = vld [vmem:[%s0 + $0x137] sm:$0xff]
  %v3626 = vld [vmem:[%s0 + $0x13f] sm:$0xff]
  %v3627 = vld [vmem:[%s0 + $0x147] sm:$0xff]
  %v3628 = vld [vmem:[%s0 + $0x14f] sm:$0xff]
  %v3629 = vld [vmem:[%s0 + $0x157] sm:$0xff]
  %v3630 = vld [vmem:[%s0 + $0x15f] sm:$0xff]
  %v3631 = vld [vmem:[%s0 + $0x167] sm:$0xff]
  %v3632 = vld [vmem:[%s0 + $0x16f] sm:$0xff]
  %v3633 = vld [vmem:[%s0 + $0x177] sm:$0xff]
  %v3634 = vld [vmem:[%s0 + $0x17f] sm:$0xff]
  %v3635 = vld [vmem:[%s0 + $0x187] sm:$0xff]
  %v3636 = vld [vmem:[%s0 + $0x18f] sm:$0xff]
  %v3637 = vld [vmem:[%s1604] sm:$0xff]
  %v3638 = vld [vmem:[%s1604 + $0x8] sm:$0xff]
  %v3639 = vld [vmem:[%s1604 + $0x10] sm:$0xff]
  %v3640 = vld [vmem:[%s1604 + $0x18] sm:$0xff]
  %v3641 = vld [vmem:[%s1604 + $0x20] sm:$0xff]
  %v3642 = vld [vmem:[%s1604 + $0x28] sm:$0xff]
  %v3643 = vld [vmem:[%s1604 + $0x30] sm:$0xff]
  %v3644 = vld [vmem:[%s1604 + $0x38] sm:$0xff]
  %v3645 = vld [vmem:[%s1604 + $0x40] sm:$0xff]
  %v3646 = vld [vmem:[%s1604 + $0x48] sm:$0xff]
  %v3647 = vld [vmem:[%s1604 + $0x50] sm:$0xff]
  %v3648 = vld [vmem:[%s1604 + $0x58] sm:$0xff]
  %v3649 = vld [vmem:[%s1604 + $0x60] sm:$0xff]
  %v3650 = vld [vmem:[%s1604 + $0x68] sm:$0xff]
  %v3651 = vld [vmem:[%s1604 + $0x70] sm:$0xff]
  %v3652 = vld [vmem:[%s1604 + $0x78] sm:$0xff]
  %3653 = vmatprep.subr.mxu0 0.0
  %3654 = vmatpush1.msra.mxu0 %v3637
  %3655 = vmatprep.subr.mxu0 0.0
  %3656 = vmatpush1.msra.mxu0 %v3638
  %3657 = vmatprep.subr.mxu0 0.0
  %3658 = vmatpush1.msra.mxu0 %v3639
  %3659 = vmatprep.subr.mxu0 0.0
  %3660 = vmatpush1.msra.mxu0 %v3640
  %3661 = vmatprep.subr.mxu0 0.0
  %3662 = vmatpush1.msra.mxu0 %v3641
  %3663 = vmatprep.subr.mxu0 0.0
  %3664 = vmatpush1.msra.mxu0 %v3642
  %3665 = vmatprep.subr.mxu0 0.0
  %3666 = vmatpush1.msra.mxu0 %v3643
  %3667 = vmatprep.subr.mxu0 0.0
  %3668 = vmatpush1.msra.mxu0 %v3644
  %3669 = vmatprep.subr.mxu0 0.0
  %3670 = vmatpush1.msra.mxu0 %v3645
  %3671 = vmatprep.subr.mxu0 0.0
  %3672 = vmatpush1.msra.mxu0 %v3646
  %3673 = vmatprep.subr.mxu0 0.0
  %3674 = vmatpush1.msra.mxu0 %v3647
  %3675 = vmatprep.subr.mxu0 0.0
  %3676 = vmatpush1.msra.mxu0 %v3648
  %3677 = vmatprep.subr.mxu0 0.0
  %3678 = vmatpush1.msra.mxu0 %v3649
  %3679 = vmatprep.subr.mxu0 0.0
  %3680 = vmatpush1.msra.mxu0 %v3650
  %3681 = vmatprep.subr.mxu0 0.0
  %3682 = vmatpush1.msra.mxu0 %v3651
  %3683 = vmatprep.subr.mxu0 0.0
  %3684 = vmatpush1.msra.mxu0 %v3652
  %3685 = vmatprep.subr.mxu0 0.0
  %3686 = vmatpush1.msra.mxu0 0.0
  %3687 = vmatprep.subr.mxu0 0.0
  %3688 = vmatpush1.msra.mxu0 0.0
  %3689 = vmatprep.subr.mxu0 0.0
  %3690 = vmatpush1.msra.mxu0 0.0
  %3691 = vmatprep.subr.mxu0 0.0
  %3692 = vmatpush1.msra.mxu0 0.0
  %3693 = vmatprep.subr.mxu0 0.0
  %3694 = vmatpush1.msra.mxu0 0.0
  %3695 = vmatprep.subr.mxu0 0.0
  %3696 = vmatpush1.msra.mxu0 0.0
  %3697 = vmatprep.subr.mxu0 0.0
  %3698 = vmatpush1.msra.mxu0 0.0
  %3699 = vmatprep.subr.mxu0 0.0
  %3700 = vmatpush1.msra.mxu0 0.0
  %3701 = vmatprep.subr.mxu0 0.0
  %3702 = vmatpush1.msra.mxu0 0.0
  %3703 = vmatprep.subr.mxu0 0.0
  %3704 = vmatpush1.msra.mxu0 0.0
  %3705 = vmatprep.subr.mxu0 0.0
  %3706 = vmatpush1.msra.mxu0 0.0
  %3707 = vmatprep.subr.mxu0 0.0
  %3708 = vmatpush1.msra.mxu0 0.0
  %3709 = vmatprep.subr.mxu0 0.0
  %3710 = vmatpush1.msra.mxu0 0.0
  %3711 = vmatprep.subr.mxu0 0.0
  %3712 = vmatpush1.msra.mxu0 0.0
  %3713 = vmatprep.subr.mxu0 0.0
  %3714 = vmatpush1.msra.mxu0 0.0
  %3715 = vmatprep.subr.mxu0 0.0
  %3716 = vmatpush1.msra.mxu0 0.0
  %3717 = vmatprep.mubr.f32.mxu0 0.0
  %3718 = vmatmul.mubr.f32.gmra.mrb[0].mxu0 %v3616
  %v3719 = vpop.f32.mrb[0].mxu0
  %v3720 = vadd.f32 0.0, %v3719
  %v3721 = vpop.f32.mrb[0].mxu0
  %3722 = vmatprep.mubr.f32.mxu0 0.0
  %3723 = vmatmul.mubr.f32.gmra.mrb[0].mxu0 %v3617
  %v3724 = vpop.f32.mrb[0].mxu0
  %v3725 = vadd.f32 0.0, %v3724
  %v3726 = vpop.f32.mrb[0].mxu0
  %3727 = vmatprep.mubr.f32.mxu0 0.0
  %3728 = vmatmul.mubr.f32.gmra.mrb[0].mxu0 %v3618
  %v3729 = vpop.f32.mrb[0].mxu0
  %v3730 = vadd.f32 0.0, %v3729
  %v3731 = vpop.f32.mrb[0].mxu0
  %3732 = vmatprep.mubr.f32.mxu0 0.0
  %3733 = vmatmul.mubr.f32.gmra.mrb[0].mxu0 %v3619
  %v3734 = vpop.f32.mrb[0].mxu0
  %v3735 = vadd.f32 0.0, %v3734
  %v3736 = vpop.f32.mrb[0].mxu0
  %3737 = vmatprep.mubr.f32.mxu0 0.0
  %3738 = vmatmul.mubr.f32.gmra.mrb[0].mxu0 %v3620
  %v3739 = vpop.f32.mrb[0].mxu0
  %v3740 = vadd.f32 0.0, %v3739
  %v3741 = vpop.f32.mrb[0].mxu0
  %3742 = vmatprep.mubr.f32.mxu0 0.0
  %3743 = vmatmul.mubr.f32.gmra.mrb[0].mxu0 %v3621
  %v3744 = vpop.f32.mrb[0].mxu0
  %v3745 = vadd.f32 0.0, %v3744
  %v3746 = vpop.f32.mrb[0].mxu0
  %3747 = vmatprep.mubr.f32.mxu0 0.0
  %3748 = vmatmul.mubr.f32.gmra.mrb[0].mxu0 %v3622
  %v3749 = vpop.f32.mrb[0].mxu0
  %v3750 = vadd.f32 0.0, %v3749
  %v3751 = vpop.f32.mrb[0].mxu0
  %3752 = vmatprep.mubr.f32.mxu0 0.0
  %3753 = vmatmul.mubr.f32.gmra.mrb[0].mxu0 %v3623
  %v3754 = vpop.f32.mrb[0].mxu0
  %v3755 = vadd.f32 0.0, %v3754
  %v3756 = vpop.f32.mrb[0].mxu0
  %3757 = vmatprep.mubr.f32.mxu0 0.0
  %3758 = vmatmul.mubr.f32.gmra.mrb[0].mxu0 %v3624
  %v3759 = vpop.f32.mrb[0].mxu0
  %v3760 = vadd.f32 0.0, %v3759
  %v3761 = vpop.f32.mrb[0].mxu0
  %3762 = vmatprep.mubr.f32.mxu0 0.0
  %3763 = vmatmul.mubr.f32.gmra.mrb[0].mxu0 %v3625
  %v3764 = vpop.f32.mrb[0].mxu0
  %v3765 = vadd.f32 0.0, %v3764
  %v3766 = vpop.f32.mrb[0].mxu0
  %3767 = vmatprep.mubr.f32.mxu0 0.0
  %3768 = vmatmul.mubr.f32.gmra.mrb[0].mxu0 %v3626
  %v3769 = vpop.f32.mrb[0].mxu0
  %v3770 = vadd.f32 0.0, %v3769
  %v3771 = vpop.f32.mrb[0].mxu0
  %3772 = vmatprep.mubr.f32.mxu0 0.0
  %3773 = vmatmul.mubr.f32.gmra.mrb[0].mxu0 %v3627
  %v3774 = vpop.f32.mrb[0].mxu0
  %v3775 = vadd.f32 0.0, %v3774
  %v3776 = vpop.f32.mrb[0].mxu0
  %3777 = vmatprep.mubr.f32.mxu0 0.0
  %3778 = vmatmul.mubr.f32.gmra.mrb[0].mxu0 %v3628
  %v3779 = vpop.f32.mrb[0].mxu0
  %v3780 = vadd.f32 0.0, %v3779
  %v3781 = vpop.f32.mrb[0].mxu0
  %3782 = vmatprep.mubr.f32.mxu0 0.0
  %3783 = vmatmul.mubr.f32.gmra.mrb[0].mxu0 %v3629
  %v3784 = vpop.f32.mrb[0].mxu0
  %v3785 = vadd.f32 0.0, %v3784
  %v3786 = vpop.f32.mrb[0].mxu0
  %3787 = vmatprep.mubr.f32.mxu0 0.0
  %3788 = vmatmul.mubr.f32.gmra.mrb[0].mxu0 %v3630
  %v3789 = vpop.f32.mrb[0].mxu0
  %v3790 = vadd.f32 0.0, %v3789
  %v3791 = vpop.f32.mrb[0].mxu0
  %3792 = vmatprep.mubr.f32.mxu0 0.0
  %3793 = vmatmul.mubr.f32.gmra.mrb[0].mxu0 %v3631
  %v3794 = vpop.f32.mrb[0].mxu0
  %v3795 = vadd.f32 0.0, %v3794
  %v3796 = vpop.f32.mrb[0].mxu0
  %3797 = vmatprep.mubr.f32.mxu0 0.0
  %3798 = vmatmul.mubr.f32.gmra.mrb[0].mxu0 %v3632
  %v3799 = vpop.f32.mrb[0].mxu0
  %v3800 = vadd.f32 0.0, %v3799
  %v3801 = vpop.f32.mrb[0].mxu0
  %3802 = vmatprep.mubr.f32.mxu0 0.0
  %3803 = vmatmul.mubr.f32.gmra.mrb[0].mxu0 %v3633
  %v3804 = vpop.f32.mrb[0].mxu0
  %v3805 = vadd.f32 0.0, %v3804
  %v3806 = vpop.f32.mrb[0].mxu0
  %3807 = vmatprep.mubr.f32.mxu0 0.0
  %3808 = vmatmul.mubr.f32.gmra.mrb[0].mxu0 %v3634
  %v3809 = vpop.f32.mrb[0].mxu0
  %v3810 = vadd.f32 0.0, %v3809
  %v3811 = vpop.f32.mrb[0].mxu0
  %3812 = vmatprep.mubr.f32.mxu0 0.0
  %3813 = vmatmul.mubr.f32.gmra.mrb[0].mxu0 %v3635
  %v3814 = vpop.f32.mrb[0].mxu0
  %v3815 = vadd.f32 0.0, %v3814
  %v3816 = vpop.f32.mrb[0].mxu0
  %3817 = vmatprep.mubr.f32.mxu0 0.0
  %3818 = vmatmul.mubr.f32.gmra.mrb[0].mxu0 %v3636
  %v3819 = vpop.f32.mrb[0].mxu0
  %v3820 = vadd.f32 0.0, %v3819
  %v3821 = vpop.f32.mrb[0].mxu0
  %3822 = vdwg.mxu0
  %v3823 = vadd.f32 %v3595, %v3720
  %v3824 = vadd.f32 %v3596, %v3725
  %v3825 = vadd.f32 %v3597, %v3730
  %v3826 = vadd.f32 %v3598, %v3735
  %v3827 = vadd.f32 %v3599, %v3740
  %v3828 = vadd.f32 %v3600, %v3745
  %v3829 = vadd.f32 %v3601, %v3750
  %v3830 = vadd.f32 %v3602, %v3755
  %v3831 = vadd.f32 %v3603, %v3760
  %v3832 = vadd.f32 %v3604, %v3765
  %v3833 = vadd.f32 %v3605, %v3770
  %v3834 = vadd.f32 %v3606, %v3775
  %v3835 = vadd.f32 %v3607, %v3780
  %v3836 = vadd.f32 %v3608, %v3785
  %v3837 = vadd.f32 %v3609, %v3790
  %v3838 = vadd.f32 %v3610, %v3795
  %v3839 = vadd.f32 %v3611, %v3800
  %v3840 = vadd.f32 %v3612, %v3805
  %v3841 = vadd.f32 %v3613, %v3810
  %v3842 = vadd.f32 %v3614, %v3815
  %v3843 = vadd.f32 %v3615, %v3820
  %v3844 = vld [vmem:[%s0 + $0xf0] sm:$0xff]
  %v3845 = vld [vmem:[%s0 + $0xf8] sm:$0xff]
  %v3846 = vld [vmem:[%s0 + $0x100] sm:$0xff]
  %v3847 = vld [vmem:[%s0 + $0x108] sm:$0xff]
  %v3848 = vld [vmem:[%s0 + $0x110] sm:$0xff]
  %v3849 = vld [vmem:[%s0 + $0x118] sm:$0xff]
  %v3850 = vld [vmem:[%s0 + $0x120] sm:$0xff]
  %v3851 = vld [vmem:[%s0 + $0x128] sm:$0xff]
  %v3852 = vld [vmem:[%s0 + $0x130] sm:$0xff]
  %v3853 = vld [vmem:[%s0 + $0x138] sm:$0xff]
  %v3854 = vld [vmem:[%s0 + $0x140] sm:$0xff]
  %v3855 = vld [vmem:[%s0 + $0x148] sm:$0xff]
  %v3856 = vld [vmem:[%s0 + $0x150] sm:$0xff]
  %v3857 = vld [vmem:[%s0 + $0x158] sm:$0xff]
  %v3858 = vld [vmem:[%s0 + $0x160] sm:$0xff]
  %v3859 = vld [vmem:[%s0 + $0x168] sm:$0xff]
  %v3860 = vld [vmem:[%s0 + $0x170] sm:$0xff]
  %v3861 = vld [vmem:[%s0 + $0x178] sm:$0xff]
  %v3862 = vld [vmem:[%s0 + $0x180] sm:$0xff]
  %v3863 = vld [vmem:[%s0 + $0x188] sm:$0xff]
  %v3864 = vld [vmem:[%s0 + $0x190] sm:$0xff]
  %v3865 = vld [vmem:[%s1833] sm:$0xff]
  %v3866 = vld [vmem:[%s1833 + $0x8] sm:$0xff]
  %v3867 = vld [vmem:[%s1833 + $0x10] sm:$0xff]
  %v3868 = vld [vmem:[%s1833 + $0x18] sm:$0xff]
  %v3869 = vld [vmem:[%s1833 + $0x20] sm:$0xff]
  %v3870 = vld [vmem:[%s1833 + $0x28] sm:$0xff]
  %v3871 = vld [vmem:[%s1833 + $0x30] sm:$0xff]
  %v3872 = vld [vmem:[%s1833 + $0x38] sm:$0xff]
  %v3873 = vld [vmem:[%s1833 + $0x40] sm:$0xff]
  %v3874 = vld [vmem:[%s1833 + $0x48] sm:$0xff]
  %v3875 = vld [vmem:[%s1833 + $0x50] sm:$0xff]
  %v3876 = vld [vmem:[%s1833 + $0x58] sm:$0xff]
  %v3877 = vld [vmem:[%s1833 + $0x60] sm:$0xff]
  %v3878 = vld [vmem:[%s1833 + $0x68] sm:$0xff]
  %v3879 = vld [vmem:[%s1833 + $0x70] sm:$0xff]
  %v3880 = vld [vmem:[%s1833 + $0x78] sm:$0xff]
  %3881 = vmatprep.subr.mxu0 0.0
  %3882 = vmatpush1.msra.mxu0 %v3865
  %3883 = vmatprep.subr.mxu0 0.0
  %3884 = vmatpush1.msra.mxu0 %v3866
  %3885 = vmatprep.subr.mxu0 0.0
  %3886 = vmatpush1.msra.mxu0 %v3867
  %3887 = vmatprep.subr.mxu0 0.0
  %3888 = vmatpush1.msra.mxu0 %v3868
  %3889 = vmatprep.subr.mxu0 0.0
  %3890 = vmatpush1.msra.mxu0 %v3869
  %3891 = vmatprep.subr.mxu0 0.0
  %3892 = vmatpush1.msra.mxu0 %v3870
  %3893 = vmatprep.subr.mxu0 0.0
  %3894 = vmatpush1.msra.mxu0 %v3871
  %3895 = vmatprep.subr.mxu0 0.0
  %3896 = vmatpush1.msra.mxu0 %v3872
  %3897 = vmatprep.subr.mxu0 0.0
  %3898 = vmatpush1.msra.mxu0 %v3873
  %3899 = vmatprep.subr.mxu0 0.0
  %3900 = vmatpush1.msra.mxu0 %v3874
  %3901 = vmatprep.subr.mxu0 0.0
  %3902 = vmatpush1.msra.mxu0 %v3875
  %3903 = vmatprep.subr.mxu0 0.0
  %3904 = vmatpush1.msra.mxu0 %v3876
  %3905 = vmatprep.subr.mxu0 0.0
  %3906 = vmatpush1.msra.mxu0 %v3877
  %3907 = vmatprep.subr.mxu0 0.0
  %3908 = vmatpush1.msra.mxu0 %v3878
  %3909 = vmatprep.subr.mxu0 0.0
  %3910 = vmatpush1.msra.mxu0 %v3879
  %3911 = vmatprep.subr.mxu0 0.0
  %3912 = vmatpush1.msra.mxu0 %v3880
  %3913 = vmatprep.subr.mxu0 0.0
  %3914 = vmatpush1.msra.mxu0 0.0
  %3915 = vmatprep.subr.mxu0 0.0
  %3916 = vmatpush1.msra.mxu0 0.0
  %3917 = vmatprep.subr.mxu0 0.0
  %3918 = vmatpush1.msra.mxu0 0.0
  %3919 = vmatprep.subr.mxu0 0.0
  %3920 = vmatpush1.msra.mxu0 0.0
  %3921 = vmatprep.subr.mxu0 0.0
  %3922 = vmatpush1.msra.mxu0 0.0
  %3923 = vmatprep.subr.mxu0 0.0
  %3924 = vmatpush1.msra.mxu0 0.0
  %3925 = vmatprep.subr.mxu0 0.0
  %3926 = vmatpush1.msra.mxu0 0.0
  %3927 = vmatprep.subr.mxu0 0.0
  %3928 = vmatpush1.msra.mxu0 0.0
  %3929 = vmatprep.subr.mxu0 0.0
  %3930 = vmatpush1.msra.mxu0 0.0
  %3931 = vmatprep.subr.mxu0 0.0
  %3932 = vmatpush1.msra.mxu0 0.0
  %3933 = vmatprep.subr.mxu0 0.0
  %3934 = vmatpush1.msra.mxu0 0.0
  %3935 = vmatprep.subr.mxu0 0.0
  %3936 = vmatpush1.msra.mxu0 0.0
  %3937 = vmatprep.subr.mxu0 0.0
  %3938 = vmatpush1.msra.mxu0 0.0
  %3939 = vmatprep.subr.mxu0 0.0
  %3940 = vmatpush1.msra.mxu0 0.0
  %3941 = vmatprep.subr.mxu0 0.0
  %3942 = vmatpush1.msra.mxu0 0.0
  %3943 = vmatprep.subr.mxu0 0.0
  %3944 = vmatpush1.msra.mxu0 0.0
  %3945 = vmatprep.mubr.f32.mxu0 0.0
  %3946 = vmatmul.mubr.f32.gmra.mrb[0].mxu0 %v3844
  %v3947 = vpop.f32.mrb[0].mxu0
  %v3948 = vadd.f32 0.0, %v3947
  %v3949 = vpop.f32.mrb[0].mxu0
  %3950 = vmatprep.mubr.f32.mxu0 0.0
  %3951 = vmatmul.mubr.f32.gmra.mrb[0].mxu0 %v3845
  %v3952 = vpop.f32.mrb[0].mxu0
  %v3953 = vadd.f32 0.0, %v3952
  %v3954 = vpop.f32.mrb[0].mxu0
  %3955 = vmatprep.mubr.f32.mxu0 0.0
  %3956 = vmatmul.mubr.f32.gmra.mrb[0].mxu0 %v3846
  %v3957 = vpop.f32.mrb[0].mxu0
  %v3958 = vadd.f32 0.0, %v3957
  %v3959 = vpop.f32.mrb[0].mxu0
  %3960 = vmatprep.mubr.f32.mxu0 0.0
  %3961 = vmatmul.mubr.f32.gmra.mrb[0].mxu0 %v3847
  %v3962 = vpop.f32.mrb[0].mxu0
  %v3963 = vadd.f32 0.0, %v3962
  %v3964 = vpop.f32.mrb[0].mxu0
  %3965 = vmatprep.mubr.f32.mxu0 0.0
  %3966 = vmatmul.mubr.f32.gmra.mrb[0].mxu0 %v3848
  %v3967 = vpop.f32.mrb[0].mxu0
  %v3968 = vadd.f32 0.0, %v3967
  %v3969 = vpop.f32.mrb[0].mxu0
  %3970 = vmatprep.mubr.f32.mxu0 0.0
  %3971 = vmatmul.mubr.f32.gmra.mrb[0].mxu0 %v3849
  %v3972 = vpop.f32.mrb[0].mxu0
  %v3973 = vadd.f32 0.0, %v3972
  %v3974 = vpop.f32.mrb[0].mxu0
  %3975 = vmatprep.mubr.f32.mxu0 0.0
  %3976 = vmatmul.mubr.f32.gmra.mrb[0].mxu0 %v3850
  %v3977 = vpop.f32.mrb[0].mxu0
  %v3978 = vadd.f32 0.0, %v3977
  %v3979 = vpop.f32.mrb[0].mxu0
  %3980 = vmatprep.mubr.f32.mxu0 0.0
  %3981 = vmatmul.mubr.f32.gmra.mrb[0].mxu0 %v3851
  %v3982 = vpop.f32.mrb[0].mxu0
  %v3983 = vadd.f32 0.0, %v3982
  %v3984 = vpop.f32.mrb[0].mxu0
  %3985 = vmatprep.mubr.f32.mxu0 0.0
  %3986 = vmatmul.mubr.f32.gmra.mrb[0].mxu0 %v3852
  %v3987 = vpop.f32.mrb[0].mxu0
  %v3988 = vadd.f32 0.0, %v3987
  %v3989 = vpop.f32.mrb[0].mxu0
  %3990 = vmatprep.mubr.f32.mxu0 0.0
  %3991 = vmatmul.mubr.f32.gmra.mrb[0].mxu0 %v3853
  %v3992 = vpop.f32.mrb[0].mxu0
  %v3993 = vadd.f32 0.0, %v3992
  %v3994 = vpop.f32.mrb[0].mxu0
  %3995 = vmatprep.mubr.f32.mxu0 0.0
  %3996 = vmatmul.mubr.f32.gmra.mrb[0].mxu0 %v3854
  %v3997 = vpop.f32.mrb[0].mxu0
  %v3998 = vadd.f32 0.0, %v3997
  %v3999 = vpop.f32.mrb[0].mxu0
  %4000 = vmatprep.mubr.f32.mxu0 0.0
  %4001 = vmatmul.mubr.f32.gmra.mrb[0].mxu0 %v3855
  %v4002 = vpop.f32.mrb[0].mxu0
  %v4003 = vadd.f32 0.0, %v4002
  %v4004 = vpop.f32.mrb[0].mxu0
  %4005 = vmatprep.mubr.f32.mxu0 0.0
  %4006 = vmatmul.mubr.f32.gmra.mrb[0].mxu0 %v3856
  %v4007 = vpop.f32.mrb[0].mxu0
  %v4008 = vadd.f32 0.0, %v4007
  %v4009 = vpop.f32.mrb[0].mxu0
  %4010 = vmatprep.mubr.f32.mxu0 0.0
  %4011 = vmatmul.mubr.f32.gmra.mrb[0].mxu0 %v3857
  %v4012 = vpop.f32.mrb[0].mxu0
  %v4013 = vadd.f32 0.0, %v4012
  %v4014 = vpop.f32.mrb[0].mxu0
  %4015 = vmatprep.mubr.f32.mxu0 0.0
  %4016 = vmatmul.mubr.f32.gmra.mrb[0].mxu0 %v3858
  %v4017 = vpop.f32.mrb[0].mxu0
  %v4018 = vadd.f32 0.0, %v4017
  %v4019 = vpop.f32.mrb[0].mxu0
  %4020 = vmatprep.mubr.f32.mxu0 0.0
  %4021 = vmatmul.mubr.f32.gmra.mrb[0].mxu0 %v3859
  %v4022 = vpop.f32.mrb[0].mxu0
  %v4023 = vadd.f32 0.0, %v4022
  %v4024 = vpop.f32.mrb[0].mxu0
  %4025 = vmatprep.mubr.f32.mxu0 0.0
  %4026 = vmatmul.mubr.f32.gmra.mrb[0].mxu0 %v3860
  %v4027 = vpop.f32.mrb[0].mxu0
  %v4028 = vadd.f32 0.0, %v4027
  %v4029 = vpop.f32.mrb[0].mxu0
  %4030 = vmatprep.mubr.f32.mxu0 0.0
  %4031 = vmatmul.mubr.f32.gmra.mrb[0].mxu0 %v3861
  %v4032 = vpop.f32.mrb[0].mxu0
  %v4033 = vadd.f32 0.0, %v4032
  %v4034 = vpop.f32.mrb[0].mxu0
  %4035 = vmatprep.mubr.f32.mxu0 0.0
  %4036 = vmatmul.mubr.f32.gmra.mrb[0].mxu0 %v3862
  %v4037 = vpop.f32.mrb[0].mxu0
  %v4038 = vadd.f32 0.0, %v4037
  %v4039 = vpop.f32.mrb[0].mxu0
  %4040 = vmatprep.mubr.f32.mxu0 0.0
  %4041 = vmatmul.mubr.f32.gmra.mrb[0].mxu0 %v3863
  %v4042 = vpop.f32.mrb[0].mxu0
  %v4043 = vadd.f32 0.0, %v4042
  %v4044 = vpop.f32.mrb[0].mxu0
  %4045 = vmatprep.mubr.f32.mxu0 0.0
  %4046 = vmatmul.mubr.f32.gmra.mrb[0].mxu0 %v3864
  %v4047 = vpop.f32.mrb[0].mxu0
  %v4048 = vadd.f32 0.0, %v4047
  %v4049 = vpop.f32.mrb[0].mxu0
  %4050 = vdwg.mxu0
  %v4051 = vadd.f32 %v3823, %v3948
  %v4052 = vadd.f32 %v3824, %v3953
  %v4053 = vadd.f32 %v3825, %v3958
  %v4054 = vadd.f32 %v3826, %v3963
  %v4055 = vadd.f32 %v3827, %v3968
  %v4056 = vadd.f32 %v3828, %v3973
  %v4057 = vadd.f32 %v3829, %v3978
  %v4058 = vadd.f32 %v3830, %v3983
  %v4059 = vadd.f32 %v3831, %v3988
  %v4060 = vadd.f32 %v3832, %v3993
  %v4061 = vadd.f32 %v3833, %v3998
  %v4062 = vadd.f32 %v3834, %v4003
  %v4063 = vadd.f32 %v3835, %v4008
  %v4064 = vadd.f32 %v3836, %v4013
  %v4065 = vadd.f32 %v3837, %v4018
  %v4066 = vadd.f32 %v3838, %v4023
  %v4067 = vadd.f32 %v3839, %v4028
  %v4068 = vadd.f32 %v3840, %v4033
  %v4069 = vadd.f32 %v3841, %v4038
  %v4070 = vadd.f32 %v3842, %v4043
  %v4071 = vadd.f32 %v3843, %v4048
  %4072 = vst [vmem:[#allocation2 + $0xa8] sm:$0xff] %v4051
  %4073 = vst [vmem:[#allocation2 + $0xb0] sm:$0xff] %v4052
  %4074 = vst [vmem:[#allocation2 + $0xb8] sm:$0xff] %v4053
  %4075 = vst [vmem:[#allocation2 + $0xc0] sm:$0xff] %v4054
  %4076 = vst [vmem:[#allocation2 + $0xc8] sm:$0xff] %v4055
  %4077 = vst [vmem:[#allocation2 + $0xd0] sm:$0xff] %v4056
  %4078 = vst [vmem:[#allocation2 + $0xd8] sm:$0xff] %v4057
  %4079 = vst [vmem:[#allocation2 + $0xe0] sm:$0xff] %v4058
  %4080 = vst [vmem:[#allocation2 + $0xe8] sm:$0xff] %v4059
  %4081 = vst [vmem:[#allocation2 + $0xf0] sm:$0xff] %v4060
  %4082 = vst [vmem:[#allocation2 + $0xf8] sm:$0xff] %v4061
  %4083 = vst [vmem:[#allocation2 + $0x100] sm:$0xff] %v4062
  %4084 = vst [vmem:[#allocation2 + $0x108] sm:$0xff] %v4063
  %4085 = vst [vmem:[#allocation2 + $0x110] sm:$0xff] %v4064
  %4086 = vst [vmem:[#allocation2 + $0x118] sm:$0xff] %v4065
  %4087 = vst [vmem:[#allocation2 + $0x120] sm:$0xff] %v4066
  %4088 = vst [vmem:[#allocation2 + $0x128] sm:$0xff] %v4067
  %4089 = vst [vmem:[#allocation2 + $0x130] sm:$0xff] %v4068
  %4090 = vst [vmem:[#allocation2 + $0x138] sm:$0xff] %v4069
  %4091 = vst [vmem:[#allocation2 + $0x140] sm:$0xff] %v4070
  %4092 = vst [vmem:[#allocation2 + $0x148] sm:$0xff] %v4071
  %v4093 = vld [vmem:[#allocation2] sm:$0xff]
  %v4094 = vld [vmem:[#allocation2 + $0x8] sm:$0xff]
  %v4095 = vld [vmem:[#allocation2 + $0x10] sm:$0xff]
  %v4096 = vld [vmem:[#allocation2 + $0x18] sm:$0xff]
  %v4097 = vld [vmem:[#allocation2 + $0x20] sm:$0xff]
  %v4098 = vld [vmem:[#allocation2 + $0x28] sm:$0xff]
  %v4099 = vld [vmem:[#allocation2 + $0x30] sm:$0xff]
  %v4100 = vld [vmem:[#allocation2 + $0x38] sm:$0xff]
  %v4101 = vld [vmem:[#allocation2 + $0x40] sm:$0xff]
  %v4102 = vld [vmem:[#allocation2 + $0x48] sm:$0xff]
  %v4103 = vld [vmem:[#allocation2 + $0x50] sm:$0xff]
  %v4104 = vld [vmem:[#allocation2 + $0x58] sm:$0xff]
  %v4105 = vld [vmem:[#allocation2 + $0x60] sm:$0xff]
  %v4106 = vld [vmem:[#allocation2 + $0x68] sm:$0xff]
  %v4107 = vld [vmem:[#allocation2 + $0x70] sm:$0xff]
  %v4108 = vld [vmem:[#allocation2 + $0x78] sm:$0xff]
  %v4109 = vld [vmem:[#allocation2 + $0x80] sm:$0xff]
  %v4110 = vld [vmem:[#allocation2 + $0x88] sm:$0xff]
  %v4111 = vld [vmem:[#allocation2 + $0x90] sm:$0xff]
  %v4112 = vld [vmem:[#allocation2 + $0x98] sm:$0xff]
  %v4113 = vld [vmem:[#allocation2 + $0xa0] sm:$0xff]
  %v4114 = vld [vmem:[#allocation2 + $0xa8] sm:$0xff]
  %v4115 = vld [vmem:[#allocation2 + $0xb0] sm:$0xff]
  %v4116 = vld [vmem:[#allocation2 + $0xb8] sm:$0xff]
  %v4117 = vld [vmem:[#allocation2 + $0xc0] sm:$0xff]
  %v4118 = vld [vmem:[#allocation2 + $0xc8] sm:$0xff]
  %v4119 = vld [vmem:[#allocation2 + $0xd0] sm:$0xff]
  %v4120 = vld [vmem:[#allocation2 + $0xd8] sm:$0xff]
  %v4121 = vld [vmem:[#allocation2 + $0xe0] sm:$0xff]
  %v4122 = vld [vmem:[#allocation2 + $0xe8] sm:$0xff]
  %v4123 = vld [vmem:[#allocation2 + $0xf0] sm:$0xff]
  %v4124 = vld [vmem:[#allocation2 + $0xf8] sm:$0xff]
  %v4125 = vld [vmem:[#allocation2 + $0x100] sm:$0xff]
  %v4126 = vld [vmem:[#allocation2 + $0x108] sm:$0xff]
  %v4127 = vld [vmem:[#allocation2 + $0x110] sm:$0xff]
  %v4128 = vld [vmem:[#allocation2 + $0x118] sm:$0xff]
  %v4129 = vld [vmem:[#allocation2 + $0x120] sm:$0xff]
  %v4130 = vld [vmem:[#allocation2 + $0x128] sm:$0xff]
  %v4131 = vld [vmem:[#allocation2 + $0x130] sm:$0xff]
  %v4132 = vld [vmem:[#allocation2 + $0x138] sm:$0xff]
  %v4133 = vld [vmem:[#allocation2 + $0x140] sm:$0xff]
  %v4134 = vld [vmem:[#allocation2 + $0x148] sm:$0xff]
  %v4135 = vld [vmem:[%s4] sm:$0xff]
  %v4136 = vld [vmem:[%s4 + $0x8] sm:$0xff]
  %v4137 = vld [vmem:[%s4 + $0x10] sm:$0xff]
  %v4138 = vld [vmem:[%s4 + $0x18] sm:$0xff]
  %v4139 = vld [vmem:[%s4 + $0x20] sm:$0xff]
  %v4140 = vld [vmem:[%s4 + $0x28] sm:$0xff]
  %v4141 = vld [vmem:[%s4 + $0x30] sm:$0xff]
  %v4142 = vld [vmem:[%s4 + $0x38] sm:$0xff]
  %v4143 = vld [vmem:[%s4 + $0x40] sm:$0xff]
  %v4144 = vld [vmem:[%s4 + $0x48] sm:$0xff]
  %v4145 = vld [vmem:[%s4 + $0x50] sm:$0xff]
  %v4146 = vld [vmem:[%s4 + $0x58] sm:$0xff]
  %v4147 = vld [vmem:[%s4 + $0x60] sm:$0xff]
  %v4148 = vld [vmem:[%s4 + $0x68] sm:$0xff]
  %v4149 = vld [vmem:[%s4 + $0x70] sm:$0xff]
  %v4150 = vld [vmem:[%s4 + $0x78] sm:$0xff]
  %v4151 = vld [vmem:[%s4 + $0x80] sm:$0xff]
  %v4152 = vld [vmem:[%s4 + $0x88] sm:$0xff]
  %v4153 = vld [vmem:[%s4 + $0x90] sm:$0xff]
  %v4154 = vld [vmem:[%s4 + $0x98] sm:$0xff]
  %v4155 = vld [vmem:[%s4 + $0xa0] sm:$0xff]
  %v4156 = vld [vmem:[%s4 + $0xa8] sm:$0xff]
  %v4157 = vld [vmem:[%s4 + $0xb0] sm:$0xff]
  %v4158 = vld [vmem:[%s4 + $0xb8] sm:$0xff]
  %v4159 = vld [vmem:[%s4 + $0xc0] sm:$0xff]
  %v4160 = vld [vmem:[%s4 + $0xc8] sm:$0xff]
  %v4161 = vld [vmem:[%s4 + $0xd0] sm:$0xff]
  %v4162 = vld [vmem:[%s4 + $0xd8] sm:$0xff]
  %v4163 = vld [vmem:[%s4 + $0xe0] sm:$0xff]
  %v4164 = vld [vmem:[%s4 + $0xe8] sm:$0xff]
  %v4165 = vld [vmem:[%s4 + $0xf0] sm:$0xff]
  %v4166 = vld [vmem:[%s4 + $0xf8] sm:$0xff]
  %v4167 = vld [vmem:[%s4 + $0x100] sm:$0xff]
  %v4168 = vld [vmem:[%s4 + $0x108] sm:$0xff]
  %v4169 = vld [vmem:[%s4 + $0x110] sm:$0xff]
  %v4170 = vld [vmem:[%s4 + $0x118] sm:$0xff]
  %v4171 = vld [vmem:[%s4 + $0x120] sm:$0xff]
  %v4172 = vld [vmem:[%s4 + $0x128] sm:$0xff]
  %v4173 = vld [vmem:[%s4 + $0x130] sm:$0xff]
  %v4174 = vld [vmem:[%s4 + $0x138] sm:$0xff]
  %v4175 = vld [vmem:[%s4 + $0x140] sm:$0xff]
  %v4176 = vld [vmem:[%s4 + $0x148] sm:$0xff]
  %4178 = vset.pattern.permute.xlu0 0
  %4179 = vperm.xlu0 %4178, %v4135
  %v4180 = vpop.permute.xlu0 %4179
  %4183 = vset.pattern.permute.xlu0 0
  %4184 = vperm.xlu0 %4183, %v4136
  %v4185 = vpop.permute.xlu0 %4184
  %4188 = vset.pattern.permute.xlu0 0
  %4189 = vperm.xlu0 %4188, %v4137
  %v4190 = vpop.permute.xlu0 %4189
  %4193 = vset.pattern.permute.xlu0 0
  %4194 = vperm.xlu0 %4193, %v4138
  %v4195 = vpop.permute.xlu0 %4194
  %4198 = vset.pattern.permute.xlu0 0
  %4199 = vperm.xlu0 %4198, %v4139
  %v4200 = vpop.permute.xlu0 %4199
  %4203 = vset.pattern.permute.xlu0 0
  %4204 = vperm.xlu0 %4203, %v4140
  %v4205 = vpop.permute.xlu0 %4204
  %4208 = vset.pattern.permute.xlu0 0
  %4209 = vperm.xlu0 %4208, %v4141
  %v4210 = vpop.permute.xlu0 %4209
  %4213 = vset.pattern.permute.xlu0 0
  %4214 = vperm.xlu0 %4213, %v4142
  %v4215 = vpop.permute.xlu0 %4214
  %4218 = vset.pattern.permute.xlu0 0
  %4219 = vperm.xlu0 %4218, %v4143
  %v4220 = vpop.permute.xlu0 %4219
  %4223 = vset.pattern.permute.xlu0 0
  %4224 = vperm.xlu0 %4223, %v4144
  %v4225 = vpop.permute.xlu0 %4224
  %4228 = vset.pattern.permute.xlu0 0
  %4229 = vperm.xlu0 %4228, %v4145
  %v4230 = vpop.permute.xlu0 %4229
  %4233 = vset.pattern.permute.xlu0 0
  %4234 = vperm.xlu0 %4233, %v4146
  %v4235 = vpop.permute.xlu0 %4234
  %4238 = vset.pattern.permute.xlu0 0
  %4239 = vperm.xlu0 %4238, %v4147
  %v4240 = vpop.permute.xlu0 %4239
  %4243 = vset.pattern.permute.xlu0 0
  %4244 = vperm.xlu0 %4243, %v4148
  %v4245 = vpop.permute.xlu0 %4244
  %4248 = vset.pattern.permute.xlu0 0
  %4249 = vperm.xlu0 %4248, %v4149
  %v4250 = vpop.permute.xlu0 %4249
  %4253 = vset.pattern.permute.xlu0 0
  %4254 = vperm.xlu0 %4253, %v4150
  %v4255 = vpop.permute.xlu0 %4254
  %4258 = vset.pattern.permute.xlu0 0
  %4259 = vperm.xlu0 %4258, %v4151
  %v4260 = vpop.permute.xlu0 %4259
  %4263 = vset.pattern.permute.xlu0 0
  %4264 = vperm.xlu0 %4263, %v4152
  %v4265 = vpop.permute.xlu0 %4264
  %4268 = vset.pattern.permute.xlu0 0
  %4269 = vperm.xlu0 %4268, %v4153
  %v4270 = vpop.permute.xlu0 %4269
  %4273 = vset.pattern.permute.xlu0 0
  %4274 = vperm.xlu0 %4273, %v4154
  %v4275 = vpop.permute.xlu0 %4274
  %4278 = vset.pattern.permute.xlu0 0
  %4279 = vperm.xlu0 %4278, %v4155
  %v4280 = vpop.permute.xlu0 %4279
  %4283 = vset.pattern.permute.xlu0 0
  %4284 = vperm.xlu0 %4283, %v4156
  %v4285 = vpop.permute.xlu0 %4284
  %4288 = vset.pattern.permute.xlu0 0
  %4289 = vperm.xlu0 %4288, %v4157
  %v4290 = vpop.permute.xlu0 %4289
  %4293 = vset.pattern.permute.xlu0 0
  %4294 = vperm.xlu0 %4293, %v4158
  %v4295 = vpop.permute.xlu0 %4294
  %4298 = vset.pattern.permute.xlu0 0
  %4299 = vperm.xlu0 %4298, %v4159
  %v4300 = vpop.permute.xlu0 %4299
  %4303 = vset.pattern.permute.xlu0 0
  %4304 = vperm.xlu0 %4303, %v4160
  %v4305 = vpop.permute.xlu0 %4304
  %4308 = vset.pattern.permute.xlu0 0
  %4309 = vperm.xlu0 %4308, %v4161
  %v4310 = vpop.permute.xlu0 %4309
  %4313 = vset.pattern.permute.xlu0 0
  %4314 = vperm.xlu0 %4313, %v4162
  %v4315 = vpop.permute.xlu0 %4314
  %4318 = vset.pattern.permute.xlu0 0
  %4319 = vperm.xlu0 %4318, %v4163
  %v4320 = vpop.permute.xlu0 %4319
  %4323 = vset.pattern.permute.xlu0 0
  %4324 = vperm.xlu0 %4323, %v4164
  %v4325 = vpop.permute.xlu0 %4324
  %4328 = vset.pattern.permute.xlu0 0
  %4329 = vperm.xlu0 %4328, %v4165
  %v4330 = vpop.permute.xlu0 %4329
  %4333 = vset.pattern.permute.xlu0 0
  %4334 = vperm.xlu0 %4333, %v4166
  %v4335 = vpop.permute.xlu0 %4334
  %4338 = vset.pattern.permute.xlu0 0
  %4339 = vperm.xlu0 %4338, %v4167
  %v4340 = vpop.permute.xlu0 %4339
  %4343 = vset.pattern.permute.xlu0 0
  %4344 = vperm.xlu0 %4343, %v4168
  %v4345 = vpop.permute.xlu0 %4344
  %4348 = vset.pattern.permute.xlu0 0
  %4349 = vperm.xlu0 %4348, %v4169
  %v4350 = vpop.permute.xlu0 %4349
  %4353 = vset.pattern.permute.xlu0 0
  %4354 = vperm.xlu0 %4353, %v4170
  %v4355 = vpop.permute.xlu0 %4354
  %4358 = vset.pattern.permute.xlu0 0
  %4359 = vperm.xlu0 %4358, %v4171
  %v4360 = vpop.permute.xlu0 %4359
  %4363 = vset.pattern.permute.xlu0 0
  %4364 = vperm.xlu0 %4363, %v4172
  %v4365 = vpop.permute.xlu0 %4364
  %4368 = vset.pattern.permute.xlu0 0
  %4369 = vperm.xlu0 %4368, %v4173
  %v4370 = vpop.permute.xlu0 %4369
  %4373 = vset.pattern.permute.xlu0 0
  %4374 = vperm.xlu0 %4373, %v4174
  %v4375 = vpop.permute.xlu0 %4374
  %4378 = vset.pattern.permute.xlu0 0
  %4379 = vperm.xlu0 %4378, %v4175
  %v4380 = vpop.permute.xlu0 %4379
  %4383 = vset.pattern.permute.xlu0 0
  %4384 = vperm.xlu0 %4383, %v4176
  %v4385 = vpop.permute.xlu0 %4384
  %v4387 = vmul.f32 %v4093, %v4180
  %v4388 = vmul.f32 %v4094, %v4185
  %v4389 = vmul.f32 %v4095, %v4190
  %v4390 = vmul.f32 %v4096, %v4195
  %v4391 = vmul.f32 %v4097, %v4200
  %v4392 = vmul.f32 %v4098, %v4205
  %v4393 = vmul.f32 %v4099, %v4210
  %v4394 = vmul.f32 %v4100, %v4215
  %v4395 = vmul.f32 %v4101, %v4220
  %v4396 = vmul.f32 %v4102, %v4225
  %v4397 = vmul.f32 %v4103, %v4230
  %v4398 = vmul.f32 %v4104, %v4235
  %v4399 = vmul.f32 %v4105, %v4240
  %v4400 = vmul.f32 %v4106, %v4245
  %v4401 = vmul.f32 %v4107, %v4250
  %v4402 = vmul.f32 %v4108, %v4255
  %v4403 = vmul.f32 %v4109, %v4260
  %v4404 = vmul.f32 %v4110, %v4265
  %v4405 = vmul.f32 %v4111, %v4270
  %v4406 = vmul.f32 %v4112, %v4275
  %v4407 = vmul.f32 %v4113, %v4280
  %v4408 = vmul.f32 %v4114, %v4285
  %v4409 = vmul.f32 %v4115, %v4290
  %v4410 = vmul.f32 %v4116, %v4295
  %v4411 = vmul.f32 %v4117, %v4300
  %v4412 = vmul.f32 %v4118, %v4305
  %v4413 = vmul.f32 %v4119, %v4310
  %v4414 = vmul.f32 %v4120, %v4315
  %v4415 = vmul.f32 %v4121, %v4320
  %v4416 = vmul.f32 %v4122, %v4325
  %v4417 = vmul.f32 %v4123, %v4330
  %v4418 = vmul.f32 %v4124, %v4335
  %v4419 = vmul.f32 %v4125, %v4340
  %v4420 = vmul.f32 %v4126, %v4345
  %v4421 = vmul.f32 %v4127, %v4350
  %v4422 = vmul.f32 %v4128, %v4355
  %v4423 = vmul.f32 %v4129, %v4360
  %v4424 = vmul.f32 %v4130, %v4365
  %v4425 = vmul.f32 %v4131, %v4370
  %v4426 = vmul.f32 %v4132, %v4375
  %v4427 = vmul.f32 %v4133, %v4380
  %v4428 = vmul.f32 %v4134, %v4385
  %v4429 = vadd.f32 %v4387, %v4388
  %v4430 = vadd.f32 %v4429, %v4389
  %v4431 = vadd.f32 %v4430, %v4390
  %v4432 = vadd.f32 %v4431, %v4391
  %v4433 = vadd.f32 %v4432, %v4392
  %v4434 = vadd.f32 %v4433, %v4393
  %v4435 = vadd.f32 %v4434, %v4394
  %v4436 = vadd.f32 %v4435, %v4395
  %v4437 = vadd.f32 %v4436, %v4396
  %v4438 = vadd.f32 %v4437, %v4397
  %v4439 = vadd.f32 %v4438, %v4398
  %v4440 = vadd.f32 %v4439, %v4399
  %v4441 = vadd.f32 %v4440, %v4400
  %v4442 = vadd.f32 %v4441, %v4401
  %v4443 = vadd.f32 %v4442, %v4402
  %v4444 = vadd.f32 %v4443, %v4403
  %v4445 = vadd.f32 %v4444, %v4404
  %v4446 = vadd.f32 %v4445, %v4405
  %v4447 = vadd.f32 %v4446, %v4406
  %v4448 = vadd.f32 %v4447, %v4407
  %v4449 = vadd.f32 %v4448, %v4408
  %v4450 = vadd.f32 %v4449, %v4409
  %v4451 = vadd.f32 %v4450, %v4410
  %v4452 = vadd.f32 %v4451, %v4411
  %v4453 = vadd.f32 %v4452, %v4412
  %v4454 = vadd.f32 %v4453, %v4413
  %v4455 = vadd.f32 %v4454, %v4414
  %v4456 = vadd.f32 %v4455, %v4415
  %v4457 = vadd.f32 %v4456, %v4416
  %v4458 = vadd.f32 %v4457, %v4417
  %v4459 = vadd.f32 %v4458, %v4418
  %v4460 = vadd.f32 %v4459, %v4419
  %v4461 = vadd.f32 %v4460, %v4420
  %v4462 = vadd.f32 %v4461, %v4421
  %v4463 = vadd.f32 %v4462, %v4422
  %v4464 = vadd.f32 %v4463, %v4423
  %v4465 = vadd.f32 %v4464, %v4424
  %v4466 = vadd.f32 %v4465, %v4425
  %v4467 = vadd.f32 %v4466, %v4426
  %v4468 = vadd.f32 %v4467, %v4427
  %v4469 = vadd.f32 %v4468, %v4428
  %v4470 = vrot.slane %v4469, 4
  %v4471 = vadd.f32 %v4469, %v4470
  %v4472 = vrot.slane %v4471, 2
  %v4473 = vadd.f32 %v4471, %v4472
  %v4474 = vrot.slane %v4473, 1
  %v4475 = vadd.f32 %v4473, %v4474
  %v4476 = vmul.f32 %v4475, 0.0034722222
  %v4477 = vmul.f32 %v4387, %v4093
  %v4478 = vmul.f32 %v4388, %v4094
  %v4479 = vmul.f32 %v4389, %v4095
  %v4480 = vmul.f32 %v4390, %v4096
  %v4481 = vmul.f32 %v4391, %v4097
  %v4482 = vmul.f32 %v4392, %v4098
  %v4483 = vmul.f32 %v4393, %v4099
  %v4484 = vmul.f32 %v4394, %v4100
  %v4485 = vmul.f32 %v4395, %v4101
  %v4486 = vmul.f32 %v4396, %v4102
  %v4487 = vmul.f32 %v4397, %v4103
  %v4488 = vmul.f32 %v4398, %v4104
  %v4489 = vmul.f32 %v4399, %v4105
  %v4490 = vmul.f32 %v4400, %v4106
  %v4491 = vmul.f32 %v4401, %v4107
  %v4492 = vmul.f32 %v4402, %v4108
  %v4493 = vmul.f32 %v4403, %v4109
  %v4494 = vmul.f32 %v4404, %v4110
  %v4495 = vmul.f32 %v4405, %v4111
  %v4496 = vmul.f32 %v4406, %v4112
  %v4497 = vmul.f32 %v4407, %v4113
  %v4498 = vmul.f32 %v4408, %v4114
  %v4499 = vmul.f32 %v4409, %v4115
  %v4500 = vmul.f32 %v4410, %v4116
  %v4501 = vmul.f32 %v4411, %v4117
  %v4502 = vmul.f32 %v4412, %v4118
  %v4503 = vmul.f32 %v4413, %v4119
  %v4504 = vmul.f32 %v4414, %v4120
  %v4505 = vmul.f32 %v4415, %v4121
  %v4506 = vmul.f32 %v4416, %v4122
  %v4507 = vmul.f32 %v4417, %v4123
  %v4508 = vmul.f32 %v4418, %v4124
  %v4509 = vmul.f32 %v4419, %v4125
  %v4510 = vmul.f32 %v4420, %v4126
  %v4511 = vmul.f32 %v4421, %v4127
  %v4512 = vmul.f32 %v4422, %v4128
  %v4513 = vmul.f32 %v4423, %v4129
  %v4514 = vmul.f32 %v4424, %v4130
  %v4515 = vmul.f32 %v4425, %v4131
  %v4516 = vmul.f32 %v4426, %v4132
  %v4517 = vmul.f32 %v4427, %v4133
  %v4518 = vmul.f32 %v4428, %v4134
  %v4519 = vadd.f32 %v4477, %v4478
  %v4520 = vadd.f32 %v4519, %v4479
  %v4521 = vadd.f32 %v4520, %v4480
  %v4522 = vadd.f32 %v4521, %v4481
  %v4523 = vadd.f32 %v4522, %v4482
  %v4524 = vadd.f32 %v4523, %v4483
  %v4525 = vadd.f32 %v4524, %v4484
  %v4526 = vadd.f32 %v4525, %v4485
  %v4527 = vadd.f32 %v4526, %v4486
  %v4528 = vadd.f32 %v4527, %v4487
  %v4529 = vadd.f32 %v4528, %v4488
  %v4530 = vadd.f32 %v4529, %v4489
  %v4531 = vadd.f32 %v4530, %v4490
  %v4532 = vadd.f32 %v4531, %v4491
  %v4533 = vadd.f32 %v4532, %v4492
  %v4534 = vadd.f32 %v4533, %v4493
  %v4535 = vadd.f32 %v4534, %v4494
  %v4536 = vadd.f32 %v4535, %v4495
  %v4537 = vadd.f32 %v4536, %v4496
  %v4538 = vadd.f32 %v4537, %v4497
  %v4539 = vadd.f32 %v4538, %v4498
  %v4540 = vadd.f32 %v4539, %v4499
  %v4541 = vadd.f32 %v4540, %v4500
  %v4542 = vadd.f32 %v4541, %v4501
  %v4543 = vadd.f32 %v4542, %v4502
  %v4544 = vadd.f32 %v4543, %v4503
  %v4545 = vadd.f32 %v4544, %v4504
  %v4546 = vadd.f32 %v4545, %v4505
  %v4547 = vadd.f32 %v4546, %v4506
  %v4548 = vadd.f32 %v4547, %v4507
  %v4549 = vadd.f32 %v4548, %v4508
  %v4550 = vadd.f32 %v4549, %v4509
  %v4551 = vadd.f32 %v4550, %v4510
  %v4552 = vadd.f32 %v4551, %v4511
  %v4553 = vadd.f32 %v4552, %v4512
  %v4554 = vadd.f32 %v4553, %v4513
  %v4555 = vadd.f32 %v4554, %v4514
  %v4556 = vadd.f32 %v4555, %v4515
  %v4557 = vadd.f32 %v4556, %v4516
  %v4558 = vadd.f32 %v4557, %v4517
  %v4559 = vadd.f32 %v4558, %v4518
  %v4560 = vrot.slane %v4559, 4
  %v4561 = vadd.f32 %v4559, %v4560
  %v4562 = vrot.slane %v4561, 2
  %v4563 = vadd.f32 %v4561, %v4562
  %v4564 = vrot.slane %v4563, 1
  %v4565 = vadd.f32 %v4563, %v4564
  %v4566 = vmul.f32 %v4565, 0.0034722222
  %v4567 = vmul.f32 %v4476, %v4476
  %v4568 = vsub.f32 %v4566, %v4567
  %v4569 = vmax.f32 %v4568, 0.0
  %v4570 = vld [vmem:[%s2] sm:$0x1]
  %v4571 = vadd.f32 %v4569, 1e-05
  %v4572 = vrsqrt.pop %v4571
  %v4573 = vmul.f32 %v4570, %v4572
  %v4574 = vld [vmem:[%s3] sm:$0x1]
  %v4575 = vmul.f32 %v4476, %v4573
  %v4576 = vsub.f32 %v4574, %v4575
  %v4578 = vlaneseq
  %v4579 = vshrl.u32 %v4578, 7
  %v4580 = vsub.s32 0, %v4579
  %v4581 = vrot.slane %v4573, %v4580
  %v4583 = vmul.f32 %v4093, %v4581
  %v4584 = vmul.f32 %v4094, %v4581
  %v4585 = vmul.f32 %v4095, %v4581
  %v4586 = vmul.f32 %v4096, %v4581
  %v4587 = vmul.f32 %v4097, %v4581
  %v4588 = vmul.f32 %v4098, %v4581
  %v4589 = vmul.f32 %v4099, %v4581
  %v4590 = vmul.f32 %v4100, %v4581
  %v4591 = vmul.f32 %v4101, %v4581
  %v4592 = vmul.f32 %v4102, %v4581
  %v4593 = vmul.f32 %v4103, %v4581
  %v4594 = vmul.f32 %v4104, %v4581
  %v4595 = vmul.f32 %v4105, %v4581
  %v4596 = vmul.f32 %v4106, %v4581
  %v4597 = vmul.f32 %v4107, %v4581
  %v4598 = vmul.f32 %v4108, %v4581
  %v4599 = vmul.f32 %v4109, %v4581
  %v4600 = vmul.f32 %v4110, %v4581
  %v4601 = vmul.f32 %v4111, %v4581
  %v4602 = vmul.f32 %v4112, %v4581
  %v4603 = vmul.f32 %v4113, %v4581
  %v4604 = vmul.f32 %v4114, %v4581
  %v4605 = vmul.f32 %v4115, %v4581
  %v4606 = vmul.f32 %v4116, %v4581
  %v4607 = vmul.f32 %v4117, %v4581
  %v4608 = vmul.f32 %v4118, %v4581
  %v4609 = vmul.f32 %v4119, %v4581
  %v4610 = vmul.f32 %v4120, %v4581
  %v4611 = vmul.f32 %v4121, %v4581
  %v4612 = vmul.f32 %v4122, %v4581
  %v4613 = vmul.f32 %v4123, %v4581
  %v4614 = vmul.f32 %v4124, %v4581
  %v4615 = vmul.f32 %v4125, %v4581
  %v4616 = vmul.f32 %v4126, %v4581
  %v4617 = vmul.f32 %v4127, %v4581
  %v4618 = vmul.f32 %v4128, %v4581
  %v4619 = vmul.f32 %v4129, %v4581
  %v4620 = vmul.f32 %v4130, %v4581
  %v4621 = vmul.f32 %v4131, %v4581
  %v4622 = vmul.f32 %v4132, %v4581
  %v4623 = vmul.f32 %v4133, %v4581
  %v4624 = vmul.f32 %v4134, %v4581
  %v4626 = vlaneseq
  %v4627 = vshrl.u32 %v4626, 7
  %v4628 = vsub.s32 0, %v4627
  %v4629 = vrot.slane %v4576, %v4628
  %v4631 = vadd.f32 %v4583, %v4629
  %v4632 = vadd.f32 %v4584, %v4629
  %v4633 = vadd.f32 %v4585, %v4629
  %v4634 = vadd.f32 %v4586, %v4629
  %v4635 = vadd.f32 %v4587, %v4629
  %v4636 = vadd.f32 %v4588, %v4629
  %v4637 = vadd.f32 %v4589, %v4629
  %v4638 = vadd.f32 %v4590, %v4629
  %v4639 = vadd.f32 %v4591, %v4629
  %v4640 = vadd.f32 %v4592, %v4629
  %v4641 = vadd.f32 %v4593, %v4629
  %v4642 = vadd.f32 %v4594, %v4629
  %v4643 = vadd.f32 %v4595, %v4629
  %v4644 = vadd.f32 %v4596, %v4629
  %v4645 = vadd.f32 %v4597, %v4629
  %v4646 = vadd.f32 %v4598, %v4629
  %v4647 = vadd.f32 %v4599, %v4629
  %v4648 = vadd.f32 %v4600, %v4629
  %v4649 = vadd.f32 %v4601, %v4629
  %v4650 = vadd.f32 %v4602, %v4629
  %v4651 = vadd.f32 %v4603, %v4629
  %v4652 = vadd.f32 %v4604, %v4629
  %v4653 = vadd.f32 %v4605, %v4629
  %v4654 = vadd.f32 %v4606, %v4629
  %v4655 = vadd.f32 %v4607, %v4629
  %v4656 = vadd.f32 %v4608, %v4629
  %v4657 = vadd.f32 %v4609, %v4629
  %v4658 = vadd.f32 %v4610, %v4629
  %v4659 = vadd.f32 %v4611, %v4629
  %v4660 = vadd.f32 %v4612, %v4629
  %v4661 = vadd.f32 %v4613, %v4629
  %v4662 = vadd.f32 %v4614, %v4629
  %v4663 = vadd.f32 %v4615, %v4629
  %v4664 = vadd.f32 %v4616, %v4629
  %v4665 = vadd.f32 %v4617, %v4629
  %v4666 = vadd.f32 %v4618, %v4629
  %v4667 = vadd.f32 %v4619, %v4629
  %v4668 = vadd.f32 %v4620, %v4629
  %v4669 = vadd.f32 %v4621, %v4629
  %v4670 = vadd.f32 %v4622, %v4629
  %v4671 = vadd.f32 %v4623, %v4629
  %v4672 = vadd.f32 %v4624, %v4629
  %vm4673 = vcmp.ge.f32.partialorder %v4631, 0.0
  %vm4674 = vcmp.ge.f32.partialorder %v4632, 0.0
  %vm4675 = vcmp.ge.f32.partialorder %v4633, 0.0
  %vm4676 = vcmp.ge.f32.partialorder %v4634, 0.0
  %vm4677 = vcmp.ge.f32.partialorder %v4635, 0.0
  %vm4678 = vcmp.ge.f32.partialorder %v4636, 0.0
  %vm4679 = vcmp.ge.f32.partialorder %v4637, 0.0
  %vm4680 = vcmp.ge.f32.partialorder %v4638, 0.0
  %vm4681 = vcmp.ge.f32.partialorder %v4639, 0.0
  %vm4682 = vcmp.ge.f32.partialorder %v4640, 0.0
  %vm4683 = vcmp.ge.f32.partialorder %v4641, 0.0
  %vm4684 = vcmp.ge.f32.partialorder %v4642, 0.0
  %vm4685 = vcmp.ge.f32.partialorder %v4643, 0.0
  %vm4686 = vcmp.ge.f32.partialorder %v4644, 0.0
  %vm4687 = vcmp.ge.f32.partialorder %v4645, 0.0
  %vm4688 = vcmp.ge.f32.partialorder %v4646, 0.0
  %vm4689 = vcmp.ge.f32.partialorder %v4647, 0.0
  %vm4690 = vcmp.ge.f32.partialorder %v4648, 0.0
  %vm4691 = vcmp.ge.f32.partialorder %v4649, 0.0
  %vm4692 = vcmp.ge.f32.partialorder %v4650, 0.0
  %vm4693 = vcmp.ge.f32.partialorder %v4651, 0.0
  %vm4694 = vcmp.ge.f32.partialorder %v4652, 0.0
  %vm4695 = vcmp.ge.f32.partialorder %v4653, 0.0
  %vm4696 = vcmp.ge.f32.partialorder %v4654, 0.0
  %vm4697 = vcmp.ge.f32.partialorder %v4655, 0.0
  %vm4698 = vcmp.ge.f32.partialorder %v4656, 0.0
  %vm4699 = vcmp.ge.f32.partialorder %v4657, 0.0
  %vm4700 = vcmp.ge.f32.partialorder %v4658, 0.0
  %vm4701 = vcmp.ge.f32.partialorder %v4659, 0.0
  %vm4702 = vcmp.ge.f32.partialorder %v4660, 0.0
  %vm4703 = vcmp.ge.f32.partialorder %v4661, 0.0
  %vm4704 = vcmp.ge.f32.partialorder %v4662, 0.0
  %vm4705 = vcmp.ge.f32.partialorder %v4663, 0.0
  %vm4706 = vcmp.ge.f32.partialorder %v4664, 0.0
  %vm4707 = vcmp.ge.f32.partialorder %v4665, 0.0
  %vm4708 = vcmp.ge.f32.partialorder %v4666, 0.0
  %vm4709 = vcmp.ge.f32.partialorder %v4667, 0.0
  %vm4710 = vcmp.ge.f32.partialorder %v4668, 0.0
  %vm4711 = vcmp.ge.f32.partialorder %v4669, 0.0
  %vm4712 = vcmp.ge.f32.partialorder %v4670, 0.0
  %vm4713 = vcmp.ge.f32.partialorder %v4671, 0.0
  %vm4714 = vcmp.ge.f32.partialorder %v4672, 0.0
  %v4715 = vmul.f32 %v4631, 0.01
  %v4716 = vmul.f32 %v4632, 0.01
  %v4717 = vmul.f32 %v4633, 0.01
  %v4718 = vmul.f32 %v4634, 0.01
  %v4719 = vmul.f32 %v4635, 0.01
  %v4720 = vmul.f32 %v4636, 0.01
  %v4721 = vmul.f32 %v4637, 0.01
  %v4722 = vmul.f32 %v4638, 0.01
  %v4723 = vmul.f32 %v4639, 0.01
  %v4724 = vmul.f32 %v4640, 0.01
  %v4725 = vmul.f32 %v4641, 0.01
  %v4726 = vmul.f32 %v4642, 0.01
  %v4727 = vmul.f32 %v4643, 0.01
  %v4728 = vmul.f32 %v4644, 0.01
  %v4729 = vmul.f32 %v4645, 0.01
  %v4730 = vmul.f32 %v4646, 0.01
  %v4731 = vmul.f32 %v4647, 0.01
  %v4732 = vmul.f32 %v4648, 0.01
  %v4733 = vmul.f32 %v4649, 0.01
  %v4734 = vmul.f32 %v4650, 0.01
  %v4735 = vmul.f32 %v4651, 0.01
  %v4736 = vmul.f32 %v4652, 0.01
  %v4737 = vmul.f32 %v4653, 0.01
  %v4738 = vmul.f32 %v4654, 0.01
  %v4739 = vmul.f32 %v4655, 0.01
  %v4740 = vmul.f32 %v4656, 0.01
  %v4741 = vmul.f32 %v4657, 0.01
  %v4742 = vmul.f32 %v4658, 0.01
  %v4743 = vmul.f32 %v4659, 0.01
  %v4744 = vmul.f32 %v4660, 0.01
  %v4745 = vmul.f32 %v4661, 0.01
  %v4746 = vmul.f32 %v4662, 0.01
  %v4747 = vmul.f32 %v4663, 0.01
  %v4748 = vmul.f32 %v4664, 0.01
  %v4749 = vmul.f32 %v4665, 0.01
  %v4750 = vmul.f32 %v4666, 0.01
  %v4751 = vmul.f32 %v4667, 0.01
  %v4752 = vmul.f32 %v4668, 0.01
  %v4753 = vmul.f32 %v4669, 0.01
  %v4754 = vmul.f32 %v4670, 0.01
  %v4755 = vmul.f32 %v4671, 0.01
  %v4756 = vmul.f32 %v4672, 0.01
  %v4757 = vsel %vm4673, %v4631, %v4715
  %v4758 = vsel %vm4674, %v4632, %v4716
  %v4759 = vsel %vm4675, %v4633, %v4717
  %v4760 = vsel %vm4676, %v4634, %v4718
  %v4761 = vsel %vm4677, %v4635, %v4719
  %v4762 = vsel %vm4678, %v4636, %v4720
  %v4763 = vsel %vm4679, %v4637, %v4721
  %v4764 = vsel %vm4680, %v4638, %v4722
  %v4765 = vsel %vm4681, %v4639, %v4723
  %v4766 = vsel %vm4682, %v4640, %v4724
  %v4767 = vsel %vm4683, %v4641, %v4725
  %v4768 = vsel %vm4684, %v4642, %v4726
  %v4769 = vsel %vm4685, %v4643, %v4727
  %v4770 = vsel %vm4686, %v4644, %v4728
  %v4771 = vsel %vm4687, %v4645, %v4729
  %v4772 = vsel %vm4688, %v4646, %v4730
  %v4773 = vsel %vm4689, %v4647, %v4731
  %v4774 = vsel %vm4690, %v4648, %v4732
  %v4775 = vsel %vm4691, %v4649, %v4733
  %v4776 = vsel %vm4692, %v4650, %v4734
  %v4777 = vsel %vm4693, %v4651, %v4735
  %v4778 = vsel %vm4694, %v4652, %v4736
  %v4779 = vsel %vm4695, %v4653, %v4737
  %v4780 = vsel %vm4696, %v4654, %v4738
  %v4781 = vsel %vm4697, %v4655, %v4739
  %v4782 = vsel %vm4698, %v4656, %v4740
  %v4783 = vsel %vm4699, %v4657, %v4741
  %v4784 = vsel %vm4700, %v4658, %v4742
  %v4785 = vsel %vm4701, %v4659, %v4743
  %v4786 = vsel %vm4702, %v4660, %v4744
  %v4787 = vsel %vm4703, %v4661, %v4745
  %v4788 = vsel %vm4704, %v4662, %v4746
  %v4789 = vsel %vm4705, %v4663, %v4747
  %v4790 = vsel %vm4706, %v4664, %v4748
  %v4791 = vsel %vm4707, %v4665, %v4749
  %v4792 = vsel %vm4708, %v4666, %v4750
  %v4793 = vsel %vm4709, %v4667, %v4751
  %v4794 = vsel %vm4710, %v4668, %v4752
  %v4795 = vsel %vm4711, %v4669, %v4753
  %v4796 = vsel %vm4712, %v4670, %v4754
  %v4797 = vsel %vm4713, %v4671, %v4755
  %v4798 = vsel %vm4714, %v4672, %v4756
  %v4799 = vld [vmem:[%s5] sm:$0xff]
  %v4800 = vld [vmem:[%s5 + $0x8] sm:$0xff]
  %v4801 = vld [vmem:[%s5 + $0x10] sm:$0xff]
  %v4802 = vld [vmem:[%s5 + $0x18] sm:$0xff]
  %v4803 = vld [vmem:[%s5 + $0x20] sm:$0xff]
  %v4804 = vld [vmem:[%s5 + $0x28] sm:$0xff]
  %v4805 = vld [vmem:[%s5 + $0x30] sm:$0xff]
  %v4806 = vld [vmem:[%s5 + $0x38] sm:$0xff]
  %v4807 = vld [vmem:[%s5 + $0x40] sm:$0xff]
  %v4808 = vld [vmem:[%s5 + $0x48] sm:$0xff]
  %v4809 = vld [vmem:[%s5 + $0x50] sm:$0xff]
  %v4810 = vld [vmem:[%s5 + $0x58] sm:$0xff]
  %v4811 = vld [vmem:[%s5 + $0x60] sm:$0xff]
  %v4812 = vld [vmem:[%s5 + $0x68] sm:$0xff]
  %v4813 = vld [vmem:[%s5 + $0x70] sm:$0xff]
  %v4814 = vld [vmem:[%s5 + $0x78] sm:$0xff]
  %v4815 = vld [vmem:[%s5 + $0x80] sm:$0xff]
  %v4816 = vld [vmem:[%s5 + $0x88] sm:$0xff]
  %v4817 = vld [vmem:[%s5 + $0x90] sm:$0xff]
  %v4818 = vld [vmem:[%s5 + $0x98] sm:$0xff]
  %v4819 = vld [vmem:[%s5 + $0xa0] sm:$0xff]
  %v4820 = vld [vmem:[%s5 + $0xa8] sm:$0xff]
  %v4821 = vld [vmem:[%s5 + $0xb0] sm:$0xff]
  %v4822 = vld [vmem:[%s5 + $0xb8] sm:$0xff]
  %v4823 = vld [vmem:[%s5 + $0xc0] sm:$0xff]
  %v4824 = vld [vmem:[%s5 + $0xc8] sm:$0xff]
  %v4825 = vld [vmem:[%s5 + $0xd0] sm:$0xff]
  %v4826 = vld [vmem:[%s5 + $0xd8] sm:$0xff]
  %v4827 = vld [vmem:[%s5 + $0xe0] sm:$0xff]
  %v4828 = vld [vmem:[%s5 + $0xe8] sm:$0xff]
  %v4829 = vld [vmem:[%s5 + $0xf0] sm:$0xff]
  %v4830 = vld [vmem:[%s5 + $0xf8] sm:$0xff]
  %v4831 = vld [vmem:[%s5 + $0x100] sm:$0xff]
  %v4832 = vld [vmem:[%s5 + $0x108] sm:$0xff]
  %v4833 = vld [vmem:[%s5 + $0x110] sm:$0xff]
  %v4834 = vld [vmem:[%s5 + $0x118] sm:$0xff]
  %v4835 = vld [vmem:[%s5 + $0x120] sm:$0xff]
  %v4836 = vld [vmem:[%s5 + $0x128] sm:$0xff]
  %v4837 = vld [vmem:[%s5 + $0x130] sm:$0xff]
  %v4838 = vld [vmem:[%s5 + $0x138] sm:$0xff]
  %v4839 = vld [vmem:[%s5 + $0x140] sm:$0xff]
  %v4840 = vld [vmem:[%s5 + $0x148] sm:$0xff]
  %v4841 = vadd.f32 %v4757, %v4799
  %v4842 = vadd.f32 %v4758, %v4800
  %v4843 = vadd.f32 %v4759, %v4801
  %v4844 = vadd.f32 %v4760, %v4802
  %v4845 = vadd.f32 %v4761, %v4803
  %v4846 = vadd.f32 %v4762, %v4804
  %v4847 = vadd.f32 %v4763, %v4805
  %v4848 = vadd.f32 %v4764, %v4806
  %v4849 = vadd.f32 %v4765, %v4807
  %v4850 = vadd.f32 %v4766, %v4808
  %v4851 = vadd.f32 %v4767, %v4809
  %v4852 = vadd.f32 %v4768, %v4810
  %v4853 = vadd.f32 %v4769, %v4811
  %v4854 = vadd.f32 %v4770, %v4812
  %v4855 = vadd.f32 %v4771, %v4813
  %v4856 = vadd.f32 %v4772, %v4814
  %v4857 = vadd.f32 %v4773, %v4815
  %v4858 = vadd.f32 %v4774, %v4816
  %v4859 = vadd.f32 %v4775, %v4817
  %v4860 = vadd.f32 %v4776, %v4818
  %v4861 = vadd.f32 %v4777, %v4819
  %v4862 = vadd.f32 %v4778, %v4820
  %v4863 = vadd.f32 %v4779, %v4821
  %v4864 = vadd.f32 %v4780, %v4822
  %v4865 = vadd.f32 %v4781, %v4823
  %v4866 = vadd.f32 %v4782, %v4824
  %v4867 = vadd.f32 %v4783, %v4825
  %v4868 = vadd.f32 %v4784, %v4826
  %v4869 = vadd.f32 %v4785, %v4827
  %v4870 = vadd.f32 %v4786, %v4828
  %v4871 = vadd.f32 %v4787, %v4829
  %v4872 = vadd.f32 %v4788, %v4830
  %v4873 = vadd.f32 %v4789, %v4831
  %v4874 = vadd.f32 %v4790, %v4832
  %v4875 = vadd.f32 %v4791, %v4833
  %v4876 = vadd.f32 %v4792, %v4834
  %v4877 = vadd.f32 %v4793, %v4835
  %v4878 = vadd.f32 %v4794, %v4836
  %v4879 = vadd.f32 %v4795, %v4837
  %v4880 = vadd.f32 %v4796, %v4838
  %v4881 = vadd.f32 %v4797, %v4839
  %v4882 = vadd.f32 %v4798, %v4840
  %4883 = vst [vmem:[%s6] sm:$0xff] %v4841
  %4884 = vst [vmem:[%s6 + $0x8] sm:$0xff] %v4842
  %4885 = vst [vmem:[%s6 + $0x10] sm:$0xff] %v4843
  %4886 = vst [vmem:[%s6 + $0x18] sm:$0xff] %v4844
  %4887 = vst [vmem:[%s6 + $0x20] sm:$0xff] %v4845
  %4888 = vst [vmem:[%s6 + $0x28] sm:$0xff] %v4846
  %4889 = vst [vmem:[%s6 + $0x30] sm:$0xff] %v4847
  %4890 = vst [vmem:[%s6 + $0x38] sm:$0xff] %v4848
  %4891 = vst [vmem:[%s6 + $0x40] sm:$0xff] %v4849
  %4892 = vst [vmem:[%s6 + $0x48] sm:$0xff] %v4850
  %4893 = vst [vmem:[%s6 + $0x50] sm:$0xff] %v4851
  %4894 = vst [vmem:[%s6 + $0x58] sm:$0xff] %v4852
  %4895 = vst [vmem:[%s6 + $0x60] sm:$0xff] %v4853
  %4896 = vst [vmem:[%s6 + $0x68] sm:$0xff] %v4854
  %4897 = vst [vmem:[%s6 + $0x70] sm:$0xff] %v4855
  %4898 = vst [vmem:[%s6 + $0x78] sm:$0xff] %v4856
  %4899 = vst [vmem:[%s6 + $0x80] sm:$0xff] %v4857
  %4900 = vst [vmem:[%s6 + $0x88] sm:$0xff] %v4858
  %4901 = vst [vmem:[%s6 + $0x90] sm:$0xff] %v4859
  %4902 = vst [vmem:[%s6 + $0x98] sm:$0xff] %v4860
  %4903 = vst [vmem:[%s6 + $0xa0] sm:$0xff] %v4861
  %4904 = vst [vmem:[%s6 + $0xa8] sm:$0xff] %v4862
  %4905 = vst [vmem:[%s6 + $0xb0] sm:$0xff] %v4863
  %4906 = vst [vmem:[%s6 + $0xb8] sm:$0xff] %v4864
  %4907 = vst [vmem:[%s6 + $0xc0] sm:$0xff] %v4865
  %4908 = vst [vmem:[%s6 + $0xc8] sm:$0xff] %v4866
  %4909 = vst [vmem:[%s6 + $0xd0] sm:$0xff] %v4867
  %4910 = vst [vmem:[%s6 + $0xd8] sm:$0xff] %v4868
  %4911 = vst [vmem:[%s6 + $0xe0] sm:$0xff] %v4869
  %4912 = vst [vmem:[%s6 + $0xe8] sm:$0xff] %v4870
  %4913 = vst [vmem:[%s6 + $0xf0] sm:$0xff] %v4871
  %4914 = vst [vmem:[%s6 + $0xf8] sm:$0xff] %v4872
  %4915 = vst [vmem:[%s6 + $0x100] sm:$0xff] %v4873
  %4916 = vst [vmem:[%s6 + $0x108] sm:$0xff] %v4874
  %4917 = vst [vmem:[%s6 + $0x110] sm:$0xff] %v4875
  %4918 = vst [vmem:[%s6 + $0x118] sm:$0xff] %v4876
  %4919 = vst [vmem:[%s6 + $0x120] sm:$0xff] %v4877
  %4920 = vst [vmem:[%s6 + $0x128] sm:$0xff] %v4878
  %4921 = vst [vmem:[%s6 + $0x130] sm:$0xff] %v4879
  %4922 = vst [vmem:[%s6 + $0x138] sm:$0xff] %v4880
  %4923 = vst [vmem:[%s6 + $0x140] sm:$0xff] %v4881
  %4924 = vst [vmem:[%s6 + $0x148] sm:$0xff] %v4882
  // Predicated region
  $region26: #{conv_bn_act.1} parent=0 // pred_check
    _
  $region27: #{conv_bn_act.1} parent=0 // pred_check_branch
    %4926 = sbr.rel (0) target = $region29
  $region28: #{conv_bn_act.1} parent=0 // pred_region
    _
  $region29: #{conv_bn_act.1} parent=0 // pred_fallthru
    _
  // Predicated region
  $region30: #{conv_bn_act.1} parent=0 // pred_check
    _
  $region31: #{conv_bn_act.1} parent=0 // pred_check_branch
    %4928 = sbr.rel (0) target = $region33
  $region32: #{conv_bn_act.1} parent=0 // pred_region
    _
  $region33: #{conv_bn_act.1} parent=0 // pred_fallthru
    _

</llo_original>
